<compile_context>
chip_gen: v5e
topology: v5e:2x2
jax: 0.10.0
libtpu: 0.0.40
codegen_flags: <defaults>
</compile_context>

<pallas_src>
import functools

import jax
import jax.numpy as jnp
from jax.experimental import pallas as pl
from jax.experimental.pallas import tpu as pltpu


# ---------------------------------------------------------------------------
# Pallas kernel: fused (split-)MLP + SiLU + LayerNorm + residual per edge tile.
# ---------------------------------------------------------------------------
def _edge_mlp_kernel(ef_ref, nsd_ref,
                     w1e_ref, w1n_ref, b1_ref,
                     w2_ref, b2_ref, gamma_ref, beta_ref,
                     out_ref):
    # ef_ref:  (TE, De)   f32   edge features (matmul term + residual)
    # nsd_ref: (TE, 2*Dn) bf16  gathered [nfeat[src] | nfeat[dst]] per edge
    # w1e_ref: (De, H)    bf16  rows of W1 acting on efeat
    # w1n_ref: (2*Dn, H)  bf16  rows of W1 acting on the node concat
    # b1_ref:  (1, H) f32; w2_ref: (H, Do) bf16; b2/gamma/beta: (1, Do) f32

    # Linear-1 over the virtual concat [efeat | nfeat[src] | nfeat[dst]]
    # (no concat ever materialized for efeat; node halves are one lane-dense op).
    h = jnp.dot(ef_ref[...].astype(w1e_ref.dtype), w1e_ref[...],
                preferred_element_type=jnp.float32)
    h = h + jnp.dot(nsd_ref[...], w1n_ref[...],
                    preferred_element_type=jnp.float32)
    h = h + b1_ref[...]
    h = h * jax.nn.sigmoid(h)                       # SiLU (f32, EUP sigmoid)

    # Linear-2 (bf16 operands, f32 accumulation).
    y = jnp.dot(h.astype(w2_ref.dtype), w2_ref[...],
                preferred_element_type=jnp.float32) + b2_ref[...]

    # LayerNorm over the feature (lane) dim, eps = 1e-5 (PyTorch default).
    # One-pass statistics: var = E[y^2] - E[y]^2 (two XLU reductions, no
    # dependent VALU pass in between).
    inv_d = 1.0 / y.shape[-1]
    mu = jnp.sum(y, axis=-1, keepdims=True) * inv_d
    m2 = jnp.sum(y * y, axis=-1, keepdims=True) * inv_d
    var = jnp.maximum(m2 - mu * mu, 0.0)
    y = (y - mu) * jax.lax.rsqrt(var + 1e-5)
    y = y * gamma_ref[...] + beta_ref[...]

    # Residual connection: re-read the efeat tile from VMEM here instead of
    # holding it live across both matmuls + LayerNorm (less vreg pressure).
    out_ref[...] = (y + ef_ref[...]).astype(out_ref.dtype)


# ---------------------------------------------------------------------------
# Generation-aware tile / VMEM-limit selection.
# ---------------------------------------------------------------------------
def _pick_tile_and_vmem(E, De, Dn, H, Do, tile_e, compute_dtype):
    bpe = jnp.dtype(compute_dtype).itemsize
    try:
        info = pltpu.get_tpu_info()
        vmem_cap = int(getattr(info, "vmem_capacity_bytes", 128 * 1024 * 1024))
    except Exception:  # pragma: no cover - conservative fallback
        vmem_cap = 128 * 1024 * 1024
    # Budget ~70% of physical VMEM: ~90 MiB on v5e/v6e, ~45 MiB on v7x,
    # leaving headroom for compiler scratch (never request the full VMEM).
    budget = int(vmem_cap * 0.70)

    # Double-buffered constant operands (weights / biases).
    const_bytes = 2 * ((De * H + 2 * Dn * H + H * Do) * bpe + (H + 3 * Do) * 4)

    def tile_bytes(t):
        io = 2 * t * (De * 4 + 2 * Dn * bpe + Do * 4)            # 2x-buffered tiles
        interm = t * (H * 4 + Do * 4 + (De + 2 * Dn + H) * bpe)  # h, y, bf16 casts
        return io + interm

    if tile_e is None:
        t = 2048
        while t > 256 and const_bytes + tile_bytes(t) > budget:
            t //= 2
        tile_e = t
    # Never tile larger than (rounded-up) E; keep sublane (8) alignment.
    tile_e = min(tile_e, max(8, ((E + 7) // 8) * 8))
    tile_e = max(8, (tile_e // 8) * 8)

    vmem_limit = max(const_bytes + tile_bytes(tile_e) + (4 << 20), 32 << 20)
    vmem_limit = int(min(vmem_limit, budget, vmem_cap - (8 << 20)))
    return tile_e, vmem_limit


# ---------------------------------------------------------------------------
# Wrapper: one gather (lane-dense bf16), padding only for efeat, pallas_call.
# ---------------------------------------------------------------------------
def mesh_edge_block_forward(efeat, nfeat, src_idx, dst_idx, params,
                            *, tile_e=None, compute_dtype=jnp.bfloat16):
    """MeshEdgeBlock forward. Returns (efeat_new, nfeat)."""
    E, De = efeat.shape
    _, Dn = nfeat.shape
    w1, b1, w2, b2, gamma, beta = params
    Cin, H = w1.shape
    Do = w2.shape[1]
    assert Cin == De + 2 * Dn
    assert Do == De, "residual requires output_dim == input_dim_edges"

    tile_e, vmem_limit = _pick_tile_and_vmem(E, De, Dn, H, Do, tile_e,
                                             compute_dtype)
    grid_e = pl.cdiv(E, tile_e)
    E_pad = grid_e * tile_e

    # Split W1 row-wise so the per-edge concat never materializes for efeat;
    # the two node halves stay merged into one lane-dense (2*Dn, H) operand.
    w1_e = w1[:De].astype(compute_dtype)
    w1_n = w1[De:].astype(compute_dtype)
    w2_c = w2.astype(compute_dtype)

    # Glue: single gather producing [nfeat[src] | nfeat[dst]] per edge, already
    # bf16 and already at the padded length (no extra pad copy of node data).
    nfeat_c = nfeat.astype(compute_dtype)
    if E_pad != E:
        pad = E_pad - E
        src_p = jnp.pad(src_idx, (0, pad))           # pad with index 0 (valid)
        dst_p = jnp.pad(dst_idx, (0, pad))
        efeat_p = jnp.pad(efeat, ((0, pad), (0, 0)))  # only efeat is pad-copied
    else:
        src_p, dst_p, efeat_p = src_idx, dst_idx, efeat
    idx2 = jnp.stack([src_p, dst_p], axis=1)          # (E_pad, 2)
    nsd = jnp.take(nfeat_c, idx2, axis=0).reshape(E_pad, 2 * Dn)

    row = lambda i: (i, 0)     # edge-tiled operands
    const = lambda i: (0, 0)   # weights / biases (same block every step)
    # TODO(synk): single-buffer the constant operands (pipeline_mode=
    #             pl.Buffered(1)) once that path is verified on this JAX build.

    efeat_new = pl.pallas_call(
        _edge_mlp_kernel,
        out_shape=jax.ShapeDtypeStruct((E_pad, Do), efeat.dtype),
        grid_spec=pltpu.PrefetchScalarGridSpec(
            num_scalar_prefetch=0,
            grid=(grid_e,),
            in_specs=[
                pl.BlockSpec((tile_e, De), row),       # efeat (matmul + residual)
                pl.BlockSpec((tile_e, 2 * Dn), row),   # [nfeat[src] | nfeat[dst]]
                pl.BlockSpec((De, H), const),          # W1_e
                pl.BlockSpec((2 * Dn, H), const),      # W1_n
                pl.BlockSpec((1, H), const),           # b1
                pl.BlockSpec((H, Do), const),          # W2
                pl.BlockSpec((1, Do), const),          # b2
                pl.BlockSpec((1, Do), const),          # gamma
                pl.BlockSpec((1, Do), const),          # beta
            ],
            out_specs=pl.BlockSpec((tile_e, Do), row),
        ),
        # efeat tile is fully read before the output tile is written back.
        # (Donate efeat at the jit boundary to make this a true in-place reuse.)
        input_output_aliases={0: 0},
        compiler_params=pltpu.CompilerParams(
            dimension_semantics=("parallel",),
            vmem_limit_bytes=vmem_limit,
        ),
    )(efeat_p, nsd, w1_e, w1_n, b1, w2_c, b2, gamma, beta)

    if E_pad != E:
        efeat_new = efeat_new[:E]
    return efeat_new, nfeat


# ---------------------------------------------------------------------------
# References for correctness checks.
# ---------------------------------------------------------------------------
def _reference_f32(efeat, nfeat, src_idx, dst_idx, params):
    w1, b1, w2, b2, gamma, beta = params
    x = jnp.concatenate([efeat, nfeat[src_idx], nfeat[dst_idx]], axis=-1)
    h = x @ w1 + b1
    h = h * jax.nn.sigmoid(h)
    y = h @ w2 + b2
    mu = jnp.mean(y, axis=-1, keepdims=True)
    var = jnp.mean((y - mu) ** 2, axis=-1, keepdims=True)
    y = (y - mu) / jnp.sqrt(var + 1e-5)
    y = y * gamma + beta
    return y + efeat, nfeat


def _reference_bf16(efeat, nfeat, src_idx, dst_idx, params,
                    compute_dtype=jnp.bfloat16):
    # Mirrors the kernel's mixed precision: bf16 matmul operands, f32
    # accumulation, f32 SiLU / LayerNorm / residual.
    w1, b1, w2, b2, gamma, beta = params
    x = jnp.concatenate([efeat,
                         nfeat[src_idx].astype(compute_dtype),
                         nfeat[dst_idx].astype(compute_dtype)], axis=-1)
    h = jnp.dot(x.astype(compute_dtype), w1.astype(compute_dtype),
                preferred_element_type=jnp.float32) + b1
    h = h * jax.nn.sigmoid(h)
    y = jnp.dot(h.astype(compute_dtype), w2.astype(compute_dtype),
                preferred_element_type=jnp.float32) + b2
    mu = jnp.mean(y, axis=-1, keepdims=True)
    var = jnp.mean((y - mu) ** 2, axis=-1, keepdims=True)
    y = (y - mu) / jnp.sqrt(var + 1e-5)
    y = y * gamma + beta
    return y + efeat, nfeat


# ---------------------------------------------------------------------------
# Deterministic synthetic parameters (shapes from MeshEdgeBlock.__init__).
# ---------------------------------------------------------------------------
def init_params(key, input_dim_nodes, input_dim_edges, hidden_dim, output_dim):
    cat_dim = input_dim_edges + 2 * input_dim_nodes
    ks = jax.random.split(key, 6)

    def lin(k, fan_in, shape):
        bound = 1.0 / jnp.sqrt(fan_in)
        return jax.random.uniform(k, shape, jnp.float32, -bound, bound)

    w1 = lin(ks[0], cat_dim, (cat_dim, hidden_dim))
    b1 = lin(ks[1], cat_dim, (1, hidden_dim))
    w2 = lin(ks[2], hidden_dim, (hidden_dim, output_dim))
    b2 = lin(ks[3], hidden_dim, (1, output_dim))
    gamma = 1.0 + 0.1 * jax.random.normal(ks[4], (1, output_dim), jnp.float32)
    beta = 0.1 * jax.random.normal(ks[5], (1, output_dim), jnp.float32)
    return (w1, b1, w2, b2, gamma, beta)


if __name__ == "__main__":
    # Small shapes consistent with the module (defaults 512, scaled down;
    # lane-aligned feature dims; E not a multiple of 256 -> padding path).
    N_NODES = 96
    N_EDGES = 640
    DIM_NODES = 64        # input_dim_nodes
    DIM_EDGES = 128       # input_dim_edges
    HIDDEN = 128          # hidden_dim
    OUT = 128             # output_dim (== input_dim_edges for the residual)

    key = jax.random.PRNGKey(0)
    k_e, k_n, k_s, k_d, k_p = jax.random.split(key, 5)

    efeat = jax.random.normal(k_e, (N_EDGES, DIM_EDGES), jnp.float32)
    nfeat = jax.random.normal(k_n, (N_NODES, DIM_NODES), jnp.float32)
    src_idx = jax.random.randint(k_s, (N_EDGES,), 0, N_NODES)
    dst_idx = jax.random.randint(k_d, (N_EDGES,), 0, N_NODES)
    params = init_params(k_p, DIM_NODES, DIM_EDGES, HIDDEN, OUT)

    ref_bf_e, _ = _reference_bf16(efeat, nfeat, src_idx, dst_idx, params)
    ref_f32_e, ref_n = _reference_f32(efeat, nfeat, src_idx, dst_idx, params)

    # 1) auto tile (no padding at these shapes), 2) explicit small tile
    #    (exercises the padded multi-step grid path).
    fwd_auto = jax.jit(mesh_edge_block_forward)
    fwd_t256 = jax.jit(functools.partial(mesh_edge_block_forward, tile_e=256))

    for fwd in (fwd_auto, fwd_t256):
        efeat_new, nfeat_out = fwd(efeat, nfeat, src_idx, dst_idx, params)
        jax.block_until_ready((efeat_new, nfeat_out))

        assert efeat_new.shape == (N_EDGES, OUT)
        assert nfeat_out.shape == (N_NODES, DIM_NODES)
        # Tight check against a reference with matching mixed precision.
        assert jnp.allclose(efeat_new, ref_bf_e, atol=2e-3, rtol=2e-3)
        # Coarse semantic check against the pure-f32 reference (bf16 matmul error).
        assert jnp.allclose(efeat_new, ref_f32_e, atol=1e-1, rtol=1e-1)
        assert jnp.allclose(nfeat_out, ref_n)

    print("KERNEL_OK")
</pallas_src>

<mosaic_0001>
module attributes {stable_mosaic.version = 11 : i64} {
  func.func @_edge_mlp_kernel(%arg0: i32, %arg1: memref<640x128xf32, #tpu.memory_space<vmem>>, %arg2: memref<640x128xbf16, #tpu.memory_space<vmem>>, %arg3: memref<128x128xbf16, #tpu.memory_space<vmem>>, %arg4: memref<128x128xbf16, #tpu.memory_space<vmem>>, %arg5: memref<1x128xf32, #tpu.memory_space<vmem>>, %arg6: memref<128x128xbf16, #tpu.memory_space<vmem>>, %arg7: memref<1x128xf32, #tpu.memory_space<vmem>>, %arg8: memref<1x128xf32, #tpu.memory_space<vmem>>, %arg9: memref<1x128xf32, #tpu.memory_space<vmem>>, %arg10: memref<640x128xf32, #tpu.memory_space<vmem>>) attributes {dimension_semantics = [#tpu.dimension_semantics<parallel>], iteration_bounds = array<i64: 1>, scalar_prefetch = 0 : i64, scratch_operands = 0 : i64, tpu.core_type = #tpu.core_type<tc>, window_params = [{transform_indices = @transform_0, window_bounds = array<i64: 640, 128>}, {transform_indices = @transform_1, window_bounds = array<i64: 640, 128>}, {pipeline_mode = #tpu.pipeline_mode<synchronous>, transform_indices = @transform_2, window_bounds = array<i64: 128, 128>}, {pipeline_mode = #tpu.pipeline_mode<synchronous>, transform_indices = @transform_3, window_bounds = array<i64: 128, 128>}, {pipeline_mode = #tpu.pipeline_mode<synchronous>, transform_indices = @transform_4, window_bounds = array<i64: 1, 128>}, {pipeline_mode = #tpu.pipeline_mode<synchronous>, transform_indices = @transform_5, window_bounds = array<i64: 128, 128>}, {pipeline_mode = #tpu.pipeline_mode<synchronous>, transform_indices = @transform_6, window_bounds = array<i64: 1, 128>}, {pipeline_mode = #tpu.pipeline_mode<synchronous>, transform_indices = @transform_7, window_bounds = array<i64: 1, 128>}, {pipeline_mode = #tpu.pipeline_mode<synchronous>, transform_indices = @transform_8, window_bounds = array<i64: 1, 128>}, {transform_indices = @transform_9, window_bounds = array<i64: 640, 128>}]} {
    %c0 = arith.constant 0 : index
    %c0_0 = arith.constant 0 : index
    %0 = vector.load %arg1[%c0, %c0_0] : memref<640x128xf32, #tpu.memory_space<vmem>>, vector<640x128xf32>
    %1 = arith.truncf %0 : vector<640x128xf32> to vector<640x128xbf16>
    %c0_1 = arith.constant 0 : index
    %c0_2 = arith.constant 0 : index
    %2 = vector.load %arg3[%c0_1, %c0_2] : memref<128x128xbf16, #tpu.memory_space<vmem>>, vector<128x128xbf16>
    %cst = arith.constant dense<0.000000e+00> : vector<640x128xf32>
    %3 = tpu.matmul %1, %2, %cst {dimension_numbers = #tpu.dot_dimension_numbers<[1], [0], [0], [1], [0, 0, 1, 1], [], []>} : vector<640x128xbf16>, vector<128x128xbf16>, vector<640x128xf32> -> vector<640x128xf32>
    %c0_3 = arith.constant 0 : index
    %c0_4 = arith.constant 0 : index
    %4 = vector.load %arg2[%c0_3, %c0_4] : memref<640x128xbf16, #tpu.memory_space<vmem>>, vector<640x128xbf16>
    %c0_5 = arith.constant 0 : index
    %c0_6 = arith.constant 0 : index
    %5 = vector.load %arg4[%c0_5, %c0_6] : memref<128x128xbf16, #tpu.memory_space<vmem>>, vector<128x128xbf16>
    %cst_7 = arith.constant dense<0.000000e+00> : vector<640x128xf32>
    %6 = tpu.matmul %4, %5, %cst_7 {dimension_numbers = #tpu.dot_dimension_numbers<[1], [0], [0], [1], [0, 0, 1, 1], [], []>} : vector<640x128xbf16>, vector<128x128xbf16>, vector<640x128xf32> -> vector<640x128xf32>
    %7 = arith.addf %3, %6 : vector<640x128xf32>
    %c0_8 = arith.constant 0 : index
    %c0_9 = arith.constant 0 : index
    %8 = vector.load %arg5[%c0_8, %c0_9] : memref<1x128xf32, #tpu.memory_space<vmem>>, vector<1x128xf32>
    %9 = vector.broadcast %8 : vector<1x128xf32> to vector<640x128xf32>
    %10 = arith.addf %7, %9 : vector<640x128xf32>
    %11 = arith.negf %10 : vector<640x128xf32>
    %12 = math.exp %11 : vector<640x128xf32>
    %cst_10 = arith.constant 1.000000e+00 : f32
    %13 = vector.broadcast %cst_10 : f32 to vector<640x128xf32>
    %14 = arith.addf %13, %12 : vector<640x128xf32>
    %15 = arith.divf %13, %14 : vector<640x128xf32>
    %16 = arith.mulf %10, %15 : vector<640x128xf32>
    %17 = arith.truncf %16 : vector<640x128xf32> to vector<640x128xbf16>
    %c0_11 = arith.constant 0 : index
    %c0_12 = arith.constant 0 : index
    %18 = vector.load %arg6[%c0_11, %c0_12] : memref<128x128xbf16, #tpu.memory_space<vmem>>, vector<128x128xbf16>
    %cst_13 = arith.constant dense<0.000000e+00> : vector<640x128xf32>
    %19 = tpu.matmul %17, %18, %cst_13 {dimension_numbers = #tpu.dot_dimension_numbers<[1], [0], [0], [1], [0, 0, 1, 1], [], []>} : vector<640x128xbf16>, vector<128x128xbf16>, vector<640x128xf32> -> vector<640x128xf32>
    %c0_14 = arith.constant 0 : index
    %c0_15 = arith.constant 0 : index
    %20 = vector.load %arg7[%c0_14, %c0_15] : memref<1x128xf32, #tpu.memory_space<vmem>>, vector<1x128xf32>
    %21 = vector.broadcast %20 : vector<1x128xf32> to vector<640x128xf32>
    %22 = arith.addf %19, %21 : vector<640x128xf32>
    %cst_16 = arith.constant dense<0.000000e+00> : vector<640xf32>
    %23 = vector.multi_reduction <add>, %22, %cst_16 [1] : vector<640x128xf32> to vector<640xf32>
    %24 = vector.shape_cast %23 : vector<640xf32> to vector<640x1xf32>
    %cst_17 = arith.constant 7.812500e-03 : f32
    %25 = vector.broadcast %cst_17 : f32 to vector<640x1xf32>
    %26 = arith.mulf %24, %25 : vector<640x1xf32>
    %27 = arith.mulf %22, %22 : vector<640x128xf32>
    %cst_18 = arith.constant dense<0.000000e+00> : vector<640xf32>
    %28 = vector.multi_reduction <add>, %27, %cst_18 [1] : vector<640x128xf32> to vector<640xf32>
    %29 = vector.shape_cast %28 : vector<640xf32> to vector<640x1xf32>
    %cst_19 = arith.constant 7.812500e-03 : f32
    %30 = vector.broadcast %cst_19 : f32 to vector<640x1xf32>
    %31 = arith.mulf %29, %30 : vector<640x1xf32>
    %32 = arith.mulf %26, %26 : vector<640x1xf32>
    %33 = arith.subf %31, %32 : vector<640x1xf32>
    %cst_20 = arith.constant 0.000000e+00 : f32
    %34 = vector.broadcast %cst_20 : f32 to vector<640x1xf32>
    %35 = arith.maximumf %33, %34 : vector<640x1xf32>
    %36 = vector.broadcast %26 : vector<640x1xf32> to vector<640x128xf32>
    %37 = arith.subf %22, %36 : vector<640x128xf32>
    %cst_21 = arith.constant 9.99999974E-6 : f32
    %38 = vector.broadcast %cst_21 : f32 to vector<640x1xf32>
    %39 = arith.addf %35, %38 : vector<640x1xf32>
    %40 = math.rsqrt %39 : vector<640x1xf32>
    %41 = vector.broadcast %40 : vector<640x1xf32> to vector<640x128xf32>
    %42 = arith.mulf %37, %41 : vector<640x128xf32>
    %c0_22 = arith.constant 0 : index
    %c0_23 = arith.constant 0 : index
    %43 = vector.load %arg8[%c0_22, %c0_23] : memref<1x128xf32, #tpu.memory_space<vmem>>, vector<1x128xf32>
    %44 = vector.broadcast %43 : vector<1x128xf32> to vector<640x128xf32>
    %45 = arith.mulf %42, %44 : vector<640x128xf32>
    %c0_24 = arith.constant 0 : index
    %c0_25 = arith.constant 0 : index
    %46 = vector.load %arg9[%c0_24, %c0_25] : memref<1x128xf32, #tpu.memory_space<vmem>>, vector<1x128xf32>
    %47 = vector.broadcast %46 : vector<1x128xf32> to vector<640x128xf32>
    %48 = arith.addf %45, %47 : vector<640x128xf32>
    %c0_26 = arith.constant 0 : index
    %c0_27 = arith.constant 0 : index
    %49 = vector.load %arg1[%c0_26, %c0_27] : memref<640x128xf32, #tpu.memory_space<vmem>>, vector<640x128xf32>
    %50 = arith.addf %48, %49 : vector<640x128xf32>
    %c0_28 = arith.constant 0 : index
    %c0_29 = arith.constant 0 : index
    %51 = vector.load %arg10[%c0_28, %c0_29] : memref<640x128xf32, #tpu.memory_space<vmem>>, vector<640x128xf32>
    tpu.vector_store %arg10[%c0_28, %c0_29], %50 {strides = array<i32>} : memref<640x128xf32, #tpu.memory_space<vmem>>, vector<640x128xf32>,
    return
  }
  func.func @transform_0(%arg0: i32) -> (i32, i32) {
    %c0_i32 = arith.constant 0 : i32
    %c0_i32_0 = arith.constant 0 : i32
    return %arg0, %c0_i32 : i32, i32
  }
  func.func @transform_1(%arg0: i32) -> (i32, i32) {
    %c0_i32 = arith.constant 0 : i32
    %c0_i32_0 = arith.constant 0 : i32
    return %arg0, %c0_i32 : i32, i32
  }
  func.func @transform_2(%arg0: i32) -> (i32, i32) {
    %c0_i32 = arith.constant 0 : i32
    %c0_i32_0 = arith.constant 0 : i32
    %c0_i32_1 = arith.constant 0 : i32
    return %c0_i32, %c0_i32_0 : i32, i32
  }
  func.func @transform_3(%arg0: i32) -> (i32, i32) {
    %c0_i32 = arith.constant 0 : i32
    %c0_i32_0 = arith.constant 0 : i32
    %c0_i32_1 = arith.constant 0 : i32
    return %c0_i32, %c0_i32_0 : i32, i32
  }
  func.func @transform_4(%arg0: i32) -> (i32, i32) {
    %c0_i32 = arith.constant 0 : i32
    %c0_i32_0 = arith.constant 0 : i32
    %c0_i32_1 = arith.constant 0 : i32
    return %c0_i32, %c0_i32_0 : i32, i32
  }
  func.func @transform_5(%arg0: i32) -> (i32, i32) {
    %c0_i32 = arith.constant 0 : i32
    %c0_i32_0 = arith.constant 0 : i32
    %c0_i32_1 = arith.constant 0 : i32
    return %c0_i32, %c0_i32_0 : i32, i32
  }
  func.func @transform_6(%arg0: i32) -> (i32, i32) {
    %c0_i32 = arith.constant 0 : i32
    %c0_i32_0 = arith.constant 0 : i32
    %c0_i32_1 = arith.constant 0 : i32
    return %c0_i32, %c0_i32_0 : i32, i32
  }
  func.func @transform_7(%arg0: i32) -> (i32, i32) {
    %c0_i32 = arith.constant 0 : i32
    %c0_i32_0 = arith.constant 0 : i32
    %c0_i32_1 = arith.constant 0 : i32
    return %c0_i32, %c0_i32_0 : i32, i32
  }
  func.func @transform_8(%arg0: i32) -> (i32, i32) {
    %c0_i32 = arith.constant 0 : i32
    %c0_i32_0 = arith.constant 0 : i32
    %c0_i32_1 = arith.constant 0 : i32
    return %c0_i32, %c0_i32_0 : i32, i32
  }
  func.func @transform_9(%arg0: i32) -> (i32, i32) {
    %c0_i32 = arith.constant 0 : i32
    %c0_i32_0 = arith.constant 0 : i32
    return %arg0, %c0_i32 : i32, i32
  }
}

</mosaic_0001>

<llo_original>
// kernel: mesh_edge_block_forward.1
$region0: #{mesh_edge_block_forward.1}
  #allocation0 [shape = 'u32[]', space=smem, size = 0x4, offset = 0x4, fixed_abs, tag = 'smem constant byte address 0x4 - core index']
  #allocation1 [shape = 'u32[72,128]{1,0:T(1,128)}', space=vmem, size = 0x9000, scoped, tag = 'internal scratch']
  %s0 = inlined_call_operand.vmem [shape: f32[640,128], index: 0, kind: input, shape index: {}, may-alias: {0,9}]
  %s1 = inlined_call_operand.vmem [shape: bf16[640,128], index: 1, kind: input, shape index: {}]
  %s2 = inlined_call_operand.vmem [shape: bf16[128,128], index: 2, kind: input, shape index: {}]
  %s3 = inlined_call_operand.vmem [shape: bf16[128,128], index: 3, kind: input, shape index: {}]
  %s4 = inlined_call_operand.vmem [shape: f32[1,128], index: 4, kind: input, shape index: {}]
  %s5 = inlined_call_operand.vmem [shape: bf16[128,128], index: 5, kind: input, shape index: {}]
  %s6 = inlined_call_operand.vmem [shape: f32[1,128], index: 6, kind: input, shape index: {}]
  %s7 = inlined_call_operand.vmem [shape: f32[1,128], index: 7, kind: input, shape index: {}]
  %s8 = inlined_call_operand.vmem [shape: f32[1,128], index: 8, kind: input, shape index: {}]
  %s9 = inlined_call_operand.vmem [shape: f32[640,128], index: 9, kind: output, shape index: {}, may-alias: {0,9}]
  %s10 = sld [smem:[#allocation0]]
  $region46: #{mesh_edge_block_forward.1} parent=0
    _
  %s12 = ssub.s32 1, %s10
  %s13 = scalar_select 0, %s12, %s10
  // Predicated region
  $region2: #{mesh_edge_block_forward.1} parent=0 // pred_check
    _
  $region3: #{mesh_edge_block_forward.1} parent=0 // pred_check_branch
    %15 = sbr.rel (0) target = $region5
  $region4: #{mesh_edge_block_forward.1} parent=0 // pred_region
    _
  $region5: #{mesh_edge_block_forward.1} parent=0 // pred_fallthru
    _
  // Predicated region
  $region6: #{mesh_edge_block_forward.1} parent=0 // pred_check
    _
  $region7: #{mesh_edge_block_forward.1} parent=0 // pred_check_branch
    %17 = sbr.rel (0) target = $region9
  $region8: #{mesh_edge_block_forward.1} parent=0 // pred_region
    _
  $region9: #{mesh_edge_block_forward.1} parent=0 // pred_fallthru
    _
  // Predicated region
  $region10: #{mesh_edge_block_forward.1} parent=0 // pred_check
    _
  $region11: #{mesh_edge_block_forward.1} parent=0 // pred_check_branch
    %19 = sbr.rel (0) target = $region13
  $region12: #{mesh_edge_block_forward.1} parent=0 // pred_region
    _
  $region13: #{mesh_edge_block_forward.1} parent=0 // pred_fallthru
    _
  // Predicated region
  $region14: #{mesh_edge_block_forward.1} parent=0 // pred_check
    _
  $region15: #{mesh_edge_block_forward.1} parent=0 // pred_check_branch
    %21 = sbr.rel (0) target = $region17
  $region16: #{mesh_edge_block_forward.1} parent=0 // pred_region
    _
  $region17: #{mesh_edge_block_forward.1} parent=0 // pred_fallthru
    _
  // Predicated region
  $region18: #{mesh_edge_block_forward.1} parent=0 // pred_check
    _
  $region19: #{mesh_edge_block_forward.1} parent=0 // pred_check_branch
    %23 = sbr.rel (0) target = $region21
  $region20: #{mesh_edge_block_forward.1} parent=0 // pred_region
    _
  $region21: #{mesh_edge_block_forward.1} parent=0 // pred_fallthru
    _
  // Predicated region
  $region22: #{mesh_edge_block_forward.1} parent=0 // pred_check
    _
  $region23: #{mesh_edge_block_forward.1} parent=0 // pred_check_branch
    %25 = sbr.rel (0) target = $region25
  $region24: #{mesh_edge_block_forward.1} parent=0 // pred_region
    _
  $region25: #{mesh_edge_block_forward.1} parent=0 // pred_fallthru
    _
  // Predicated region
  $region26: #{mesh_edge_block_forward.1} parent=0 // pred_check
    _
  $region27: #{mesh_edge_block_forward.1} parent=0 // pred_check_branch
    %27 = sbr.rel (0) target = $region29
  $region28: #{mesh_edge_block_forward.1} parent=0 // pred_region
    _
  $region29: #{mesh_edge_block_forward.1} parent=0 // pred_fallthru
    _
  // Predicated region
  $region30: #{mesh_edge_block_forward.1} parent=0 // pred_check
    _
  $region31: #{mesh_edge_block_forward.1} parent=0 // pred_check_branch
    %29 = sbr.rel (0) target = $region33
  $region32: #{mesh_edge_block_forward.1} parent=0 // pred_region
    _
  $region33: #{mesh_edge_block_forward.1} parent=0 // pred_fallthru
    _
  // Predicated region
  $region34: #{mesh_edge_block_forward.1} parent=0 // pred_check
    _
  $region35: #{mesh_edge_block_forward.1} parent=0 // pred_check_branch
    %31 = sbr.rel (0) target = $region37
  $region36: #{mesh_edge_block_forward.1} parent=0 // pred_region
    _
  $region37: #{mesh_edge_block_forward.1} parent=0 // pred_fallthru
    _
  %v32 = vld [vmem:[%s0] sm:$0xff]
  %v33 = vld [vmem:[%s0 + $0x8] sm:$0xff]
  %v34 = vld [vmem:[%s0 + $0x10] sm:$0xff]
  %v35 = vld [vmem:[%s0 + $0x18] sm:$0xff]
  %v36 = vld [vmem:[%s0 + $0x20] sm:$0xff]
  %v37 = vld [vmem:[%s0 + $0x28] sm:$0xff]
  %v38 = vld [vmem:[%s0 + $0x30] sm:$0xff]
  %v39 = vld [vmem:[%s0 + $0x38] sm:$0xff]
  %v40 = vld [vmem:[%s0 + $0x40] sm:$0xff]
  %v41 = vld [vmem:[%s0 + $0x48] sm:$0xff]
  %v42 = vld [vmem:[%s0 + $0x50] sm:$0xff]
  %v43 = vld [vmem:[%s0 + $0x58] sm:$0xff]
  %v44 = vld [vmem:[%s0 + $0x60] sm:$0xff]
  %v45 = vld [vmem:[%s0 + $0x68] sm:$0xff]
  %v46 = vld [vmem:[%s0 + $0x70] sm:$0xff]
  %v47 = vld [vmem:[%s0 + $0x78] sm:$0xff]
  %v48 = vld [vmem:[%s0 + $0x80] sm:$0xff]
  %v49 = vld [vmem:[%s0 + $0x88] sm:$0xff]
  %v50 = vld [vmem:[%s0 + $0x90] sm:$0xff]
  %v51 = vld [vmem:[%s0 + $0x98] sm:$0xff]
  %v52 = vld [vmem:[%s0 + $0xa0] sm:$0xff]
  %v53 = vld [vmem:[%s0 + $0xa8] sm:$0xff]
  %v54 = vld [vmem:[%s0 + $0xb0] sm:$0xff]
  %v55 = vld [vmem:[%s0 + $0xb8] sm:$0xff]
  %v56 = vld [vmem:[%s0 + $0xc0] sm:$0xff]
  %v57 = vld [vmem:[%s0 + $0xc8] sm:$0xff]
  %v58 = vld [vmem:[%s0 + $0xd0] sm:$0xff]
  %v59 = vld [vmem:[%s0 + $0xd8] sm:$0xff]
  %v60 = vld [vmem:[%s0 + $0xe0] sm:$0xff]
  %v61 = vld [vmem:[%s0 + $0xe8] sm:$0xff]
  %v62 = vld [vmem:[%s0 + $0xf0] sm:$0xff]
  %v63 = vld [vmem:[%s0 + $0xf8] sm:$0xff]
  %v64 = vld [vmem:[%s0 + $0x100] sm:$0xff]
  %v65 = vld [vmem:[%s0 + $0x108] sm:$0xff]
  %v66 = vld [vmem:[%s0 + $0x110] sm:$0xff]
  %v67 = vld [vmem:[%s0 + $0x118] sm:$0xff]
  %v68 = vld [vmem:[%s0 + $0x120] sm:$0xff]
  %v69 = vld [vmem:[%s0 + $0x128] sm:$0xff]
  %v70 = vld [vmem:[%s0 + $0x130] sm:$0xff]
  %v71 = vld [vmem:[%s0 + $0x138] sm:$0xff]
  %v72 = vld [vmem:[%s0 + $0x140] sm:$0xff]
  %v73 = vld [vmem:[%s0 + $0x148] sm:$0xff]
  %v74 = vld [vmem:[%s0 + $0x150] sm:$0xff]
  %v75 = vld [vmem:[%s0 + $0x158] sm:$0xff]
  %v76 = vld [vmem:[%s0 + $0x160] sm:$0xff]
  %v77 = vld [vmem:[%s0 + $0x168] sm:$0xff]
  %v78 = vld [vmem:[%s0 + $0x170] sm:$0xff]
  %v79 = vld [vmem:[%s0 + $0x178] sm:$0xff]
  %v80 = vld [vmem:[%s0 + $0x180] sm:$0xff]
  %v81 = vld [vmem:[%s0 + $0x188] sm:$0xff]
  %v82 = vld [vmem:[%s0 + $0x190] sm:$0xff]
  %v83 = vld [vmem:[%s0 + $0x198] sm:$0xff]
  %v84 = vld [vmem:[%s0 + $0x1a0] sm:$0xff]
  %v85 = vld [vmem:[%s0 + $0x1a8] sm:$0xff]
  %v86 = vld [vmem:[%s0 + $0x1b0] sm:$0xff]
  %v87 = vld [vmem:[%s0 + $0x1b8] sm:$0xff]
  %v88 = vld [vmem:[%s0 + $0x1c0] sm:$0xff]
  %v89 = vld [vmem:[%s0 + $0x1c8] sm:$0xff]
  %v90 = vld [vmem:[%s0 + $0x1d0] sm:$0xff]
  %v91 = vld [vmem:[%s0 + $0x1d8] sm:$0xff]
  %v92 = vld [vmem:[%s0 + $0x1e0] sm:$0xff]
  %v93 = vld [vmem:[%s0 + $0x1e8] sm:$0xff]
  %v94 = vld [vmem:[%s0 + $0x1f0] sm:$0xff]
  %v95 = vld [vmem:[%s0 + $0x1f8] sm:$0xff]
  %v96 = vld [vmem:[%s0 + $0x200] sm:$0xff]
  %v97 = vld [vmem:[%s0 + $0x208] sm:$0xff]
  %v98 = vld [vmem:[%s0 + $0x210] sm:$0xff]
  %v99 = vld [vmem:[%s0 + $0x218] sm:$0xff]
  %v100 = vld [vmem:[%s0 + $0x220] sm:$0xff]
  %v101 = vld [vmem:[%s0 + $0x228] sm:$0xff]
  %v102 = vld [vmem:[%s0 + $0x230] sm:$0xff]
  %v103 = vld [vmem:[%s0 + $0x238] sm:$0xff]
  %v104 = vld [vmem:[%s0 + $0x240] sm:$0xff]
  %v105 = vld [vmem:[%s0 + $0x248] sm:$0xff]
  %v106 = vld [vmem:[%s0 + $0x250] sm:$0xff]
  %v107 = vld [vmem:[%s0 + $0x258] sm:$0xff]
  %v108 = vld [vmem:[%s0 + $0x260] sm:$0xff]
  %v109 = vld [vmem:[%s0 + $0x268] sm:$0xff]
  %v110 = vld [vmem:[%s0 + $0x270] sm:$0xff]
  %v111 = vld [vmem:[%s0 + $0x278] sm:$0xff]
  %v112 = vpack.c.bf16 %v33, %v32
  %v113 = vpack.c.bf16 %v35, %v34
  %v114 = vpack.c.bf16 %v37, %v36
  %v115 = vpack.c.bf16 %v39, %v38
  %v116 = vpack.c.bf16 %v41, %v40
  %v117 = vpack.c.bf16 %v43, %v42
  %v118 = vpack.c.bf16 %v45, %v44
  %v119 = vpack.c.bf16 %v47, %v46
  %v120 = vpack.c.bf16 %v49, %v48
  %v121 = vpack.c.bf16 %v51, %v50
  %v122 = vpack.c.bf16 %v53, %v52
  %v123 = vpack.c.bf16 %v55, %v54
  %v124 = vpack.c.bf16 %v57, %v56
  %v125 = vpack.c.bf16 %v59, %v58
  %v126 = vpack.c.bf16 %v61, %v60
  %v127 = vpack.c.bf16 %v63, %v62
  %v128 = vpack.c.bf16 %v65, %v64
  %v129 = vpack.c.bf16 %v67, %v66
  %v130 = vpack.c.bf16 %v69, %v68
  %v131 = vpack.c.bf16 %v71, %v70
  %v132 = vpack.c.bf16 %v73, %v72
  %v133 = vpack.c.bf16 %v75, %v74
  %v134 = vpack.c.bf16 %v77, %v76
  %v135 = vpack.c.bf16 %v79, %v78
  %v136 = vpack.c.bf16 %v81, %v80
  %v137 = vpack.c.bf16 %v83, %v82
  %v138 = vpack.c.bf16 %v85, %v84
  %v139 = vpack.c.bf16 %v87, %v86
  %v140 = vpack.c.bf16 %v89, %v88
  %v141 = vpack.c.bf16 %v91, %v90
  %v142 = vpack.c.bf16 %v93, %v92
  %v143 = vpack.c.bf16 %v95, %v94
  %v144 = vpack.c.bf16 %v97, %v96
  %v145 = vpack.c.bf16 %v99, %v98
  %v146 = vpack.c.bf16 %v101, %v100
  %v147 = vpack.c.bf16 %v103, %v102
  %v148 = vpack.c.bf16 %v105, %v104
  %v149 = vpack.c.bf16 %v107, %v106
  %v150 = vpack.c.bf16 %v109, %v108
  %v151 = vpack.c.bf16 %v111, %v110
  %v152 = vld [vmem:[%s2] sm:$0xf]
  %v153 = vld [vmem:[%s2 + $0x4] sm:$0xf]
  %v154 = vld [vmem:[%s2 + $0x8] sm:$0xf]
  %v155 = vld [vmem:[%s2 + $0xc] sm:$0xf]
  %v156 = vld [vmem:[%s2 + $0x10] sm:$0xf]
  %v157 = vld [vmem:[%s2 + $0x14] sm:$0xf]
  %v158 = vld [vmem:[%s2 + $0x18] sm:$0xf]
  %v159 = vld [vmem:[%s2 + $0x1c] sm:$0xf]
  %v160 = vld [vmem:[%s2 + $0x20] sm:$0xf]
  %v161 = vld [vmem:[%s2 + $0x24] sm:$0xf]
  %v162 = vld [vmem:[%s2 + $0x28] sm:$0xf]
  %v163 = vld [vmem:[%s2 + $0x2c] sm:$0xf]
  %v164 = vld [vmem:[%s2 + $0x30] sm:$0xf]
  %v165 = vld [vmem:[%s2 + $0x34] sm:$0xf]
  %v166 = vld [vmem:[%s2 + $0x38] sm:$0xf]
  %v167 = vld [vmem:[%s2 + $0x3c] sm:$0xf]
  %v168 = vld [vmem:[%s1] sm:$0xf]
  %v169 = vld [vmem:[%s1 + $0x4] sm:$0xf]
  %v170 = vld [vmem:[%s1 + $0x8] sm:$0xf]
  %v171 = vld [vmem:[%s1 + $0xc] sm:$0xf]
  %v172 = vld [vmem:[%s1 + $0x10] sm:$0xf]
  %v173 = vld [vmem:[%s1 + $0x14] sm:$0xf]
  %v174 = vld [vmem:[%s1 + $0x18] sm:$0xf]
  %v175 = vld [vmem:[%s1 + $0x1c] sm:$0xf]
  %v176 = vld [vmem:[%s1 + $0x20] sm:$0xf]
  %v177 = vld [vmem:[%s1 + $0x24] sm:$0xf]
  %v178 = vld [vmem:[%s1 + $0x28] sm:$0xf]
  %v179 = vld [vmem:[%s1 + $0x2c] sm:$0xf]
  %v180 = vld [vmem:[%s1 + $0x30] sm:$0xf]
  %v181 = vld [vmem:[%s1 + $0x34] sm:$0xf]
  %v182 = vld [vmem:[%s1 + $0x38] sm:$0xf]
  %v183 = vld [vmem:[%s1 + $0x3c] sm:$0xf]
  %v184 = vld [vmem:[%s1 + $0x40] sm:$0xf]
  %v185 = vld [vmem:[%s1 + $0x44] sm:$0xf]
  %v186 = vld [vmem:[%s1 + $0x48] sm:$0xf]
  %v187 = vld [vmem:[%s1 + $0x4c] sm:$0xf]
  %v188 = vld [vmem:[%s1 + $0x50] sm:$0xf]
  %v189 = vld [vmem:[%s1 + $0x54] sm:$0xf]
  %v190 = vld [vmem:[%s1 + $0x58] sm:$0xf]
  %v191 = vld [vmem:[%s1 + $0x5c] sm:$0xf]
  %v192 = vld [vmem:[%s1 + $0x60] sm:$0xf]
  %v193 = vld [vmem:[%s1 + $0x64] sm:$0xf]
  %v194 = vld [vmem:[%s1 + $0x68] sm:$0xf]
  %v195 = vld [vmem:[%s1 + $0x6c] sm:$0xf]
  %v196 = vld [vmem:[%s1 + $0x70] sm:$0xf]
  %v197 = vld [vmem:[%s1 + $0x74] sm:$0xf]
  %v198 = vld [vmem:[%s1 + $0x78] sm:$0xf]
  %v199 = vld [vmem:[%s1 + $0x7c] sm:$0xf]
  %v200 = vld [vmem:[%s1 + $0x80] sm:$0xf]
  %v201 = vld [vmem:[%s1 + $0x84] sm:$0xf]
  %v202 = vld [vmem:[%s1 + $0x88] sm:$0xf]
  %v203 = vld [vmem:[%s1 + $0x8c] sm:$0xf]
  %v204 = vld [vmem:[%s1 + $0x90] sm:$0xf]
  %v205 = vld [vmem:[%s1 + $0x94] sm:$0xf]
  %v206 = vld [vmem:[%s1 + $0x98] sm:$0xf]
  %v207 = vld [vmem:[%s1 + $0x9c] sm:$0xf]
  %v208 = vld [vmem:[%s1 + $0xa0] sm:$0xf]
  %v209 = vld [vmem:[%s1 + $0xa4] sm:$0xf]
  %v210 = vld [vmem:[%s1 + $0xa8] sm:$0xf]
  %v211 = vld [vmem:[%s1 + $0xac] sm:$0xf]
  %v212 = vld [vmem:[%s1 + $0xb0] sm:$0xf]
  %v213 = vld [vmem:[%s1 + $0xb4] sm:$0xf]
  %v214 = vld [vmem:[%s1 + $0xb8] sm:$0xf]
  %v215 = vld [vmem:[%s1 + $0xbc] sm:$0xf]
  %v216 = vld [vmem:[%s1 + $0xc0] sm:$0xf]
  %v217 = vld [vmem:[%s1 + $0xc4] sm:$0xf]
  %v218 = vld [vmem:[%s1 + $0xc8] sm:$0xf]
  %v219 = vld [vmem:[%s1 + $0xcc] sm:$0xf]
  %v220 = vld [vmem:[%s1 + $0xd0] sm:$0xf]
  %v221 = vld [vmem:[%s1 + $0xd4] sm:$0xf]
  %v222 = vld [vmem:[%s1 + $0xd8] sm:$0xf]
  %v223 = vld [vmem:[%s1 + $0xdc] sm:$0xf]
  %v224 = vld [vmem:[%s1 + $0xe0] sm:$0xf]
  %v225 = vld [vmem:[%s1 + $0xe4] sm:$0xf]
  %v226 = vld [vmem:[%s1 + $0xe8] sm:$0xf]
  %v227 = vld [vmem:[%s1 + $0xec] sm:$0xf]
  %v228 = vld [vmem:[%s1 + $0xf0] sm:$0xf]
  %v229 = vld [vmem:[%s1 + $0xf4] sm:$0xf]
  %v230 = vld [vmem:[%s1 + $0xf8] sm:$0xf]
  %v231 = vld [vmem:[%s1 + $0xfc] sm:$0xf]
  %v232 = vld [vmem:[%s1 + $0x100] sm:$0xf]
  %v233 = vld [vmem:[%s1 + $0x104] sm:$0xf]
  %v234 = vld [vmem:[%s1 + $0x108] sm:$0xf]
  %v235 = vld [vmem:[%s1 + $0x10c] sm:$0xf]
  %v236 = vld [vmem:[%s1 + $0x110] sm:$0xf]
  %v237 = vld [vmem:[%s1 + $0x114] sm:$0xf]
  %v238 = vld [vmem:[%s1 + $0x118] sm:$0xf]
  %v239 = vld [vmem:[%s1 + $0x11c] sm:$0xf]
  %v240 = vld [vmem:[%s1 + $0x120] sm:$0xf]
  %v241 = vld [vmem:[%s1 + $0x124] sm:$0xf]
  %v242 = vld [vmem:[%s1 + $0x128] sm:$0xf]
  %v243 = vld [vmem:[%s1 + $0x12c] sm:$0xf]
  %v244 = vld [vmem:[%s1 + $0x130] sm:$0xf]
  %v245 = vld [vmem:[%s1 + $0x134] sm:$0xf]
  %v246 = vld [vmem:[%s1 + $0x138] sm:$0xf]
  %v247 = vld [vmem:[%s1 + $0x13c] sm:$0xf]
  %v248 = vld [vmem:[%s3] sm:$0xf]
  %v249 = vld [vmem:[%s3 + $0x4] sm:$0xf]
  %v250 = vld [vmem:[%s3 + $0x8] sm:$0xf]
  %v251 = vld [vmem:[%s3 + $0xc] sm:$0xf]
  %v252 = vld [vmem:[%s3 + $0x10] sm:$0xf]
  %v253 = vld [vmem:[%s3 + $0x14] sm:$0xf]
  %v254 = vld [vmem:[%s3 + $0x18] sm:$0xf]
  %v255 = vld [vmem:[%s3 + $0x1c] sm:$0xf]
  %v256 = vld [vmem:[%s3 + $0x20] sm:$0xf]
  %v257 = vld [vmem:[%s3 + $0x24] sm:$0xf]
  %v258 = vld [vmem:[%s3 + $0x28] sm:$0xf]
  %v259 = vld [vmem:[%s3 + $0x2c] sm:$0xf]
  %v260 = vld [vmem:[%s3 + $0x30] sm:$0xf]
  %v261 = vld [vmem:[%s3 + $0x34] sm:$0xf]
  %v262 = vld [vmem:[%s3 + $0x38] sm:$0xf]
  %v263 = vld [vmem:[%s3 + $0x3c] sm:$0xf]
  %v344 = vunpack.c.l.b16 %v168
  %v345 = vunpack.c.l.b16 %v169
  %v346 = vunpack.c.l.b16 %v170
  %v347 = vunpack.c.l.b16 %v171
  %v348 = vunpack.c.l.b16 %v172
  %v349 = vunpack.c.l.b16 %v173
  %v350 = vunpack.c.l.b16 %v174
  %v351 = vunpack.c.l.b16 %v175
  %v352 = vunpack.c.l.b16 %v176
  %v353 = vunpack.c.l.b16 %v177
  %v354 = vunpack.c.l.b16 %v178
  %v355 = vunpack.c.l.b16 %v179
  %v356 = vunpack.c.l.b16 %v180
  %v357 = vunpack.c.l.b16 %v181
  %v358 = vunpack.c.l.b16 %v182
  %v359 = vunpack.c.l.b16 %v183
  %v360 = vunpack.c.l.b16 %v184
  %v361 = vunpack.c.l.b16 %v185
  %v362 = vunpack.c.l.b16 %v186
  %v363 = vunpack.c.l.b16 %v187
  %v364 = vunpack.c.l.b16 %v188
  %v365 = vunpack.c.l.b16 %v189
  %v366 = vunpack.c.l.b16 %v190
  %v367 = vunpack.c.l.b16 %v191
  %v368 = vunpack.c.l.b16 %v192
  %v369 = vunpack.c.l.b16 %v193
  %v370 = vunpack.c.l.b16 %v194
  %v371 = vunpack.c.l.b16 %v195
  %v372 = vunpack.c.l.b16 %v196
  %v373 = vunpack.c.l.b16 %v197
  %v374 = vunpack.c.l.b16 %v198
  %v375 = vunpack.c.l.b16 %v199
  %v376 = vunpack.c.l.b16 %v200
  %v377 = vunpack.c.l.b16 %v201
  %v378 = vunpack.c.l.b16 %v202
  %v379 = vunpack.c.l.b16 %v203
  %v380 = vunpack.c.l.b16 %v204
  %v381 = vunpack.c.l.b16 %v205
  %v382 = vunpack.c.l.b16 %v206
  %v383 = vunpack.c.l.b16 %v207
  %v384 = vunpack.c.l.b16 %v208
  %v385 = vunpack.c.l.b16 %v209
  %v386 = vunpack.c.l.b16 %v210
  %v387 = vunpack.c.l.b16 %v211
  %v388 = vunpack.c.l.b16 %v212
  %v389 = vunpack.c.l.b16 %v213
  %v390 = vunpack.c.l.b16 %v214
  %v391 = vunpack.c.l.b16 %v215
  %v392 = vunpack.c.l.b16 %v216
  %v393 = vunpack.c.l.b16 %v217
  %v394 = vunpack.c.l.b16 %v218
  %v395 = vunpack.c.l.b16 %v219
  %v396 = vunpack.c.l.b16 %v220
  %v397 = vunpack.c.l.b16 %v221
  %v398 = vunpack.c.l.b16 %v222
  %v399 = vunpack.c.l.b16 %v223
  %v400 = vunpack.c.l.b16 %v224
  %v401 = vunpack.c.l.b16 %v225
  %v402 = vunpack.c.l.b16 %v226
  %v403 = vunpack.c.l.b16 %v227
  %v404 = vunpack.c.l.b16 %v228
  %v405 = vunpack.c.l.b16 %v229
  %v406 = vunpack.c.l.b16 %v230
  %v407 = vunpack.c.l.b16 %v231
  %v408 = vunpack.c.l.b16 %v232
  %v409 = vunpack.c.l.b16 %v233
  %v410 = vunpack.c.l.b16 %v234
  %v411 = vunpack.c.l.b16 %v235
  %v412 = vunpack.c.l.b16 %v236
  %v413 = vunpack.c.l.b16 %v237
  %v414 = vunpack.c.l.b16 %v238
  %v415 = vunpack.c.l.b16 %v239
  %v416 = vunpack.c.l.b16 %v240
  %v417 = vunpack.c.l.b16 %v241
  %v418 = vunpack.c.l.b16 %v242
  %v419 = vunpack.c.l.b16 %v243
  %v420 = vunpack.c.l.b16 %v244
  %v421 = vunpack.c.l.b16 %v245
  %v422 = vunpack.c.l.b16 %v246
  %v423 = vunpack.c.l.b16 %v247
  %v424 = vpack.c.b16 %v345, %v344
  %v425 = vpack.c.b16 %v347, %v346
  %v426 = vpack.c.b16 %v349, %v348
  %v427 = vpack.c.b16 %v351, %v350
  %v428 = vpack.c.b16 %v353, %v352
  %v429 = vpack.c.b16 %v355, %v354
  %v430 = vpack.c.b16 %v357, %v356
  %v431 = vpack.c.b16 %v359, %v358
  %v432 = vpack.c.b16 %v361, %v360
  %v433 = vpack.c.b16 %v363, %v362
  %v434 = vpack.c.b16 %v365, %v364
  %v435 = vpack.c.b16 %v367, %v366
  %v436 = vpack.c.b16 %v369, %v368
  %v437 = vpack.c.b16 %v371, %v370
  %v438 = vpack.c.b16 %v373, %v372
  %v439 = vpack.c.b16 %v375, %v374
  %v440 = vpack.c.b16 %v377, %v376
  %v441 = vpack.c.b16 %v379, %v378
  %v442 = vpack.c.b16 %v381, %v380
  %v443 = vpack.c.b16 %v383, %v382
  %v444 = vpack.c.b16 %v385, %v384
  %v445 = vpack.c.b16 %v387, %v386
  %v446 = vpack.c.b16 %v389, %v388
  %v447 = vpack.c.b16 %v391, %v390
  %v448 = vpack.c.b16 %v393, %v392
  %v449 = vpack.c.b16 %v395, %v394
  %v450 = vpack.c.b16 %v397, %v396
  %v451 = vpack.c.b16 %v399, %v398
  %v452 = vpack.c.b16 %v401, %v400
  %v453 = vpack.c.b16 %v403, %v402
  %v454 = vpack.c.b16 %v405, %v404
  %v455 = vpack.c.b16 %v407, %v406
  %v456 = vpack.c.b16 %v409, %v408
  %v457 = vpack.c.b16 %v411, %v410
  %v458 = vpack.c.b16 %v413, %v412
  %v459 = vpack.c.b16 %v415, %v414
  %v460 = vpack.c.b16 %v417, %v416
  %v461 = vpack.c.b16 %v419, %v418
  %v462 = vpack.c.b16 %v421, %v420
  %v463 = vpack.c.b16 %v423, %v422
  %v520 = vunpack.c.l.b16 %v248
  %v521 = vunpack.c.l.b16 %v249
  %v522 = vunpack.c.l.b16 %v250
  %v523 = vunpack.c.l.b16 %v251
  %v524 = vunpack.c.l.b16 %v252
  %v525 = vunpack.c.l.b16 %v253
  %v526 = vunpack.c.l.b16 %v254
  %v527 = vunpack.c.l.b16 %v255
  %v528 = vunpack.c.l.b16 %v256
  %v529 = vunpack.c.l.b16 %v257
  %v530 = vunpack.c.l.b16 %v258
  %v531 = vunpack.c.l.b16 %v259
  %v532 = vunpack.c.l.b16 %v260
  %v533 = vunpack.c.l.b16 %v261
  %v534 = vunpack.c.l.b16 %v262
  %v535 = vunpack.c.l.b16 %v263
  %v536 = vpack.c.b16 %v521, %v520
  %v537 = vpack.c.b16 %v523, %v522
  %v538 = vpack.c.b16 %v525, %v524
  %v539 = vpack.c.b16 %v527, %v526
  %v540 = vpack.c.b16 %v529, %v528
  %v541 = vpack.c.b16 %v531, %v530
  %v542 = vpack.c.b16 %v533, %v532
  %v543 = vpack.c.b16 %v535, %v534
  %552 = vmatpush.bf16.msra.mxu0 %v543
  %553 = vmatpush.bf16.msra.mxu0 %v542
  %554 = vmatpush.bf16.msra.mxu0 %v541
  %555 = vmatpush.bf16.msra.mxu0 %v540
  %556 = vmatpush.bf16.msra.mxu0 %v539
  %557 = vmatpush.bf16.msra.mxu0 %v538
  %558 = vmatpush.bf16.msra.mxu0 %v537
  %559 = vmatpush.bf16.msra.mxu0 %v536
  %560 = vmatmul.bf16.gmra.mxu0 %v424
  %v561 = vpop.f32.mrf.mxu0
  %v562 = vadd.f32 0.0, %v561
  %v563 = vpop.f32.mrf.mxu0
  %v564 = vadd.f32 0.0, %v563
  %565 = vmatmul.bf16.gmra.mxu0 %v425
  %v566 = vpop.f32.mrf.mxu0
  %v567 = vadd.f32 0.0, %v566
  %v568 = vpop.f32.mrf.mxu0
  %v569 = vadd.f32 0.0, %v568
  %570 = vmatmul.bf16.gmra.mxu0 %v426
  %v571 = vpop.f32.mrf.mxu0
  %v572 = vadd.f32 0.0, %v571
  %v573 = vpop.f32.mrf.mxu0
  %v574 = vadd.f32 0.0, %v573
  %575 = vmatmul.bf16.gmra.mxu0 %v427
  %v576 = vpop.f32.mrf.mxu0
  %v577 = vadd.f32 0.0, %v576
  %v578 = vpop.f32.mrf.mxu0
  %v579 = vadd.f32 0.0, %v578
  %580 = vmatmul.bf16.gmra.mxu0 %v428
  %v581 = vpop.f32.mrf.mxu0
  %v582 = vadd.f32 0.0, %v581
  %v583 = vpop.f32.mrf.mxu0
  %v584 = vadd.f32 0.0, %v583
  %585 = vmatmul.bf16.gmra.mxu0 %v429
  %v586 = vpop.f32.mrf.mxu0
  %v587 = vadd.f32 0.0, %v586
  %v588 = vpop.f32.mrf.mxu0
  %v589 = vadd.f32 0.0, %v588
  %590 = vmatmul.bf16.gmra.mxu0 %v430
  %v591 = vpop.f32.mrf.mxu0
  %v592 = vadd.f32 0.0, %v591
  %v593 = vpop.f32.mrf.mxu0
  %v594 = vadd.f32 0.0, %v593
  %595 = vmatmul.bf16.gmra.mxu0 %v431
  %v596 = vpop.f32.mrf.mxu0
  %v597 = vadd.f32 0.0, %v596
  %v598 = vpop.f32.mrf.mxu0
  %v599 = vadd.f32 0.0, %v598
  %600 = vmatmul.bf16.gmra.mxu0 %v432
  %v601 = vpop.f32.mrf.mxu0
  %v602 = vadd.f32 0.0, %v601
  %v603 = vpop.f32.mrf.mxu0
  %v604 = vadd.f32 0.0, %v603
  %605 = vmatmul.bf16.gmra.mxu0 %v433
  %v606 = vpop.f32.mrf.mxu0
  %v607 = vadd.f32 0.0, %v606
  %v608 = vpop.f32.mrf.mxu0
  %v609 = vadd.f32 0.0, %v608
  %610 = vmatmul.bf16.gmra.mxu0 %v434
  %v611 = vpop.f32.mrf.mxu0
  %v612 = vadd.f32 0.0, %v611
  %v613 = vpop.f32.mrf.mxu0
  %v614 = vadd.f32 0.0, %v613
  %615 = vmatmul.bf16.gmra.mxu0 %v435
  %v616 = vpop.f32.mrf.mxu0
  %v617 = vadd.f32 0.0, %v616
  %v618 = vpop.f32.mrf.mxu0
  %v619 = vadd.f32 0.0, %v618
  %620 = vmatmul.bf16.gmra.mxu0 %v436
  %v621 = vpop.f32.mrf.mxu0
  %v622 = vadd.f32 0.0, %v621
  %v623 = vpop.f32.mrf.mxu0
  %v624 = vadd.f32 0.0, %v623
  %625 = vmatmul.bf16.gmra.mxu0 %v437
  %v626 = vpop.f32.mrf.mxu0
  %v627 = vadd.f32 0.0, %v626
  %v628 = vpop.f32.mrf.mxu0
  %v629 = vadd.f32 0.0, %v628
  %630 = vmatmul.bf16.gmra.mxu0 %v438
  %v631 = vpop.f32.mrf.mxu0
  %v632 = vadd.f32 0.0, %v631
  %v633 = vpop.f32.mrf.mxu0
  %v634 = vadd.f32 0.0, %v633
  %635 = vmatmul.bf16.gmra.mxu0 %v439
  %v636 = vpop.f32.mrf.mxu0
  %v637 = vadd.f32 0.0, %v636
  %v638 = vpop.f32.mrf.mxu0
  %v639 = vadd.f32 0.0, %v638
  %640 = vmatmul.bf16.gmra.mxu0 %v440
  %v641 = vpop.f32.mrf.mxu0
  %v642 = vadd.f32 0.0, %v641
  %v643 = vpop.f32.mrf.mxu0
  %v644 = vadd.f32 0.0, %v643
  %645 = vmatmul.bf16.gmra.mxu0 %v441
  %v646 = vpop.f32.mrf.mxu0
  %v647 = vadd.f32 0.0, %v646
  %v648 = vpop.f32.mrf.mxu0
  %v649 = vadd.f32 0.0, %v648
  %650 = vmatmul.bf16.gmra.mxu0 %v442
  %v651 = vpop.f32.mrf.mxu0
  %v652 = vadd.f32 0.0, %v651
  %v653 = vpop.f32.mrf.mxu0
  %v654 = vadd.f32 0.0, %v653
  %655 = vmatmul.bf16.gmra.mxu0 %v443
  %v656 = vpop.f32.mrf.mxu0
  %v657 = vadd.f32 0.0, %v656
  %v658 = vpop.f32.mrf.mxu0
  %v659 = vadd.f32 0.0, %v658
  %660 = vmatmul.bf16.gmra.mxu0 %v444
  %v661 = vpop.f32.mrf.mxu0
  %v662 = vadd.f32 0.0, %v661
  %v663 = vpop.f32.mrf.mxu0
  %v664 = vadd.f32 0.0, %v663
  %665 = vmatmul.bf16.gmra.mxu0 %v445
  %v666 = vpop.f32.mrf.mxu0
  %v667 = vadd.f32 0.0, %v666
  %v668 = vpop.f32.mrf.mxu0
  %v669 = vadd.f32 0.0, %v668
  %670 = vmatmul.bf16.gmra.mxu0 %v446
  %v671 = vpop.f32.mrf.mxu0
  %v672 = vadd.f32 0.0, %v671
  %v673 = vpop.f32.mrf.mxu0
  %v674 = vadd.f32 0.0, %v673
  %675 = vmatmul.bf16.gmra.mxu0 %v447
  %v676 = vpop.f32.mrf.mxu0
  %v677 = vadd.f32 0.0, %v676
  %v678 = vpop.f32.mrf.mxu0
  %v679 = vadd.f32 0.0, %v678
  %680 = vmatmul.bf16.gmra.mxu0 %v448
  %v681 = vpop.f32.mrf.mxu0
  %v682 = vadd.f32 0.0, %v681
  %v683 = vpop.f32.mrf.mxu0
  %v684 = vadd.f32 0.0, %v683
  %685 = vmatmul.bf16.gmra.mxu0 %v449
  %v686 = vpop.f32.mrf.mxu0
  %v687 = vadd.f32 0.0, %v686
  %v688 = vpop.f32.mrf.mxu0
  %v689 = vadd.f32 0.0, %v688
  %690 = vmatmul.bf16.gmra.mxu0 %v450
  %v691 = vpop.f32.mrf.mxu0
  %v692 = vadd.f32 0.0, %v691
  %v693 = vpop.f32.mrf.mxu0
  %v694 = vadd.f32 0.0, %v693
  %695 = vmatmul.bf16.gmra.mxu0 %v451
  %v696 = vpop.f32.mrf.mxu0
  %v697 = vadd.f32 0.0, %v696
  %v698 = vpop.f32.mrf.mxu0
  %v699 = vadd.f32 0.0, %v698
  %700 = vmatmul.bf16.gmra.mxu0 %v452
  %v701 = vpop.f32.mrf.mxu0
  %v702 = vadd.f32 0.0, %v701
  %v703 = vpop.f32.mrf.mxu0
  %v704 = vadd.f32 0.0, %v703
  %705 = vmatmul.bf16.gmra.mxu0 %v453
  %v706 = vpop.f32.mrf.mxu0
  %v707 = vadd.f32 0.0, %v706
  %v708 = vpop.f32.mrf.mxu0
  %v709 = vadd.f32 0.0, %v708
  %710 = vmatmul.bf16.gmra.mxu0 %v454
  %v711 = vpop.f32.mrf.mxu0
  %v712 = vadd.f32 0.0, %v711
  %v713 = vpop.f32.mrf.mxu0
  %v714 = vadd.f32 0.0, %v713
  %715 = vmatmul.bf16.gmra.mxu0 %v455
  %v716 = vpop.f32.mrf.mxu0
  %v717 = vadd.f32 0.0, %v716
  %v718 = vpop.f32.mrf.mxu0
  %v719 = vadd.f32 0.0, %v718
  %720 = vmatmul.bf16.gmra.mxu0 %v456
  %v721 = vpop.f32.mrf.mxu0
  %v722 = vadd.f32 0.0, %v721
  %v723 = vpop.f32.mrf.mxu0
  %v724 = vadd.f32 0.0, %v723
  %725 = vmatmul.bf16.gmra.mxu0 %v457
  %v726 = vpop.f32.mrf.mxu0
  %v727 = vadd.f32 0.0, %v726
  %v728 = vpop.f32.mrf.mxu0
  %v729 = vadd.f32 0.0, %v728
  %730 = vmatmul.bf16.gmra.mxu0 %v458
  %v731 = vpop.f32.mrf.mxu0
  %v732 = vadd.f32 0.0, %v731
  %v733 = vpop.f32.mrf.mxu0
  %v734 = vadd.f32 0.0, %v733
  %735 = vmatmul.bf16.gmra.mxu0 %v459
  %v736 = vpop.f32.mrf.mxu0
  %v737 = vadd.f32 0.0, %v736
  %v738 = vpop.f32.mrf.mxu0
  %v739 = vadd.f32 0.0, %v738
  %740 = vmatmul.bf16.gmra.mxu0 %v460
  %v741 = vpop.f32.mrf.mxu0
  %v742 = vadd.f32 0.0, %v741
  %v743 = vpop.f32.mrf.mxu0
  %v744 = vadd.f32 0.0, %v743
  %745 = vmatmul.bf16.gmra.mxu0 %v461
  %v746 = vpop.f32.mrf.mxu0
  %v747 = vadd.f32 0.0, %v746
  %v748 = vpop.f32.mrf.mxu0
  %v749 = vadd.f32 0.0, %v748
  %750 = vmatmul.bf16.gmra.mxu0 %v462
  %v751 = vpop.f32.mrf.mxu0
  %v752 = vadd.f32 0.0, %v751
  %v753 = vpop.f32.mrf.mxu0
  %v754 = vadd.f32 0.0, %v753
  %755 = vmatmul.bf16.gmra.mxu0 %v463
  %v756 = vpop.f32.mrf.mxu0
  %v757 = vadd.f32 0.0, %v756
  %v758 = vpop.f32.mrf.mxu0
  %v759 = vadd.f32 0.0, %v758
  %760 = vdwg.mxu0
  %v777 = vunpack.c.l.b16 %v152
  %v778 = vunpack.c.l.b16 %v153
  %v779 = vunpack.c.l.b16 %v154
  %v780 = vunpack.c.l.b16 %v155
  %v781 = vunpack.c.l.b16 %v156
  %v782 = vunpack.c.l.b16 %v157
  %v783 = vunpack.c.l.b16 %v158
  %v784 = vunpack.c.l.b16 %v159
  %v785 = vunpack.c.l.b16 %v160
  %v786 = vunpack.c.l.b16 %v161
  %v787 = vunpack.c.l.b16 %v162
  %v788 = vunpack.c.l.b16 %v163
  %v789 = vunpack.c.l.b16 %v164
  %v790 = vunpack.c.l.b16 %v165
  %v791 = vunpack.c.l.b16 %v166
  %v792 = vunpack.c.l.b16 %v167
  %v793 = vpack.c.b16 %v778, %v777
  %v794 = vpack.c.b16 %v780, %v779
  %v795 = vpack.c.b16 %v782, %v781
  %v796 = vpack.c.b16 %v784, %v783
  %v797 = vpack.c.b16 %v786, %v785
  %v798 = vpack.c.b16 %v788, %v787
  %v799 = vpack.c.b16 %v790, %v789
  %v800 = vpack.c.b16 %v792, %v791
  %809 = vmatpush.bf16.msra.mxu0 %v800
  %810 = vmatpush.bf16.msra.mxu0 %v799
  %811 = vmatpush.bf16.msra.mxu0 %v798
  %812 = vmatpush.bf16.msra.mxu0 %v797
  %813 = vmatpush.bf16.msra.mxu0 %v796
  %814 = vmatpush.bf16.msra.mxu0 %v795
  %815 = vmatpush.bf16.msra.mxu0 %v794
  %816 = vmatpush.bf16.msra.mxu0 %v793
  %817 = vmatmul.bf16.gmra.mxu0 %v112
  %v818 = vpop.f32.mrf.mxu0
  %v819 = vadd.f32 %v562, %v818
  %v820 = vpop.f32.mrf.mxu0
  %v821 = vadd.f32 %v564, %v820
  %822 = vmatmul.bf16.gmra.mxu0 %v113
  %v823 = vpop.f32.mrf.mxu0
  %v824 = vadd.f32 %v567, %v823
  %v825 = vpop.f32.mrf.mxu0
  %v826 = vadd.f32 %v569, %v825
  %827 = vmatmul.bf16.gmra.mxu0 %v114
  %v828 = vpop.f32.mrf.mxu0
  %v829 = vadd.f32 %v572, %v828
  %v830 = vpop.f32.mrf.mxu0
  %v831 = vadd.f32 %v574, %v830
  %832 = vmatmul.bf16.gmra.mxu0 %v115
  %v833 = vpop.f32.mrf.mxu0
  %v834 = vadd.f32 %v577, %v833
  %v835 = vpop.f32.mrf.mxu0
  %v836 = vadd.f32 %v579, %v835
  %837 = vmatmul.bf16.gmra.mxu0 %v116
  %v838 = vpop.f32.mrf.mxu0
  %v839 = vadd.f32 %v582, %v838
  %v840 = vpop.f32.mrf.mxu0
  %v841 = vadd.f32 %v584, %v840
  %842 = vmatmul.bf16.gmra.mxu0 %v117
  %v843 = vpop.f32.mrf.mxu0
  %v844 = vadd.f32 %v587, %v843
  %v845 = vpop.f32.mrf.mxu0
  %v846 = vadd.f32 %v589, %v845
  %847 = vmatmul.bf16.gmra.mxu0 %v118
  %v848 = vpop.f32.mrf.mxu0
  %v849 = vadd.f32 %v592, %v848
  %v850 = vpop.f32.mrf.mxu0
  %v851 = vadd.f32 %v594, %v850
  %852 = vmatmul.bf16.gmra.mxu0 %v119
  %v853 = vpop.f32.mrf.mxu0
  %v854 = vadd.f32 %v597, %v853
  %v855 = vpop.f32.mrf.mxu0
  %v856 = vadd.f32 %v599, %v855
  %857 = vmatmul.bf16.gmra.mxu0 %v120
  %v858 = vpop.f32.mrf.mxu0
  %v859 = vadd.f32 %v602, %v858
  %v860 = vpop.f32.mrf.mxu0
  %v861 = vadd.f32 %v604, %v860
  %862 = vmatmul.bf16.gmra.mxu0 %v121
  %v863 = vpop.f32.mrf.mxu0
  %v864 = vadd.f32 %v607, %v863
  %v865 = vpop.f32.mrf.mxu0
  %v866 = vadd.f32 %v609, %v865
  %867 = vmatmul.bf16.gmra.mxu0 %v122
  %v868 = vpop.f32.mrf.mxu0
  %v869 = vadd.f32 %v612, %v868
  %v870 = vpop.f32.mrf.mxu0
  %v871 = vadd.f32 %v614, %v870
  %872 = vmatmul.bf16.gmra.mxu0 %v123
  %v873 = vpop.f32.mrf.mxu0
  %v874 = vadd.f32 %v617, %v873
  %v875 = vpop.f32.mrf.mxu0
  %v876 = vadd.f32 %v619, %v875
  %877 = vmatmul.bf16.gmra.mxu0 %v124
  %v878 = vpop.f32.mrf.mxu0
  %v879 = vadd.f32 %v622, %v878
  %v880 = vpop.f32.mrf.mxu0
  %v881 = vadd.f32 %v624, %v880
  %882 = vmatmul.bf16.gmra.mxu0 %v125
  %v883 = vpop.f32.mrf.mxu0
  %v884 = vadd.f32 %v627, %v883
  %v885 = vpop.f32.mrf.mxu0
  %v886 = vadd.f32 %v629, %v885
  %887 = vmatmul.bf16.gmra.mxu0 %v126
  %v888 = vpop.f32.mrf.mxu0
  %v889 = vadd.f32 %v632, %v888
  %v890 = vpop.f32.mrf.mxu0
  %v891 = vadd.f32 %v634, %v890
  %892 = vmatmul.bf16.gmra.mxu0 %v127
  %v893 = vpop.f32.mrf.mxu0
  %v894 = vadd.f32 %v637, %v893
  %v895 = vpop.f32.mrf.mxu0
  %v896 = vadd.f32 %v639, %v895
  %897 = vmatmul.bf16.gmra.mxu0 %v128
  %v898 = vpop.f32.mrf.mxu0
  %v899 = vadd.f32 %v642, %v898
  %v900 = vpop.f32.mrf.mxu0
  %v901 = vadd.f32 %v644, %v900
  %902 = vmatmul.bf16.gmra.mxu0 %v129
  %v903 = vpop.f32.mrf.mxu0
  %v904 = vadd.f32 %v647, %v903
  %v905 = vpop.f32.mrf.mxu0
  %v906 = vadd.f32 %v649, %v905
  %907 = vmatmul.bf16.gmra.mxu0 %v130
  %v908 = vpop.f32.mrf.mxu0
  %v909 = vadd.f32 %v652, %v908
  %v910 = vpop.f32.mrf.mxu0
  %v911 = vadd.f32 %v654, %v910
  %912 = vmatmul.bf16.gmra.mxu0 %v131
  %v913 = vpop.f32.mrf.mxu0
  %v914 = vadd.f32 %v657, %v913
  %v915 = vpop.f32.mrf.mxu0
  %v916 = vadd.f32 %v659, %v915
  %917 = vmatmul.bf16.gmra.mxu0 %v132
  %v918 = vpop.f32.mrf.mxu0
  %v919 = vadd.f32 %v662, %v918
  %v920 = vpop.f32.mrf.mxu0
  %v921 = vadd.f32 %v664, %v920
  %922 = vmatmul.bf16.gmra.mxu0 %v133
  %v923 = vpop.f32.mrf.mxu0
  %v924 = vadd.f32 %v667, %v923
  %v925 = vpop.f32.mrf.mxu0
  %v926 = vadd.f32 %v669, %v925
  %927 = vmatmul.bf16.gmra.mxu0 %v134
  %v928 = vpop.f32.mrf.mxu0
  %v929 = vadd.f32 %v672, %v928
  %v930 = vpop.f32.mrf.mxu0
  %v931 = vadd.f32 %v674, %v930
  %932 = vmatmul.bf16.gmra.mxu0 %v135
  %v933 = vpop.f32.mrf.mxu0
  %v934 = vadd.f32 %v677, %v933
  %v935 = vpop.f32.mrf.mxu0
  %v936 = vadd.f32 %v679, %v935
  %937 = vmatmul.bf16.gmra.mxu0 %v136
  %v938 = vpop.f32.mrf.mxu0
  %v939 = vadd.f32 %v682, %v938
  %v940 = vpop.f32.mrf.mxu0
  %v941 = vadd.f32 %v684, %v940
  %942 = vmatmul.bf16.gmra.mxu0 %v137
  %v943 = vpop.f32.mrf.mxu0
  %v944 = vadd.f32 %v687, %v943
  %v945 = vpop.f32.mrf.mxu0
  %v946 = vadd.f32 %v689, %v945
  %947 = vmatmul.bf16.gmra.mxu0 %v138
  %v948 = vpop.f32.mrf.mxu0
  %v949 = vadd.f32 %v692, %v948
  %v950 = vpop.f32.mrf.mxu0
  %v951 = vadd.f32 %v694, %v950
  %952 = vmatmul.bf16.gmra.mxu0 %v139
  %v953 = vpop.f32.mrf.mxu0
  %v954 = vadd.f32 %v697, %v953
  %v955 = vpop.f32.mrf.mxu0
  %v956 = vadd.f32 %v699, %v955
  %957 = vmatmul.bf16.gmra.mxu0 %v140
  %v958 = vpop.f32.mrf.mxu0
  %v959 = vadd.f32 %v702, %v958
  %v960 = vpop.f32.mrf.mxu0
  %v961 = vadd.f32 %v704, %v960
  %962 = vmatmul.bf16.gmra.mxu0 %v141
  %v963 = vpop.f32.mrf.mxu0
  %v964 = vadd.f32 %v707, %v963
  %v965 = vpop.f32.mrf.mxu0
  %v966 = vadd.f32 %v709, %v965
  %967 = vmatmul.bf16.gmra.mxu0 %v142
  %v968 = vpop.f32.mrf.mxu0
  %v969 = vadd.f32 %v712, %v968
  %v970 = vpop.f32.mrf.mxu0
  %v971 = vadd.f32 %v714, %v970
  %972 = vmatmul.bf16.gmra.mxu0 %v143
  %v973 = vpop.f32.mrf.mxu0
  %v974 = vadd.f32 %v717, %v973
  %v975 = vpop.f32.mrf.mxu0
  %v976 = vadd.f32 %v719, %v975
  %977 = vmatmul.bf16.gmra.mxu0 %v144
  %v978 = vpop.f32.mrf.mxu0
  %v979 = vadd.f32 %v722, %v978
  %v980 = vpop.f32.mrf.mxu0
  %v981 = vadd.f32 %v724, %v980
  %982 = vmatmul.bf16.gmra.mxu0 %v145
  %v983 = vpop.f32.mrf.mxu0
  %v984 = vadd.f32 %v727, %v983
  %v985 = vpop.f32.mrf.mxu0
  %v986 = vadd.f32 %v729, %v985
  %987 = vmatmul.bf16.gmra.mxu0 %v146
  %v988 = vpop.f32.mrf.mxu0
  %v989 = vadd.f32 %v732, %v988
  %v990 = vpop.f32.mrf.mxu0
  %v991 = vadd.f32 %v734, %v990
  %992 = vmatmul.bf16.gmra.mxu0 %v147
  %v993 = vpop.f32.mrf.mxu0
  %v994 = vadd.f32 %v737, %v993
  %v995 = vpop.f32.mrf.mxu0
  %v996 = vadd.f32 %v739, %v995
  %997 = vmatmul.bf16.gmra.mxu0 %v148
  %v998 = vpop.f32.mrf.mxu0
  %v999 = vadd.f32 %v742, %v998
  %v1000 = vpop.f32.mrf.mxu0
  %v1001 = vadd.f32 %v744, %v1000
  %1002 = vmatmul.bf16.gmra.mxu0 %v149
  %v1003 = vpop.f32.mrf.mxu0
  %v1004 = vadd.f32 %v747, %v1003
  %v1005 = vpop.f32.mrf.mxu0
  %v1006 = vadd.f32 %v749, %v1005
  %1007 = vmatmul.bf16.gmra.mxu0 %v150
  %v1008 = vpop.f32.mrf.mxu0
  %v1009 = vadd.f32 %v752, %v1008
  %v1010 = vpop.f32.mrf.mxu0
  %v1011 = vadd.f32 %v754, %v1010
  %1012 = vmatmul.bf16.gmra.mxu0 %v151
  %v1013 = vpop.f32.mrf.mxu0
  %v1014 = vadd.f32 %v757, %v1013
  %v1015 = vpop.f32.mrf.mxu0
  %v1016 = vadd.f32 %v759, %v1015
  %1017 = vdwg.mxu0
  %v1018 = vld [vmem:[%s4] sm:$0x1]
  %v1020 = vperm.slane %v1018, 0
  %v1022 = vadd.f32 %v819, %v1020
  %v1023 = vadd.f32 %v821, %v1020
  %v1024 = vadd.f32 %v824, %v1020
  %v1025 = vadd.f32 %v826, %v1020
  %v1026 = vadd.f32 %v829, %v1020
  %v1027 = vadd.f32 %v831, %v1020
  %v1028 = vadd.f32 %v834, %v1020
  %v1029 = vadd.f32 %v836, %v1020
  %v1030 = vadd.f32 %v839, %v1020
  %v1031 = vadd.f32 %v841, %v1020
  %v1032 = vadd.f32 %v844, %v1020
  %v1033 = vadd.f32 %v846, %v1020
  %v1034 = vadd.f32 %v849, %v1020
  %v1035 = vadd.f32 %v851, %v1020
  %v1036 = vadd.f32 %v854, %v1020
  %v1037 = vadd.f32 %v856, %v1020
  %v1038 = vadd.f32 %v859, %v1020
  %v1039 = vadd.f32 %v861, %v1020
  %v1040 = vadd.f32 %v864, %v1020
  %v1041 = vadd.f32 %v866, %v1020
  %v1042 = vadd.f32 %v869, %v1020
  %v1043 = vadd.f32 %v871, %v1020
  %v1044 = vadd.f32 %v874, %v1020
  %v1045 = vadd.f32 %v876, %v1020
  %v1046 = vadd.f32 %v879, %v1020
  %v1047 = vadd.f32 %v881, %v1020
  %v1048 = vadd.f32 %v884, %v1020
  %v1049 = vadd.f32 %v886, %v1020
  %v1050 = vadd.f32 %v889, %v1020
  %v1051 = vadd.f32 %v891, %v1020
  %v1052 = vadd.f32 %v894, %v1020
  %v1053 = vadd.f32 %v896, %v1020
  %v1054 = vadd.f32 %v899, %v1020
  %v1055 = vadd.f32 %v901, %v1020
  %v1056 = vadd.f32 %v904, %v1020
  %v1057 = vadd.f32 %v906, %v1020
  %v1058 = vadd.f32 %v909, %v1020
  %v1059 = vadd.f32 %v911, %v1020
  %v1060 = vadd.f32 %v914, %v1020
  %v1061 = vadd.f32 %v916, %v1020
  %v1062 = vadd.f32 %v919, %v1020
  %v1063 = vadd.f32 %v921, %v1020
  %v1064 = vadd.f32 %v924, %v1020
  %v1065 = vadd.f32 %v926, %v1020
  %v1066 = vadd.f32 %v929, %v1020
  %v1067 = vadd.f32 %v931, %v1020
  %v1068 = vadd.f32 %v934, %v1020
  %v1069 = vadd.f32 %v936, %v1020
  %v1070 = vadd.f32 %v939, %v1020
  %v1071 = vadd.f32 %v941, %v1020
  %v1072 = vadd.f32 %v944, %v1020
  %v1073 = vadd.f32 %v946, %v1020
  %v1074 = vadd.f32 %v949, %v1020
  %v1075 = vadd.f32 %v951, %v1020
  %v1076 = vadd.f32 %v954, %v1020
  %v1077 = vadd.f32 %v956, %v1020
  %v1078 = vadd.f32 %v959, %v1020
  %v1079 = vadd.f32 %v961, %v1020
  %v1080 = vadd.f32 %v964, %v1020
  %v1081 = vadd.f32 %v966, %v1020
  %v1082 = vadd.f32 %v969, %v1020
  %v1083 = vadd.f32 %v971, %v1020
  %v1084 = vadd.f32 %v974, %v1020
  %v1085 = vadd.f32 %v976, %v1020
  %v1086 = vadd.f32 %v979, %v1020
  %v1087 = vadd.f32 %v981, %v1020
  %v1088 = vadd.f32 %v984, %v1020
  %v1089 = vadd.f32 %v986, %v1020
  %v1090 = vadd.f32 %v989, %v1020
  %v1091 = vadd.f32 %v991, %v1020
  %v1092 = vadd.f32 %v994, %v1020
  %v1093 = vadd.f32 %v996, %v1020
  %v1094 = vadd.f32 %v999, %v1020
  %v1095 = vadd.f32 %v1001, %v1020
  %v1096 = vadd.f32 %v1004, %v1020
  %v1097 = vadd.f32 %v1006, %v1020
  %v1098 = vadd.f32 %v1009, %v1020
  %v1099 = vadd.f32 %v1011, %v1020
  %v1100 = vadd.f32 %v1014, %v1020
  %v1101 = vadd.f32 %v1016, %v1020
  %v1102 = vxor.u32 %v1022, 2147483648
  %v1103 = vxor.u32 %v1023, 2147483648
  %v1104 = vxor.u32 %v1024, 2147483648
  %v1105 = vxor.u32 %v1025, 2147483648
  %v1106 = vxor.u32 %v1026, 2147483648
  %v1107 = vxor.u32 %v1027, 2147483648
  %v1108 = vxor.u32 %v1028, 2147483648
  %v1109 = vxor.u32 %v1029, 2147483648
  %v1110 = vxor.u32 %v1030, 2147483648
  %v1111 = vxor.u32 %v1031, 2147483648
  %v1112 = vxor.u32 %v1032, 2147483648
  %v1113 = vxor.u32 %v1033, 2147483648
  %v1114 = vxor.u32 %v1034, 2147483648
  %v1115 = vxor.u32 %v1035, 2147483648
  %v1116 = vxor.u32 %v1036, 2147483648
  %v1117 = vxor.u32 %v1037, 2147483648
  %v1118 = vxor.u32 %v1038, 2147483648
  %v1119 = vxor.u32 %v1039, 2147483648
  %v1120 = vxor.u32 %v1040, 2147483648
  %v1121 = vxor.u32 %v1041, 2147483648
  %v1122 = vxor.u32 %v1042, 2147483648
  %v1123 = vxor.u32 %v1043, 2147483648
  %v1124 = vxor.u32 %v1044, 2147483648
  %v1125 = vxor.u32 %v1045, 2147483648
  %v1126 = vxor.u32 %v1046, 2147483648
  %v1127 = vxor.u32 %v1047, 2147483648
  %v1128 = vxor.u32 %v1048, 2147483648
  %v1129 = vxor.u32 %v1049, 2147483648
  %v1130 = vxor.u32 %v1050, 2147483648
  %v1131 = vxor.u32 %v1051, 2147483648
  %v1132 = vxor.u32 %v1052, 2147483648
  %v1133 = vxor.u32 %v1053, 2147483648
  %v1134 = vxor.u32 %v1054, 2147483648
  %v1135 = vxor.u32 %v1055, 2147483648
  %v1136 = vxor.u32 %v1056, 2147483648
  %v1137 = vxor.u32 %v1057, 2147483648
  %v1138 = vxor.u32 %v1058, 2147483648
  %v1139 = vxor.u32 %v1059, 2147483648
  %v1140 = vxor.u32 %v1060, 2147483648
  %v1141 = vxor.u32 %v1061, 2147483648
  %v1142 = vxor.u32 %v1062, 2147483648
  %v1143 = vxor.u32 %v1063, 2147483648
  %v1144 = vxor.u32 %v1064, 2147483648
  %v1145 = vxor.u32 %v1065, 2147483648
  %v1146 = vxor.u32 %v1066, 2147483648
  %v1147 = vxor.u32 %v1067, 2147483648
  %v1148 = vxor.u32 %v1068, 2147483648
  %v1149 = vxor.u32 %v1069, 2147483648
  %v1150 = vxor.u32 %v1070, 2147483648
  %v1151 = vxor.u32 %v1071, 2147483648
  %v1152 = vxor.u32 %v1072, 2147483648
  %v1153 = vxor.u32 %v1073, 2147483648
  %v1154 = vxor.u32 %v1074, 2147483648
  %v1155 = vxor.u32 %v1075, 2147483648
  %v1156 = vxor.u32 %v1076, 2147483648
  %v1157 = vxor.u32 %v1077, 2147483648
  %v1158 = vxor.u32 %v1078, 2147483648
  %v1159 = vxor.u32 %v1079, 2147483648
  %v1160 = vxor.u32 %v1080, 2147483648
  %v1161 = vxor.u32 %v1081, 2147483648
  %v1162 = vxor.u32 %v1082, 2147483648
  %v1163 = vxor.u32 %v1083, 2147483648
  %v1164 = vxor.u32 %v1084, 2147483648
  %v1165 = vxor.u32 %v1085, 2147483648
  %v1166 = vxor.u32 %v1086, 2147483648
  %v1167 = vxor.u32 %v1087, 2147483648
  %v1168 = vxor.u32 %v1088, 2147483648
  %v1169 = vxor.u32 %v1089, 2147483648
  %v1170 = vxor.u32 %v1090, 2147483648
  %v1171 = vxor.u32 %v1091, 2147483648
  %v1172 = vxor.u32 %v1092, 2147483648
  %v1173 = vxor.u32 %v1093, 2147483648
  %v1174 = vxor.u32 %v1094, 2147483648
  %v1175 = vxor.u32 %v1095, 2147483648
  %v1176 = vxor.u32 %v1096, 2147483648
  %v1177 = vxor.u32 %v1097, 2147483648
  %v1178 = vxor.u32 %v1098, 2147483648
  %v1179 = vxor.u32 %v1099, 2147483648
  %v1180 = vxor.u32 %v1100, 2147483648
  %v1181 = vxor.u32 %v1101, 2147483648
  %v1182 = vmul.f32 %v1102, 1.442695
  %v1183 = vpow.pop %v1182
  %v1184 = vmul.f32 %v1103, 1.442695
  %v1185 = vpow.pop %v1184
  %v1186 = vmul.f32 %v1104, 1.442695
  %v1187 = vpow.pop %v1186
  %v1188 = vmul.f32 %v1105, 1.442695
  %v1189 = vpow.pop %v1188
  %v1190 = vmul.f32 %v1106, 1.442695
  %v1191 = vpow.pop %v1190
  %v1192 = vmul.f32 %v1107, 1.442695
  %v1193 = vpow.pop %v1192
  %v1194 = vmul.f32 %v1108, 1.442695
  %v1195 = vpow.pop %v1194
  %v1196 = vmul.f32 %v1109, 1.442695
  %v1197 = vpow.pop %v1196
  %v1198 = vmul.f32 %v1110, 1.442695
  %v1199 = vpow.pop %v1198
  %v1200 = vmul.f32 %v1111, 1.442695
  %v1201 = vpow.pop %v1200
  %v1202 = vmul.f32 %v1112, 1.442695
  %v1203 = vpow.pop %v1202
  %v1204 = vmul.f32 %v1113, 1.442695
  %v1205 = vpow.pop %v1204
  %v1206 = vmul.f32 %v1114, 1.442695
  %v1207 = vpow.pop %v1206
  %v1208 = vmul.f32 %v1115, 1.442695
  %v1209 = vpow.pop %v1208
  %v1210 = vmul.f32 %v1116, 1.442695
  %v1211 = vpow.pop %v1210
  %v1212 = vmul.f32 %v1117, 1.442695
  %v1213 = vpow.pop %v1212
  %v1214 = vmul.f32 %v1118, 1.442695
  %v1215 = vpow.pop %v1214
  %v1216 = vmul.f32 %v1119, 1.442695
  %v1217 = vpow.pop %v1216
  %v1218 = vmul.f32 %v1120, 1.442695
  %v1219 = vpow.pop %v1218
  %v1220 = vmul.f32 %v1121, 1.442695
  %v1221 = vpow.pop %v1220
  %v1222 = vmul.f32 %v1122, 1.442695
  %v1223 = vpow.pop %v1222
  %v1224 = vmul.f32 %v1123, 1.442695
  %v1225 = vpow.pop %v1224
  %v1226 = vmul.f32 %v1124, 1.442695
  %v1227 = vpow.pop %v1226
  %v1228 = vmul.f32 %v1125, 1.442695
  %v1229 = vpow.pop %v1228
  %v1230 = vmul.f32 %v1126, 1.442695
  %v1231 = vpow.pop %v1230
  %v1232 = vmul.f32 %v1127, 1.442695
  %v1233 = vpow.pop %v1232
  %v1234 = vmul.f32 %v1128, 1.442695
  %v1235 = vpow.pop %v1234
  %v1236 = vmul.f32 %v1129, 1.442695
  %v1237 = vpow.pop %v1236
  %v1238 = vmul.f32 %v1130, 1.442695
  %v1239 = vpow.pop %v1238
  %v1240 = vmul.f32 %v1131, 1.442695
  %v1241 = vpow.pop %v1240
  %v1242 = vmul.f32 %v1132, 1.442695
  %v1243 = vpow.pop %v1242
  %v1244 = vmul.f32 %v1133, 1.442695
  %v1245 = vpow.pop %v1244
  %v1246 = vmul.f32 %v1134, 1.442695
  %v1247 = vpow.pop %v1246
  %v1248 = vmul.f32 %v1135, 1.442695
  %v1249 = vpow.pop %v1248
  %v1250 = vmul.f32 %v1136, 1.442695
  %v1251 = vpow.pop %v1250
  %v1252 = vmul.f32 %v1137, 1.442695
  %v1253 = vpow.pop %v1252
  %v1254 = vmul.f32 %v1138, 1.442695
  %v1255 = vpow.pop %v1254
  %v1256 = vmul.f32 %v1139, 1.442695
  %v1257 = vpow.pop %v1256
  %v1258 = vmul.f32 %v1140, 1.442695
  %v1259 = vpow.pop %v1258
  %v1260 = vmul.f32 %v1141, 1.442695
  %v1261 = vpow.pop %v1260
  %v1262 = vmul.f32 %v1142, 1.442695
  %v1263 = vpow.pop %v1262
  %v1264 = vmul.f32 %v1143, 1.442695
  %v1265 = vpow.pop %v1264
  %v1266 = vmul.f32 %v1144, 1.442695
  %v1267 = vpow.pop %v1266
  %v1268 = vmul.f32 %v1145, 1.442695
  %v1269 = vpow.pop %v1268
  %v1270 = vmul.f32 %v1146, 1.442695
  %v1271 = vpow.pop %v1270
  %v1272 = vmul.f32 %v1147, 1.442695
  %v1273 = vpow.pop %v1272
  %v1274 = vmul.f32 %v1148, 1.442695
  %v1275 = vpow.pop %v1274
  %v1276 = vmul.f32 %v1149, 1.442695
  %v1277 = vpow.pop %v1276
  %v1278 = vmul.f32 %v1150, 1.442695
  %v1279 = vpow.pop %v1278
  %v1280 = vmul.f32 %v1151, 1.442695
  %v1281 = vpow.pop %v1280
  %v1282 = vmul.f32 %v1152, 1.442695
  %v1283 = vpow.pop %v1282
  %v1284 = vmul.f32 %v1153, 1.442695
  %v1285 = vpow.pop %v1284
  %v1286 = vmul.f32 %v1154, 1.442695
  %v1287 = vpow.pop %v1286
  %v1288 = vmul.f32 %v1155, 1.442695
  %v1289 = vpow.pop %v1288
  %v1290 = vmul.f32 %v1156, 1.442695
  %v1291 = vpow.pop %v1290
  %v1292 = vmul.f32 %v1157, 1.442695
  %v1293 = vpow.pop %v1292
  %v1294 = vmul.f32 %v1158, 1.442695
  %v1295 = vpow.pop %v1294
  %v1296 = vmul.f32 %v1159, 1.442695
  %v1297 = vpow.pop %v1296
  %v1298 = vmul.f32 %v1160, 1.442695
  %v1299 = vpow.pop %v1298
  %v1300 = vmul.f32 %v1161, 1.442695
  %v1301 = vpow.pop %v1300
  %v1302 = vmul.f32 %v1162, 1.442695
  %v1303 = vpow.pop %v1302
  %v1304 = vmul.f32 %v1163, 1.442695
  %v1305 = vpow.pop %v1304
  %v1306 = vmul.f32 %v1164, 1.442695
  %v1307 = vpow.pop %v1306
  %v1308 = vmul.f32 %v1165, 1.442695
  %v1309 = vpow.pop %v1308
  %v1310 = vmul.f32 %v1166, 1.442695
  %v1311 = vpow.pop %v1310
  %v1312 = vmul.f32 %v1167, 1.442695
  %v1313 = vpow.pop %v1312
  %v1314 = vmul.f32 %v1168, 1.442695
  %v1315 = vpow.pop %v1314
  %v1316 = vmul.f32 %v1169, 1.442695
  %v1317 = vpow.pop %v1316
  %v1318 = vmul.f32 %v1170, 1.442695
  %v1319 = vpow.pop %v1318
  %v1320 = vmul.f32 %v1171, 1.442695
  %v1321 = vpow.pop %v1320
  %v1322 = vmul.f32 %v1172, 1.442695
  %v1323 = vpow.pop %v1322
  %v1324 = vmul.f32 %v1173, 1.442695
  %v1325 = vpow.pop %v1324
  %v1326 = vmul.f32 %v1174, 1.442695
  %v1327 = vpow.pop %v1326
  %v1328 = vmul.f32 %v1175, 1.442695
  %v1329 = vpow.pop %v1328
  %v1330 = vmul.f32 %v1176, 1.442695
  %v1331 = vpow.pop %v1330
  %v1332 = vmul.f32 %v1177, 1.442695
  %v1333 = vpow.pop %v1332
  %v1334 = vmul.f32 %v1178, 1.442695
  %v1335 = vpow.pop %v1334
  %v1336 = vmul.f32 %v1179, 1.442695
  %v1337 = vpow.pop %v1336
  %v1338 = vmul.f32 %v1180, 1.442695
  %v1339 = vpow.pop %v1338
  %v1340 = vmul.f32 %v1181, 1.442695
  %v1341 = vpow.pop %v1340
  %v1342 = vadd.f32 %v1183, 1.0
  %v1343 = vadd.f32 %v1185, 1.0
  %v1344 = vadd.f32 %v1187, 1.0
  %v1345 = vadd.f32 %v1189, 1.0
  %v1346 = vadd.f32 %v1191, 1.0
  %v1347 = vadd.f32 %v1193, 1.0
  %v1348 = vadd.f32 %v1195, 1.0
  %v1349 = vadd.f32 %v1197, 1.0
  %v1350 = vadd.f32 %v1199, 1.0
  %v1351 = vadd.f32 %v1201, 1.0
  %v1352 = vadd.f32 %v1203, 1.0
  %v1353 = vadd.f32 %v1205, 1.0
  %v1354 = vadd.f32 %v1207, 1.0
  %v1355 = vadd.f32 %v1209, 1.0
  %v1356 = vadd.f32 %v1211, 1.0
  %v1357 = vadd.f32 %v1213, 1.0
  %v1358 = vadd.f32 %v1215, 1.0
  %v1359 = vadd.f32 %v1217, 1.0
  %v1360 = vadd.f32 %v1219, 1.0
  %v1361 = vadd.f32 %v1221, 1.0
  %v1362 = vadd.f32 %v1223, 1.0
  %v1363 = vadd.f32 %v1225, 1.0
  %v1364 = vadd.f32 %v1227, 1.0
  %v1365 = vadd.f32 %v1229, 1.0
  %v1366 = vadd.f32 %v1231, 1.0
  %v1367 = vadd.f32 %v1233, 1.0
  %v1368 = vadd.f32 %v1235, 1.0
  %v1369 = vadd.f32 %v1237, 1.0
  %v1370 = vadd.f32 %v1239, 1.0
  %v1371 = vadd.f32 %v1241, 1.0
  %v1372 = vadd.f32 %v1243, 1.0
  %v1373 = vadd.f32 %v1245, 1.0
  %v1374 = vadd.f32 %v1247, 1.0
  %v1375 = vadd.f32 %v1249, 1.0
  %v1376 = vadd.f32 %v1251, 1.0
  %v1377 = vadd.f32 %v1253, 1.0
  %v1378 = vadd.f32 %v1255, 1.0
  %v1379 = vadd.f32 %v1257, 1.0
  %v1380 = vadd.f32 %v1259, 1.0
  %v1381 = vadd.f32 %v1261, 1.0
  %v1382 = vadd.f32 %v1263, 1.0
  %v1383 = vadd.f32 %v1265, 1.0
  %v1384 = vadd.f32 %v1267, 1.0
  %v1385 = vadd.f32 %v1269, 1.0
  %v1386 = vadd.f32 %v1271, 1.0
  %v1387 = vadd.f32 %v1273, 1.0
  %v1388 = vadd.f32 %v1275, 1.0
  %v1389 = vadd.f32 %v1277, 1.0
  %v1390 = vadd.f32 %v1279, 1.0
  %v1391 = vadd.f32 %v1281, 1.0
  %v1392 = vadd.f32 %v1283, 1.0
  %v1393 = vadd.f32 %v1285, 1.0
  %v1394 = vadd.f32 %v1287, 1.0
  %v1395 = vadd.f32 %v1289, 1.0
  %v1396 = vadd.f32 %v1291, 1.0
  %v1397 = vadd.f32 %v1293, 1.0
  %v1398 = vadd.f32 %v1295, 1.0
  %v1399 = vadd.f32 %v1297, 1.0
  %v1400 = vadd.f32 %v1299, 1.0
  %v1401 = vadd.f32 %v1301, 1.0
  %v1402 = vadd.f32 %v1303, 1.0
  %v1403 = vadd.f32 %v1305, 1.0
  %v1404 = vadd.f32 %v1307, 1.0
  %v1405 = vadd.f32 %v1309, 1.0
  %v1406 = vadd.f32 %v1311, 1.0
  %v1407 = vadd.f32 %v1313, 1.0
  %v1408 = vadd.f32 %v1315, 1.0
  %v1409 = vadd.f32 %v1317, 1.0
  %v1410 = vadd.f32 %v1319, 1.0
  %v1411 = vadd.f32 %v1321, 1.0
  %v1412 = vadd.f32 %v1323, 1.0
  %v1413 = vadd.f32 %v1325, 1.0
  %v1414 = vadd.f32 %v1327, 1.0
  %v1415 = vadd.f32 %v1329, 1.0
  %v1416 = vadd.f32 %v1331, 1.0
  %v1417 = vadd.f32 %v1333, 1.0
  %v1418 = vadd.f32 %v1335, 1.0
  %v1419 = vadd.f32 %v1337, 1.0
  %v1420 = vadd.f32 %v1339, 1.0
  %v1421 = vadd.f32 %v1341, 1.0
  %v1422 = vrcp.pop %v1342
  %v1423 = vmul.f32 %v1342, %v1422
  %v1424 = vsub.f32 1.0, %v1423
  %v1425 = vmul.f32 %v1422, %v1424
  %v1426 = vadd.f32 %v1422, %v1425
  %vm1427 = vweird.f32 %v1342
  %vm1428 = vweird.f32 %v1422
  %vm1429 = vmor %vm1427, %vm1428
  %v1430 = vsel %vm1429, %v1422, %v1426
  %v1431 = vand.u32 2147483647, %v1342
  %vm1432 = vcmp.eq.f32.partialorder %v1431, 8.507059e+37
  %v1433 = vand.u32 %v1342, 2147483648
  %v1434 = vor.u32 1.1754944e-38, %v1433
  %v1435 = vsel %vm1432, %v1434, %v1430
  %v1436 = vmul.f32 1.0, %v1435
  %v1437 = vrcp.pop %v1343
  %v1438 = vmul.f32 %v1343, %v1437
  %v1439 = vsub.f32 1.0, %v1438
  %v1440 = vmul.f32 %v1437, %v1439
  %v1441 = vadd.f32 %v1437, %v1440
  %vm1442 = vweird.f32 %v1343
  %vm1443 = vweird.f32 %v1437
  %vm1444 = vmor %vm1442, %vm1443
  %v1445 = vsel %vm1444, %v1437, %v1441
  %v1446 = vand.u32 2147483647, %v1343
  %vm1447 = vcmp.eq.f32.partialorder %v1446, 8.507059e+37
  %v1448 = vand.u32 %v1343, 2147483648
  %v1449 = vor.u32 1.1754944e-38, %v1448
  %v1450 = vsel %vm1447, %v1449, %v1445
  %v1451 = vmul.f32 1.0, %v1450
  %v1452 = vrcp.pop %v1344
  %v1453 = vmul.f32 %v1344, %v1452
  %v1454 = vsub.f32 1.0, %v1453
  %v1455 = vmul.f32 %v1452, %v1454
  %v1456 = vadd.f32 %v1452, %v1455
  %vm1457 = vweird.f32 %v1344
  %vm1458 = vweird.f32 %v1452
  %vm1459 = vmor %vm1457, %vm1458
  %v1460 = vsel %vm1459, %v1452, %v1456
  %v1461 = vand.u32 2147483647, %v1344
  %vm1462 = vcmp.eq.f32.partialorder %v1461, 8.507059e+37
  %v1463 = vand.u32 %v1344, 2147483648
  %v1464 = vor.u32 1.1754944e-38, %v1463
  %v1465 = vsel %vm1462, %v1464, %v1460
  %v1466 = vmul.f32 1.0, %v1465
  %v1467 = vrcp.pop %v1345
  %v1468 = vmul.f32 %v1345, %v1467
  %v1469 = vsub.f32 1.0, %v1468
  %v1470 = vmul.f32 %v1467, %v1469
  %v1471 = vadd.f32 %v1467, %v1470
  %vm1472 = vweird.f32 %v1345
  %vm1473 = vweird.f32 %v1467
  %vm1474 = vmor %vm1472, %vm1473
  %v1475 = vsel %vm1474, %v1467, %v1471
  %v1476 = vand.u32 2147483647, %v1345
  %vm1477 = vcmp.eq.f32.partialorder %v1476, 8.507059e+37
  %v1478 = vand.u32 %v1345, 2147483648
  %v1479 = vor.u32 1.1754944e-38, %v1478
  %v1480 = vsel %vm1477, %v1479, %v1475
  %v1481 = vmul.f32 1.0, %v1480
  %v1482 = vrcp.pop %v1346
  %v1483 = vmul.f32 %v1346, %v1482
  %v1484 = vsub.f32 1.0, %v1483
  %v1485 = vmul.f32 %v1482, %v1484
  %v1486 = vadd.f32 %v1482, %v1485
  %vm1487 = vweird.f32 %v1346
  %vm1488 = vweird.f32 %v1482
  %vm1489 = vmor %vm1487, %vm1488
  %v1490 = vsel %vm1489, %v1482, %v1486
  %v1491 = vand.u32 2147483647, %v1346
  %vm1492 = vcmp.eq.f32.partialorder %v1491, 8.507059e+37
  %v1493 = vand.u32 %v1346, 2147483648
  %v1494 = vor.u32 1.1754944e-38, %v1493
  %v1495 = vsel %vm1492, %v1494, %v1490
  %v1496 = vmul.f32 1.0, %v1495
  %v1497 = vrcp.pop %v1347
  %v1498 = vmul.f32 %v1347, %v1497
  %v1499 = vsub.f32 1.0, %v1498
  %v1500 = vmul.f32 %v1497, %v1499
  %v1501 = vadd.f32 %v1497, %v1500
  %vm1502 = vweird.f32 %v1347
  %vm1503 = vweird.f32 %v1497
  %vm1504 = vmor %vm1502, %vm1503
  %v1505 = vsel %vm1504, %v1497, %v1501
  %v1506 = vand.u32 2147483647, %v1347
  %vm1507 = vcmp.eq.f32.partialorder %v1506, 8.507059e+37
  %v1508 = vand.u32 %v1347, 2147483648
  %v1509 = vor.u32 1.1754944e-38, %v1508
  %v1510 = vsel %vm1507, %v1509, %v1505
  %v1511 = vmul.f32 1.0, %v1510
  %v1512 = vrcp.pop %v1348
  %v1513 = vmul.f32 %v1348, %v1512
  %v1514 = vsub.f32 1.0, %v1513
  %v1515 = vmul.f32 %v1512, %v1514
  %v1516 = vadd.f32 %v1512, %v1515
  %vm1517 = vweird.f32 %v1348
  %vm1518 = vweird.f32 %v1512
  %vm1519 = vmor %vm1517, %vm1518
  %v1520 = vsel %vm1519, %v1512, %v1516
  %v1521 = vand.u32 2147483647, %v1348
  %vm1522 = vcmp.eq.f32.partialorder %v1521, 8.507059e+37
  %v1523 = vand.u32 %v1348, 2147483648
  %v1524 = vor.u32 1.1754944e-38, %v1523
  %v1525 = vsel %vm1522, %v1524, %v1520
  %v1526 = vmul.f32 1.0, %v1525
  %v1527 = vrcp.pop %v1349
  %v1528 = vmul.f32 %v1349, %v1527
  %v1529 = vsub.f32 1.0, %v1528
  %v1530 = vmul.f32 %v1527, %v1529
  %v1531 = vadd.f32 %v1527, %v1530
  %vm1532 = vweird.f32 %v1349
  %vm1533 = vweird.f32 %v1527
  %vm1534 = vmor %vm1532, %vm1533
  %v1535 = vsel %vm1534, %v1527, %v1531
  %v1536 = vand.u32 2147483647, %v1349
  %vm1537 = vcmp.eq.f32.partialorder %v1536, 8.507059e+37
  %v1538 = vand.u32 %v1349, 2147483648
  %v1539 = vor.u32 1.1754944e-38, %v1538
  %v1540 = vsel %vm1537, %v1539, %v1535
  %v1541 = vmul.f32 1.0, %v1540
  %v1542 = vrcp.pop %v1350
  %v1543 = vmul.f32 %v1350, %v1542
  %v1544 = vsub.f32 1.0, %v1543
  %v1545 = vmul.f32 %v1542, %v1544
  %v1546 = vadd.f32 %v1542, %v1545
  %vm1547 = vweird.f32 %v1350
  %vm1548 = vweird.f32 %v1542
  %vm1549 = vmor %vm1547, %vm1548
  %v1550 = vsel %vm1549, %v1542, %v1546
  %v1551 = vand.u32 2147483647, %v1350
  %vm1552 = vcmp.eq.f32.partialorder %v1551, 8.507059e+37
  %v1553 = vand.u32 %v1350, 2147483648
  %v1554 = vor.u32 1.1754944e-38, %v1553
  %v1555 = vsel %vm1552, %v1554, %v1550
  %v1556 = vmul.f32 1.0, %v1555
  %v1557 = vrcp.pop %v1351
  %v1558 = vmul.f32 %v1351, %v1557
  %v1559 = vsub.f32 1.0, %v1558
  %v1560 = vmul.f32 %v1557, %v1559
  %v1561 = vadd.f32 %v1557, %v1560
  %vm1562 = vweird.f32 %v1351
  %vm1563 = vweird.f32 %v1557
  %vm1564 = vmor %vm1562, %vm1563
  %v1565 = vsel %vm1564, %v1557, %v1561
  %v1566 = vand.u32 2147483647, %v1351
  %vm1567 = vcmp.eq.f32.partialorder %v1566, 8.507059e+37
  %v1568 = vand.u32 %v1351, 2147483648
  %v1569 = vor.u32 1.1754944e-38, %v1568
  %v1570 = vsel %vm1567, %v1569, %v1565
  %v1571 = vmul.f32 1.0, %v1570
  %v1572 = vrcp.pop %v1352
  %v1573 = vmul.f32 %v1352, %v1572
  %v1574 = vsub.f32 1.0, %v1573
  %v1575 = vmul.f32 %v1572, %v1574
  %v1576 = vadd.f32 %v1572, %v1575
  %vm1577 = vweird.f32 %v1352
  %vm1578 = vweird.f32 %v1572
  %vm1579 = vmor %vm1577, %vm1578
  %v1580 = vsel %vm1579, %v1572, %v1576
  %v1581 = vand.u32 2147483647, %v1352
  %vm1582 = vcmp.eq.f32.partialorder %v1581, 8.507059e+37
  %v1583 = vand.u32 %v1352, 2147483648
  %v1584 = vor.u32 1.1754944e-38, %v1583
  %v1585 = vsel %vm1582, %v1584, %v1580
  %v1586 = vmul.f32 1.0, %v1585
  %v1587 = vrcp.pop %v1353
  %v1588 = vmul.f32 %v1353, %v1587
  %v1589 = vsub.f32 1.0, %v1588
  %v1590 = vmul.f32 %v1587, %v1589
  %v1591 = vadd.f32 %v1587, %v1590
  %vm1592 = vweird.f32 %v1353
  %vm1593 = vweird.f32 %v1587
  %vm1594 = vmor %vm1592, %vm1593
  %v1595 = vsel %vm1594, %v1587, %v1591
  %v1596 = vand.u32 2147483647, %v1353
  %vm1597 = vcmp.eq.f32.partialorder %v1596, 8.507059e+37
  %v1598 = vand.u32 %v1353, 2147483648
  %v1599 = vor.u32 1.1754944e-38, %v1598
  %v1600 = vsel %vm1597, %v1599, %v1595
  %v1601 = vmul.f32 1.0, %v1600
  %v1602 = vrcp.pop %v1354
  %v1603 = vmul.f32 %v1354, %v1602
  %v1604 = vsub.f32 1.0, %v1603
  %v1605 = vmul.f32 %v1602, %v1604
  %v1606 = vadd.f32 %v1602, %v1605
  %vm1607 = vweird.f32 %v1354
  %vm1608 = vweird.f32 %v1602
  %vm1609 = vmor %vm1607, %vm1608
  %v1610 = vsel %vm1609, %v1602, %v1606
  %v1611 = vand.u32 2147483647, %v1354
  %vm1612 = vcmp.eq.f32.partialorder %v1611, 8.507059e+37
  %v1613 = vand.u32 %v1354, 2147483648
  %v1614 = vor.u32 1.1754944e-38, %v1613
  %v1615 = vsel %vm1612, %v1614, %v1610
  %v1616 = vmul.f32 1.0, %v1615
  %v1617 = vrcp.pop %v1355
  %v1618 = vmul.f32 %v1355, %v1617
  %v1619 = vsub.f32 1.0, %v1618
  %v1620 = vmul.f32 %v1617, %v1619
  %v1621 = vadd.f32 %v1617, %v1620
  %vm1622 = vweird.f32 %v1355
  %vm1623 = vweird.f32 %v1617
  %vm1624 = vmor %vm1622, %vm1623
  %v1625 = vsel %vm1624, %v1617, %v1621
  %v1626 = vand.u32 2147483647, %v1355
  %vm1627 = vcmp.eq.f32.partialorder %v1626, 8.507059e+37
  %v1628 = vand.u32 %v1355, 2147483648
  %v1629 = vor.u32 1.1754944e-38, %v1628
  %v1630 = vsel %vm1627, %v1629, %v1625
  %v1631 = vmul.f32 1.0, %v1630
  %v1632 = vrcp.pop %v1356
  %v1633 = vmul.f32 %v1356, %v1632
  %v1634 = vsub.f32 1.0, %v1633
  %v1635 = vmul.f32 %v1632, %v1634
  %v1636 = vadd.f32 %v1632, %v1635
  %vm1637 = vweird.f32 %v1356
  %vm1638 = vweird.f32 %v1632
  %vm1639 = vmor %vm1637, %vm1638
  %v1640 = vsel %vm1639, %v1632, %v1636
  %v1641 = vand.u32 2147483647, %v1356
  %vm1642 = vcmp.eq.f32.partialorder %v1641, 8.507059e+37
  %v1643 = vand.u32 %v1356, 2147483648
  %v1644 = vor.u32 1.1754944e-38, %v1643
  %v1645 = vsel %vm1642, %v1644, %v1640
  %v1646 = vmul.f32 1.0, %v1645
  %v1647 = vrcp.pop %v1357
  %v1648 = vmul.f32 %v1357, %v1647
  %v1649 = vsub.f32 1.0, %v1648
  %v1650 = vmul.f32 %v1647, %v1649
  %v1651 = vadd.f32 %v1647, %v1650
  %vm1652 = vweird.f32 %v1357
  %vm1653 = vweird.f32 %v1647
  %vm1654 = vmor %vm1652, %vm1653
  %v1655 = vsel %vm1654, %v1647, %v1651
  %v1656 = vand.u32 2147483647, %v1357
  %vm1657 = vcmp.eq.f32.partialorder %v1656, 8.507059e+37
  %v1658 = vand.u32 %v1357, 2147483648
  %v1659 = vor.u32 1.1754944e-38, %v1658
  %v1660 = vsel %vm1657, %v1659, %v1655
  %v1661 = vmul.f32 1.0, %v1660
  %v1662 = vrcp.pop %v1358
  %v1663 = vmul.f32 %v1358, %v1662
  %v1664 = vsub.f32 1.0, %v1663
  %v1665 = vmul.f32 %v1662, %v1664
  %v1666 = vadd.f32 %v1662, %v1665
  %vm1667 = vweird.f32 %v1358
  %vm1668 = vweird.f32 %v1662
  %vm1669 = vmor %vm1667, %vm1668
  %v1670 = vsel %vm1669, %v1662, %v1666
  %v1671 = vand.u32 2147483647, %v1358
  %vm1672 = vcmp.eq.f32.partialorder %v1671, 8.507059e+37
  %v1673 = vand.u32 %v1358, 2147483648
  %v1674 = vor.u32 1.1754944e-38, %v1673
  %v1675 = vsel %vm1672, %v1674, %v1670
  %v1676 = vmul.f32 1.0, %v1675
  %v1677 = vrcp.pop %v1359
  %v1678 = vmul.f32 %v1359, %v1677
  %v1679 = vsub.f32 1.0, %v1678
  %v1680 = vmul.f32 %v1677, %v1679
  %v1681 = vadd.f32 %v1677, %v1680
  %vm1682 = vweird.f32 %v1359
  %vm1683 = vweird.f32 %v1677
  %vm1684 = vmor %vm1682, %vm1683
  %v1685 = vsel %vm1684, %v1677, %v1681
  %v1686 = vand.u32 2147483647, %v1359
  %vm1687 = vcmp.eq.f32.partialorder %v1686, 8.507059e+37
  %v1688 = vand.u32 %v1359, 2147483648
  %v1689 = vor.u32 1.1754944e-38, %v1688
  %v1690 = vsel %vm1687, %v1689, %v1685
  %v1691 = vmul.f32 1.0, %v1690
  %v1692 = vrcp.pop %v1360
  %v1693 = vmul.f32 %v1360, %v1692
  %v1694 = vsub.f32 1.0, %v1693
  %v1695 = vmul.f32 %v1692, %v1694
  %v1696 = vadd.f32 %v1692, %v1695
  %vm1697 = vweird.f32 %v1360
  %vm1698 = vweird.f32 %v1692
  %vm1699 = vmor %vm1697, %vm1698
  %v1700 = vsel %vm1699, %v1692, %v1696
  %v1701 = vand.u32 2147483647, %v1360
  %vm1702 = vcmp.eq.f32.partialorder %v1701, 8.507059e+37
  %v1703 = vand.u32 %v1360, 2147483648
  %v1704 = vor.u32 1.1754944e-38, %v1703
  %v1705 = vsel %vm1702, %v1704, %v1700
  %v1706 = vmul.f32 1.0, %v1705
  %v1707 = vrcp.pop %v1361
  %v1708 = vmul.f32 %v1361, %v1707
  %v1709 = vsub.f32 1.0, %v1708
  %v1710 = vmul.f32 %v1707, %v1709
  %v1711 = vadd.f32 %v1707, %v1710
  %vm1712 = vweird.f32 %v1361
  %vm1713 = vweird.f32 %v1707
  %vm1714 = vmor %vm1712, %vm1713
  %v1715 = vsel %vm1714, %v1707, %v1711
  %v1716 = vand.u32 2147483647, %v1361
  %vm1717 = vcmp.eq.f32.partialorder %v1716, 8.507059e+37
  %v1718 = vand.u32 %v1361, 2147483648
  %v1719 = vor.u32 1.1754944e-38, %v1718
  %v1720 = vsel %vm1717, %v1719, %v1715
  %v1721 = vmul.f32 1.0, %v1720
  %v1722 = vrcp.pop %v1362
  %v1723 = vmul.f32 %v1362, %v1722
  %v1724 = vsub.f32 1.0, %v1723
  %v1725 = vmul.f32 %v1722, %v1724
  %v1726 = vadd.f32 %v1722, %v1725
  %vm1727 = vweird.f32 %v1362
  %vm1728 = vweird.f32 %v1722
  %vm1729 = vmor %vm1727, %vm1728
  %v1730 = vsel %vm1729, %v1722, %v1726
  %v1731 = vand.u32 2147483647, %v1362
  %vm1732 = vcmp.eq.f32.partialorder %v1731, 8.507059e+37
  %v1733 = vand.u32 %v1362, 2147483648
  %v1734 = vor.u32 1.1754944e-38, %v1733
  %v1735 = vsel %vm1732, %v1734, %v1730
  %v1736 = vmul.f32 1.0, %v1735
  %v1737 = vrcp.pop %v1363
  %v1738 = vmul.f32 %v1363, %v1737
  %v1739 = vsub.f32 1.0, %v1738
  %v1740 = vmul.f32 %v1737, %v1739
  %v1741 = vadd.f32 %v1737, %v1740
  %vm1742 = vweird.f32 %v1363
  %vm1743 = vweird.f32 %v1737
  %vm1744 = vmor %vm1742, %vm1743
  %v1745 = vsel %vm1744, %v1737, %v1741
  %v1746 = vand.u32 2147483647, %v1363
  %vm1747 = vcmp.eq.f32.partialorder %v1746, 8.507059e+37
  %v1748 = vand.u32 %v1363, 2147483648
  %v1749 = vor.u32 1.1754944e-38, %v1748
  %v1750 = vsel %vm1747, %v1749, %v1745
  %v1751 = vmul.f32 1.0, %v1750
  %v1752 = vrcp.pop %v1364
  %v1753 = vmul.f32 %v1364, %v1752
  %v1754 = vsub.f32 1.0, %v1753
  %v1755 = vmul.f32 %v1752, %v1754
  %v1756 = vadd.f32 %v1752, %v1755
  %vm1757 = vweird.f32 %v1364
  %vm1758 = vweird.f32 %v1752
  %vm1759 = vmor %vm1757, %vm1758
  %v1760 = vsel %vm1759, %v1752, %v1756
  %v1761 = vand.u32 2147483647, %v1364
  %vm1762 = vcmp.eq.f32.partialorder %v1761, 8.507059e+37
  %v1763 = vand.u32 %v1364, 2147483648
  %v1764 = vor.u32 1.1754944e-38, %v1763
  %v1765 = vsel %vm1762, %v1764, %v1760
  %v1766 = vmul.f32 1.0, %v1765
  %v1767 = vrcp.pop %v1365
  %v1768 = vmul.f32 %v1365, %v1767
  %v1769 = vsub.f32 1.0, %v1768
  %v1770 = vmul.f32 %v1767, %v1769
  %v1771 = vadd.f32 %v1767, %v1770
  %vm1772 = vweird.f32 %v1365
  %vm1773 = vweird.f32 %v1767
  %vm1774 = vmor %vm1772, %vm1773
  %v1775 = vsel %vm1774, %v1767, %v1771
  %v1776 = vand.u32 2147483647, %v1365
  %vm1777 = vcmp.eq.f32.partialorder %v1776, 8.507059e+37
  %v1778 = vand.u32 %v1365, 2147483648
  %v1779 = vor.u32 1.1754944e-38, %v1778
  %v1780 = vsel %vm1777, %v1779, %v1775
  %v1781 = vmul.f32 1.0, %v1780
  %v1782 = vrcp.pop %v1366
  %v1783 = vmul.f32 %v1366, %v1782
  %v1784 = vsub.f32 1.0, %v1783
  %v1785 = vmul.f32 %v1782, %v1784
  %v1786 = vadd.f32 %v1782, %v1785
  %vm1787 = vweird.f32 %v1366
  %vm1788 = vweird.f32 %v1782
  %vm1789 = vmor %vm1787, %vm1788
  %v1790 = vsel %vm1789, %v1782, %v1786
  %v1791 = vand.u32 2147483647, %v1366
  %vm1792 = vcmp.eq.f32.partialorder %v1791, 8.507059e+37
  %v1793 = vand.u32 %v1366, 2147483648
  %v1794 = vor.u32 1.1754944e-38, %v1793
  %v1795 = vsel %vm1792, %v1794, %v1790
  %v1796 = vmul.f32 1.0, %v1795
  %v1797 = vrcp.pop %v1367
  %v1798 = vmul.f32 %v1367, %v1797
  %v1799 = vsub.f32 1.0, %v1798
  %v1800 = vmul.f32 %v1797, %v1799
  %v1801 = vadd.f32 %v1797, %v1800
  %vm1802 = vweird.f32 %v1367
  %vm1803 = vweird.f32 %v1797
  %vm1804 = vmor %vm1802, %vm1803
  %v1805 = vsel %vm1804, %v1797, %v1801
  %v1806 = vand.u32 2147483647, %v1367
  %vm1807 = vcmp.eq.f32.partialorder %v1806, 8.507059e+37
  %v1808 = vand.u32 %v1367, 2147483648
  %v1809 = vor.u32 1.1754944e-38, %v1808
  %v1810 = vsel %vm1807, %v1809, %v1805
  %v1811 = vmul.f32 1.0, %v1810
  %v1812 = vrcp.pop %v1368
  %v1813 = vmul.f32 %v1368, %v1812
  %v1814 = vsub.f32 1.0, %v1813
  %v1815 = vmul.f32 %v1812, %v1814
  %v1816 = vadd.f32 %v1812, %v1815
  %vm1817 = vweird.f32 %v1368
  %vm1818 = vweird.f32 %v1812
  %vm1819 = vmor %vm1817, %vm1818
  %v1820 = vsel %vm1819, %v1812, %v1816
  %v1821 = vand.u32 2147483647, %v1368
  %vm1822 = vcmp.eq.f32.partialorder %v1821, 8.507059e+37
  %v1823 = vand.u32 %v1368, 2147483648
  %v1824 = vor.u32 1.1754944e-38, %v1823
  %v1825 = vsel %vm1822, %v1824, %v1820
  %v1826 = vmul.f32 1.0, %v1825
  %v1827 = vrcp.pop %v1369
  %v1828 = vmul.f32 %v1369, %v1827
  %v1829 = vsub.f32 1.0, %v1828
  %v1830 = vmul.f32 %v1827, %v1829
  %v1831 = vadd.f32 %v1827, %v1830
  %vm1832 = vweird.f32 %v1369
  %vm1833 = vweird.f32 %v1827
  %vm1834 = vmor %vm1832, %vm1833
  %v1835 = vsel %vm1834, %v1827, %v1831
  %v1836 = vand.u32 2147483647, %v1369
  %vm1837 = vcmp.eq.f32.partialorder %v1836, 8.507059e+37
  %v1838 = vand.u32 %v1369, 2147483648
  %v1839 = vor.u32 1.1754944e-38, %v1838
  %v1840 = vsel %vm1837, %v1839, %v1835
  %v1841 = vmul.f32 1.0, %v1840
  %v1842 = vrcp.pop %v1370
  %v1843 = vmul.f32 %v1370, %v1842
  %v1844 = vsub.f32 1.0, %v1843
  %v1845 = vmul.f32 %v1842, %v1844
  %v1846 = vadd.f32 %v1842, %v1845
  %vm1847 = vweird.f32 %v1370
  %vm1848 = vweird.f32 %v1842
  %vm1849 = vmor %vm1847, %vm1848
  %v1850 = vsel %vm1849, %v1842, %v1846
  %v1851 = vand.u32 2147483647, %v1370
  %vm1852 = vcmp.eq.f32.partialorder %v1851, 8.507059e+37
  %v1853 = vand.u32 %v1370, 2147483648
  %v1854 = vor.u32 1.1754944e-38, %v1853
  %v1855 = vsel %vm1852, %v1854, %v1850
  %v1856 = vmul.f32 1.0, %v1855
  %v1857 = vrcp.pop %v1371
  %v1858 = vmul.f32 %v1371, %v1857
  %v1859 = vsub.f32 1.0, %v1858
  %v1860 = vmul.f32 %v1857, %v1859
  %v1861 = vadd.f32 %v1857, %v1860
  %vm1862 = vweird.f32 %v1371
  %vm1863 = vweird.f32 %v1857
  %vm1864 = vmor %vm1862, %vm1863
  %v1865 = vsel %vm1864, %v1857, %v1861
  %v1866 = vand.u32 2147483647, %v1371
  %vm1867 = vcmp.eq.f32.partialorder %v1866, 8.507059e+37
  %v1868 = vand.u32 %v1371, 2147483648
  %v1869 = vor.u32 1.1754944e-38, %v1868
  %v1870 = vsel %vm1867, %v1869, %v1865
  %v1871 = vmul.f32 1.0, %v1870
  %v1872 = vrcp.pop %v1372
  %v1873 = vmul.f32 %v1372, %v1872
  %v1874 = vsub.f32 1.0, %v1873
  %v1875 = vmul.f32 %v1872, %v1874
  %v1876 = vadd.f32 %v1872, %v1875
  %vm1877 = vweird.f32 %v1372
  %vm1878 = vweird.f32 %v1872
  %vm1879 = vmor %vm1877, %vm1878
  %v1880 = vsel %vm1879, %v1872, %v1876
  %v1881 = vand.u32 2147483647, %v1372
  %vm1882 = vcmp.eq.f32.partialorder %v1881, 8.507059e+37
  %v1883 = vand.u32 %v1372, 2147483648
  %v1884 = vor.u32 1.1754944e-38, %v1883
  %v1885 = vsel %vm1882, %v1884, %v1880
  %v1886 = vmul.f32 1.0, %v1885
  %v1887 = vrcp.pop %v1373
  %v1888 = vmul.f32 %v1373, %v1887
  %v1889 = vsub.f32 1.0, %v1888
  %v1890 = vmul.f32 %v1887, %v1889
  %v1891 = vadd.f32 %v1887, %v1890
  %vm1892 = vweird.f32 %v1373
  %vm1893 = vweird.f32 %v1887
  %vm1894 = vmor %vm1892, %vm1893
  %v1895 = vsel %vm1894, %v1887, %v1891
  %v1896 = vand.u32 2147483647, %v1373
  %vm1897 = vcmp.eq.f32.partialorder %v1896, 8.507059e+37
  %v1898 = vand.u32 %v1373, 2147483648
  %v1899 = vor.u32 1.1754944e-38, %v1898
  %v1900 = vsel %vm1897, %v1899, %v1895
  %v1901 = vmul.f32 1.0, %v1900
  %v1902 = vrcp.pop %v1374
  %v1903 = vmul.f32 %v1374, %v1902
  %v1904 = vsub.f32 1.0, %v1903
  %v1905 = vmul.f32 %v1902, %v1904
  %v1906 = vadd.f32 %v1902, %v1905
  %vm1907 = vweird.f32 %v1374
  %vm1908 = vweird.f32 %v1902
  %vm1909 = vmor %vm1907, %vm1908
  %v1910 = vsel %vm1909, %v1902, %v1906
  %v1911 = vand.u32 2147483647, %v1374
  %vm1912 = vcmp.eq.f32.partialorder %v1911, 8.507059e+37
  %v1913 = vand.u32 %v1374, 2147483648
  %v1914 = vor.u32 1.1754944e-38, %v1913
  %v1915 = vsel %vm1912, %v1914, %v1910
  %v1916 = vmul.f32 1.0, %v1915
  %v1917 = vrcp.pop %v1375
  %v1918 = vmul.f32 %v1375, %v1917
  %v1919 = vsub.f32 1.0, %v1918
  %v1920 = vmul.f32 %v1917, %v1919
  %v1921 = vadd.f32 %v1917, %v1920
  %vm1922 = vweird.f32 %v1375
  %vm1923 = vweird.f32 %v1917
  %vm1924 = vmor %vm1922, %vm1923
  %v1925 = vsel %vm1924, %v1917, %v1921
  %v1926 = vand.u32 2147483647, %v1375
  %vm1927 = vcmp.eq.f32.partialorder %v1926, 8.507059e+37
  %v1928 = vand.u32 %v1375, 2147483648
  %v1929 = vor.u32 1.1754944e-38, %v1928
  %v1930 = vsel %vm1927, %v1929, %v1925
  %v1931 = vmul.f32 1.0, %v1930
  %v1932 = vrcp.pop %v1376
  %v1933 = vmul.f32 %v1376, %v1932
  %v1934 = vsub.f32 1.0, %v1933
  %v1935 = vmul.f32 %v1932, %v1934
  %v1936 = vadd.f32 %v1932, %v1935
  %vm1937 = vweird.f32 %v1376
  %vm1938 = vweird.f32 %v1932
  %vm1939 = vmor %vm1937, %vm1938
  %v1940 = vsel %vm1939, %v1932, %v1936
  %v1941 = vand.u32 2147483647, %v1376
  %vm1942 = vcmp.eq.f32.partialorder %v1941, 8.507059e+37
  %v1943 = vand.u32 %v1376, 2147483648
  %v1944 = vor.u32 1.1754944e-38, %v1943
  %v1945 = vsel %vm1942, %v1944, %v1940
  %v1946 = vmul.f32 1.0, %v1945
  %v1947 = vrcp.pop %v1377
  %v1948 = vmul.f32 %v1377, %v1947
  %v1949 = vsub.f32 1.0, %v1948
  %v1950 = vmul.f32 %v1947, %v1949
  %v1951 = vadd.f32 %v1947, %v1950
  %vm1952 = vweird.f32 %v1377
  %vm1953 = vweird.f32 %v1947
  %vm1954 = vmor %vm1952, %vm1953
  %v1955 = vsel %vm1954, %v1947, %v1951
  %v1956 = vand.u32 2147483647, %v1377
  %vm1957 = vcmp.eq.f32.partialorder %v1956, 8.507059e+37
  %v1958 = vand.u32 %v1377, 2147483648
  %v1959 = vor.u32 1.1754944e-38, %v1958
  %v1960 = vsel %vm1957, %v1959, %v1955
  %v1961 = vmul.f32 1.0, %v1960
  %v1962 = vrcp.pop %v1378
  %v1963 = vmul.f32 %v1378, %v1962
  %v1964 = vsub.f32 1.0, %v1963
  %v1965 = vmul.f32 %v1962, %v1964
  %v1966 = vadd.f32 %v1962, %v1965
  %vm1967 = vweird.f32 %v1378
  %vm1968 = vweird.f32 %v1962
  %vm1969 = vmor %vm1967, %vm1968
  %v1970 = vsel %vm1969, %v1962, %v1966
  %v1971 = vand.u32 2147483647, %v1378
  %vm1972 = vcmp.eq.f32.partialorder %v1971, 8.507059e+37
  %v1973 = vand.u32 %v1378, 2147483648
  %v1974 = vor.u32 1.1754944e-38, %v1973
  %v1975 = vsel %vm1972, %v1974, %v1970
  %v1976 = vmul.f32 1.0, %v1975
  %v1977 = vrcp.pop %v1379
  %v1978 = vmul.f32 %v1379, %v1977
  %v1979 = vsub.f32 1.0, %v1978
  %v1980 = vmul.f32 %v1977, %v1979
  %v1981 = vadd.f32 %v1977, %v1980
  %vm1982 = vweird.f32 %v1379
  %vm1983 = vweird.f32 %v1977
  %vm1984 = vmor %vm1982, %vm1983
  %v1985 = vsel %vm1984, %v1977, %v1981
  %v1986 = vand.u32 2147483647, %v1379
  %vm1987 = vcmp.eq.f32.partialorder %v1986, 8.507059e+37
  %v1988 = vand.u32 %v1379, 2147483648
  %v1989 = vor.u32 1.1754944e-38, %v1988
  %v1990 = vsel %vm1987, %v1989, %v1985
  %v1991 = vmul.f32 1.0, %v1990
  %v1992 = vrcp.pop %v1380
  %v1993 = vmul.f32 %v1380, %v1992
  %v1994 = vsub.f32 1.0, %v1993
  %v1995 = vmul.f32 %v1992, %v1994
  %v1996 = vadd.f32 %v1992, %v1995
  %vm1997 = vweird.f32 %v1380
  %vm1998 = vweird.f32 %v1992
  %vm1999 = vmor %vm1997, %vm1998
  %v2000 = vsel %vm1999, %v1992, %v1996
  %v2001 = vand.u32 2147483647, %v1380
  %vm2002 = vcmp.eq.f32.partialorder %v2001, 8.507059e+37
  %v2003 = vand.u32 %v1380, 2147483648
  %v2004 = vor.u32 1.1754944e-38, %v2003
  %v2005 = vsel %vm2002, %v2004, %v2000
  %v2006 = vmul.f32 1.0, %v2005
  %v2007 = vrcp.pop %v1381
  %v2008 = vmul.f32 %v1381, %v2007
  %v2009 = vsub.f32 1.0, %v2008
  %v2010 = vmul.f32 %v2007, %v2009
  %v2011 = vadd.f32 %v2007, %v2010
  %vm2012 = vweird.f32 %v1381
  %vm2013 = vweird.f32 %v2007
  %vm2014 = vmor %vm2012, %vm2013
  %v2015 = vsel %vm2014, %v2007, %v2011
  %v2016 = vand.u32 2147483647, %v1381
  %vm2017 = vcmp.eq.f32.partialorder %v2016, 8.507059e+37
  %v2018 = vand.u32 %v1381, 2147483648
  %v2019 = vor.u32 1.1754944e-38, %v2018
  %v2020 = vsel %vm2017, %v2019, %v2015
  %v2021 = vmul.f32 1.0, %v2020
  %v2022 = vrcp.pop %v1382
  %v2023 = vmul.f32 %v1382, %v2022
  %v2024 = vsub.f32 1.0, %v2023
  %v2025 = vmul.f32 %v2022, %v2024
  %v2026 = vadd.f32 %v2022, %v2025
  %vm2027 = vweird.f32 %v1382
  %vm2028 = vweird.f32 %v2022
  %vm2029 = vmor %vm2027, %vm2028
  %v2030 = vsel %vm2029, %v2022, %v2026
  %v2031 = vand.u32 2147483647, %v1382
  %vm2032 = vcmp.eq.f32.partialorder %v2031, 8.507059e+37
  %v2033 = vand.u32 %v1382, 2147483648
  %v2034 = vor.u32 1.1754944e-38, %v2033
  %v2035 = vsel %vm2032, %v2034, %v2030
  %v2036 = vmul.f32 1.0, %v2035
  %v2037 = vrcp.pop %v1383
  %v2038 = vmul.f32 %v1383, %v2037
  %v2039 = vsub.f32 1.0, %v2038
  %v2040 = vmul.f32 %v2037, %v2039
  %v2041 = vadd.f32 %v2037, %v2040
  %vm2042 = vweird.f32 %v1383
  %vm2043 = vweird.f32 %v2037
  %vm2044 = vmor %vm2042, %vm2043
  %v2045 = vsel %vm2044, %v2037, %v2041
  %v2046 = vand.u32 2147483647, %v1383
  %vm2047 = vcmp.eq.f32.partialorder %v2046, 8.507059e+37
  %v2048 = vand.u32 %v1383, 2147483648
  %v2049 = vor.u32 1.1754944e-38, %v2048
  %v2050 = vsel %vm2047, %v2049, %v2045
  %v2051 = vmul.f32 1.0, %v2050
  %v2052 = vrcp.pop %v1384
  %v2053 = vmul.f32 %v1384, %v2052
  %v2054 = vsub.f32 1.0, %v2053
  %v2055 = vmul.f32 %v2052, %v2054
  %v2056 = vadd.f32 %v2052, %v2055
  %vm2057 = vweird.f32 %v1384
  %vm2058 = vweird.f32 %v2052
  %vm2059 = vmor %vm2057, %vm2058
  %v2060 = vsel %vm2059, %v2052, %v2056
  %v2061 = vand.u32 2147483647, %v1384
  %vm2062 = vcmp.eq.f32.partialorder %v2061, 8.507059e+37
  %v2063 = vand.u32 %v1384, 2147483648
  %v2064 = vor.u32 1.1754944e-38, %v2063
  %v2065 = vsel %vm2062, %v2064, %v2060
  %v2066 = vmul.f32 1.0, %v2065
  %v2067 = vrcp.pop %v1385
  %v2068 = vmul.f32 %v1385, %v2067
  %v2069 = vsub.f32 1.0, %v2068
  %v2070 = vmul.f32 %v2067, %v2069
  %v2071 = vadd.f32 %v2067, %v2070
  %vm2072 = vweird.f32 %v1385
  %vm2073 = vweird.f32 %v2067
  %vm2074 = vmor %vm2072, %vm2073
  %v2075 = vsel %vm2074, %v2067, %v2071
  %v2076 = vand.u32 2147483647, %v1385
  %vm2077 = vcmp.eq.f32.partialorder %v2076, 8.507059e+37
  %v2078 = vand.u32 %v1385, 2147483648
  %v2079 = vor.u32 1.1754944e-38, %v2078
  %v2080 = vsel %vm2077, %v2079, %v2075
  %v2081 = vmul.f32 1.0, %v2080
  %v2082 = vrcp.pop %v1386
  %v2083 = vmul.f32 %v1386, %v2082
  %v2084 = vsub.f32 1.0, %v2083
  %v2085 = vmul.f32 %v2082, %v2084
  %v2086 = vadd.f32 %v2082, %v2085
  %vm2087 = vweird.f32 %v1386
  %vm2088 = vweird.f32 %v2082
  %vm2089 = vmor %vm2087, %vm2088
  %v2090 = vsel %vm2089, %v2082, %v2086
  %v2091 = vand.u32 2147483647, %v1386
  %vm2092 = vcmp.eq.f32.partialorder %v2091, 8.507059e+37
  %v2093 = vand.u32 %v1386, 2147483648
  %v2094 = vor.u32 1.1754944e-38, %v2093
  %v2095 = vsel %vm2092, %v2094, %v2090
  %v2096 = vmul.f32 1.0, %v2095
  %v2097 = vrcp.pop %v1387
  %v2098 = vmul.f32 %v1387, %v2097
  %v2099 = vsub.f32 1.0, %v2098
  %v2100 = vmul.f32 %v2097, %v2099
  %v2101 = vadd.f32 %v2097, %v2100
  %vm2102 = vweird.f32 %v1387
  %vm2103 = vweird.f32 %v2097
  %vm2104 = vmor %vm2102, %vm2103
  %v2105 = vsel %vm2104, %v2097, %v2101
  %v2106 = vand.u32 2147483647, %v1387
  %vm2107 = vcmp.eq.f32.partialorder %v2106, 8.507059e+37
  %v2108 = vand.u32 %v1387, 2147483648
  %v2109 = vor.u32 1.1754944e-38, %v2108
  %v2110 = vsel %vm2107, %v2109, %v2105
  %v2111 = vmul.f32 1.0, %v2110
  %v2112 = vrcp.pop %v1388
  %v2113 = vmul.f32 %v1388, %v2112
  %v2114 = vsub.f32 1.0, %v2113
  %v2115 = vmul.f32 %v2112, %v2114
  %v2116 = vadd.f32 %v2112, %v2115
  %vm2117 = vweird.f32 %v1388
  %vm2118 = vweird.f32 %v2112
  %vm2119 = vmor %vm2117, %vm2118
  %v2120 = vsel %vm2119, %v2112, %v2116
  %v2121 = vand.u32 2147483647, %v1388
  %vm2122 = vcmp.eq.f32.partialorder %v2121, 8.507059e+37
  %v2123 = vand.u32 %v1388, 2147483648
  %v2124 = vor.u32 1.1754944e-38, %v2123
  %v2125 = vsel %vm2122, %v2124, %v2120
  %v2126 = vmul.f32 1.0, %v2125
  %v2127 = vrcp.pop %v1389
  %v2128 = vmul.f32 %v1389, %v2127
  %v2129 = vsub.f32 1.0, %v2128
  %v2130 = vmul.f32 %v2127, %v2129
  %v2131 = vadd.f32 %v2127, %v2130
  %vm2132 = vweird.f32 %v1389
  %vm2133 = vweird.f32 %v2127
  %vm2134 = vmor %vm2132, %vm2133
  %v2135 = vsel %vm2134, %v2127, %v2131
  %v2136 = vand.u32 2147483647, %v1389
  %vm2137 = vcmp.eq.f32.partialorder %v2136, 8.507059e+37
  %v2138 = vand.u32 %v1389, 2147483648
  %v2139 = vor.u32 1.1754944e-38, %v2138
  %v2140 = vsel %vm2137, %v2139, %v2135
  %v2141 = vmul.f32 1.0, %v2140
  %v2142 = vrcp.pop %v1390
  %v2143 = vmul.f32 %v1390, %v2142
  %v2144 = vsub.f32 1.0, %v2143
  %v2145 = vmul.f32 %v2142, %v2144
  %v2146 = vadd.f32 %v2142, %v2145
  %vm2147 = vweird.f32 %v1390
  %vm2148 = vweird.f32 %v2142
  %vm2149 = vmor %vm2147, %vm2148
  %v2150 = vsel %vm2149, %v2142, %v2146
  %v2151 = vand.u32 2147483647, %v1390
  %vm2152 = vcmp.eq.f32.partialorder %v2151, 8.507059e+37
  %v2153 = vand.u32 %v1390, 2147483648
  %v2154 = vor.u32 1.1754944e-38, %v2153
  %v2155 = vsel %vm2152, %v2154, %v2150
  %v2156 = vmul.f32 1.0, %v2155
  %v2157 = vrcp.pop %v1391
  %v2158 = vmul.f32 %v1391, %v2157
  %v2159 = vsub.f32 1.0, %v2158
  %v2160 = vmul.f32 %v2157, %v2159
  %v2161 = vadd.f32 %v2157, %v2160
  %vm2162 = vweird.f32 %v1391
  %vm2163 = vweird.f32 %v2157
  %vm2164 = vmor %vm2162, %vm2163
  %v2165 = vsel %vm2164, %v2157, %v2161
  %v2166 = vand.u32 2147483647, %v1391
  %vm2167 = vcmp.eq.f32.partialorder %v2166, 8.507059e+37
  %v2168 = vand.u32 %v1391, 2147483648
  %v2169 = vor.u32 1.1754944e-38, %v2168
  %v2170 = vsel %vm2167, %v2169, %v2165
  %v2171 = vmul.f32 1.0, %v2170
  %v2172 = vrcp.pop %v1392
  %v2173 = vmul.f32 %v1392, %v2172
  %v2174 = vsub.f32 1.0, %v2173
  %v2175 = vmul.f32 %v2172, %v2174
  %v2176 = vadd.f32 %v2172, %v2175
  %vm2177 = vweird.f32 %v1392
  %vm2178 = vweird.f32 %v2172
  %vm2179 = vmor %vm2177, %vm2178
  %v2180 = vsel %vm2179, %v2172, %v2176
  %v2181 = vand.u32 2147483647, %v1392
  %vm2182 = vcmp.eq.f32.partialorder %v2181, 8.507059e+37
  %v2183 = vand.u32 %v1392, 2147483648
  %v2184 = vor.u32 1.1754944e-38, %v2183
  %v2185 = vsel %vm2182, %v2184, %v2180
  %v2186 = vmul.f32 1.0, %v2185
  %v2187 = vrcp.pop %v1393
  %v2188 = vmul.f32 %v1393, %v2187
  %v2189 = vsub.f32 1.0, %v2188
  %v2190 = vmul.f32 %v2187, %v2189
  %v2191 = vadd.f32 %v2187, %v2190
  %vm2192 = vweird.f32 %v1393
  %vm2193 = vweird.f32 %v2187
  %vm2194 = vmor %vm2192, %vm2193
  %v2195 = vsel %vm2194, %v2187, %v2191
  %v2196 = vand.u32 2147483647, %v1393
  %vm2197 = vcmp.eq.f32.partialorder %v2196, 8.507059e+37
  %v2198 = vand.u32 %v1393, 2147483648
  %v2199 = vor.u32 1.1754944e-38, %v2198
  %v2200 = vsel %vm2197, %v2199, %v2195
  %v2201 = vmul.f32 1.0, %v2200
  %v2202 = vrcp.pop %v1394
  %v2203 = vmul.f32 %v1394, %v2202
  %v2204 = vsub.f32 1.0, %v2203
  %v2205 = vmul.f32 %v2202, %v2204
  %v2206 = vadd.f32 %v2202, %v2205
  %vm2207 = vweird.f32 %v1394
  %vm2208 = vweird.f32 %v2202
  %vm2209 = vmor %vm2207, %vm2208
  %v2210 = vsel %vm2209, %v2202, %v2206
  %v2211 = vand.u32 2147483647, %v1394
  %vm2212 = vcmp.eq.f32.partialorder %v2211, 8.507059e+37
  %v2213 = vand.u32 %v1394, 2147483648
  %v2214 = vor.u32 1.1754944e-38, %v2213
  %v2215 = vsel %vm2212, %v2214, %v2210
  %v2216 = vmul.f32 1.0, %v2215
  %v2217 = vrcp.pop %v1395
  %v2218 = vmul.f32 %v1395, %v2217
  %v2219 = vsub.f32 1.0, %v2218
  %v2220 = vmul.f32 %v2217, %v2219
  %v2221 = vadd.f32 %v2217, %v2220
  %vm2222 = vweird.f32 %v1395
  %vm2223 = vweird.f32 %v2217
  %vm2224 = vmor %vm2222, %vm2223
  %v2225 = vsel %vm2224, %v2217, %v2221
  %v2226 = vand.u32 2147483647, %v1395
  %vm2227 = vcmp.eq.f32.partialorder %v2226, 8.507059e+37
  %v2228 = vand.u32 %v1395, 2147483648
  %v2229 = vor.u32 1.1754944e-38, %v2228
  %v2230 = vsel %vm2227, %v2229, %v2225
  %v2231 = vmul.f32 1.0, %v2230
  %v2232 = vrcp.pop %v1396
  %v2233 = vmul.f32 %v1396, %v2232
  %v2234 = vsub.f32 1.0, %v2233
  %v2235 = vmul.f32 %v2232, %v2234
  %v2236 = vadd.f32 %v2232, %v2235
  %vm2237 = vweird.f32 %v1396
  %vm2238 = vweird.f32 %v2232
  %vm2239 = vmor %vm2237, %vm2238
  %v2240 = vsel %vm2239, %v2232, %v2236
  %v2241 = vand.u32 2147483647, %v1396
  %vm2242 = vcmp.eq.f32.partialorder %v2241, 8.507059e+37
  %v2243 = vand.u32 %v1396, 2147483648
  %v2244 = vor.u32 1.1754944e-38, %v2243
  %v2245 = vsel %vm2242, %v2244, %v2240
  %v2246 = vmul.f32 1.0, %v2245
  %v2247 = vrcp.pop %v1397
  %v2248 = vmul.f32 %v1397, %v2247
  %v2249 = vsub.f32 1.0, %v2248
  %v2250 = vmul.f32 %v2247, %v2249
  %v2251 = vadd.f32 %v2247, %v2250
  %vm2252 = vweird.f32 %v1397
  %vm2253 = vweird.f32 %v2247
  %vm2254 = vmor %vm2252, %vm2253
  %v2255 = vsel %vm2254, %v2247, %v2251
  %v2256 = vand.u32 2147483647, %v1397
  %vm2257 = vcmp.eq.f32.partialorder %v2256, 8.507059e+37
  %v2258 = vand.u32 %v1397, 2147483648
  %v2259 = vor.u32 1.1754944e-38, %v2258
  %v2260 = vsel %vm2257, %v2259, %v2255
  %v2261 = vmul.f32 1.0, %v2260
  %v2262 = vrcp.pop %v1398
  %v2263 = vmul.f32 %v1398, %v2262
  %v2264 = vsub.f32 1.0, %v2263
  %v2265 = vmul.f32 %v2262, %v2264
  %v2266 = vadd.f32 %v2262, %v2265
  %vm2267 = vweird.f32 %v1398
  %vm2268 = vweird.f32 %v2262
  %vm2269 = vmor %vm2267, %vm2268
  %v2270 = vsel %vm2269, %v2262, %v2266
  %v2271 = vand.u32 2147483647, %v1398
  %vm2272 = vcmp.eq.f32.partialorder %v2271, 8.507059e+37
  %v2273 = vand.u32 %v1398, 2147483648
  %v2274 = vor.u32 1.1754944e-38, %v2273
  %v2275 = vsel %vm2272, %v2274, %v2270
  %v2276 = vmul.f32 1.0, %v2275
  %v2277 = vrcp.pop %v1399
  %v2278 = vmul.f32 %v1399, %v2277
  %v2279 = vsub.f32 1.0, %v2278
  %v2280 = vmul.f32 %v2277, %v2279
  %v2281 = vadd.f32 %v2277, %v2280
  %vm2282 = vweird.f32 %v1399
  %vm2283 = vweird.f32 %v2277
  %vm2284 = vmor %vm2282, %vm2283
  %v2285 = vsel %vm2284, %v2277, %v2281
  %v2286 = vand.u32 2147483647, %v1399
  %vm2287 = vcmp.eq.f32.partialorder %v2286, 8.507059e+37
  %v2288 = vand.u32 %v1399, 2147483648
  %v2289 = vor.u32 1.1754944e-38, %v2288
  %v2290 = vsel %vm2287, %v2289, %v2285
  %v2291 = vmul.f32 1.0, %v2290
  %v2292 = vrcp.pop %v1400
  %v2293 = vmul.f32 %v1400, %v2292
  %v2294 = vsub.f32 1.0, %v2293
  %v2295 = vmul.f32 %v2292, %v2294
  %v2296 = vadd.f32 %v2292, %v2295
  %vm2297 = vweird.f32 %v1400
  %vm2298 = vweird.f32 %v2292
  %vm2299 = vmor %vm2297, %vm2298
  %v2300 = vsel %vm2299, %v2292, %v2296
  %v2301 = vand.u32 2147483647, %v1400
  %vm2302 = vcmp.eq.f32.partialorder %v2301, 8.507059e+37
  %v2303 = vand.u32 %v1400, 2147483648
  %v2304 = vor.u32 1.1754944e-38, %v2303
  %v2305 = vsel %vm2302, %v2304, %v2300
  %v2306 = vmul.f32 1.0, %v2305
  %v2307 = vrcp.pop %v1401
  %v2308 = vmul.f32 %v1401, %v2307
  %v2309 = vsub.f32 1.0, %v2308
  %v2310 = vmul.f32 %v2307, %v2309
  %v2311 = vadd.f32 %v2307, %v2310
  %vm2312 = vweird.f32 %v1401
  %vm2313 = vweird.f32 %v2307
  %vm2314 = vmor %vm2312, %vm2313
  %v2315 = vsel %vm2314, %v2307, %v2311
  %v2316 = vand.u32 2147483647, %v1401
  %vm2317 = vcmp.eq.f32.partialorder %v2316, 8.507059e+37
  %v2318 = vand.u32 %v1401, 2147483648
  %v2319 = vor.u32 1.1754944e-38, %v2318
  %v2320 = vsel %vm2317, %v2319, %v2315
  %v2321 = vmul.f32 1.0, %v2320
  %v2322 = vrcp.pop %v1402
  %v2323 = vmul.f32 %v1402, %v2322
  %v2324 = vsub.f32 1.0, %v2323
  %v2325 = vmul.f32 %v2322, %v2324
  %v2326 = vadd.f32 %v2322, %v2325
  %vm2327 = vweird.f32 %v1402
  %vm2328 = vweird.f32 %v2322
  %vm2329 = vmor %vm2327, %vm2328
  %v2330 = vsel %vm2329, %v2322, %v2326
  %v2331 = vand.u32 2147483647, %v1402
  %vm2332 = vcmp.eq.f32.partialorder %v2331, 8.507059e+37
  %v2333 = vand.u32 %v1402, 2147483648
  %v2334 = vor.u32 1.1754944e-38, %v2333
  %v2335 = vsel %vm2332, %v2334, %v2330
  %v2336 = vmul.f32 1.0, %v2335
  %v2337 = vrcp.pop %v1403
  %v2338 = vmul.f32 %v1403, %v2337
  %v2339 = vsub.f32 1.0, %v2338
  %v2340 = vmul.f32 %v2337, %v2339
  %v2341 = vadd.f32 %v2337, %v2340
  %vm2342 = vweird.f32 %v1403
  %vm2343 = vweird.f32 %v2337
  %vm2344 = vmor %vm2342, %vm2343
  %v2345 = vsel %vm2344, %v2337, %v2341
  %v2346 = vand.u32 2147483647, %v1403
  %vm2347 = vcmp.eq.f32.partialorder %v2346, 8.507059e+37
  %v2348 = vand.u32 %v1403, 2147483648
  %v2349 = vor.u32 1.1754944e-38, %v2348
  %v2350 = vsel %vm2347, %v2349, %v2345
  %v2351 = vmul.f32 1.0, %v2350
  %v2352 = vrcp.pop %v1404
  %v2353 = vmul.f32 %v1404, %v2352
  %v2354 = vsub.f32 1.0, %v2353
  %v2355 = vmul.f32 %v2352, %v2354
  %v2356 = vadd.f32 %v2352, %v2355
  %vm2357 = vweird.f32 %v1404
  %vm2358 = vweird.f32 %v2352
  %vm2359 = vmor %vm2357, %vm2358
  %v2360 = vsel %vm2359, %v2352, %v2356
  %v2361 = vand.u32 2147483647, %v1404
  %vm2362 = vcmp.eq.f32.partialorder %v2361, 8.507059e+37
  %v2363 = vand.u32 %v1404, 2147483648
  %v2364 = vor.u32 1.1754944e-38, %v2363
  %v2365 = vsel %vm2362, %v2364, %v2360
  %v2366 = vmul.f32 1.0, %v2365
  %v2367 = vrcp.pop %v1405
  %v2368 = vmul.f32 %v1405, %v2367
  %v2369 = vsub.f32 1.0, %v2368
  %v2370 = vmul.f32 %v2367, %v2369
  %v2371 = vadd.f32 %v2367, %v2370
  %vm2372 = vweird.f32 %v1405
  %vm2373 = vweird.f32 %v2367
  %vm2374 = vmor %vm2372, %vm2373
  %v2375 = vsel %vm2374, %v2367, %v2371
  %v2376 = vand.u32 2147483647, %v1405
  %vm2377 = vcmp.eq.f32.partialorder %v2376, 8.507059e+37
  %v2378 = vand.u32 %v1405, 2147483648
  %v2379 = vor.u32 1.1754944e-38, %v2378
  %v2380 = vsel %vm2377, %v2379, %v2375
  %v2381 = vmul.f32 1.0, %v2380
  %v2382 = vrcp.pop %v1406
  %v2383 = vmul.f32 %v1406, %v2382
  %v2384 = vsub.f32 1.0, %v2383
  %v2385 = vmul.f32 %v2382, %v2384
  %v2386 = vadd.f32 %v2382, %v2385
  %vm2387 = vweird.f32 %v1406
  %vm2388 = vweird.f32 %v2382
  %vm2389 = vmor %vm2387, %vm2388
  %v2390 = vsel %vm2389, %v2382, %v2386
  %v2391 = vand.u32 2147483647, %v1406
  %vm2392 = vcmp.eq.f32.partialorder %v2391, 8.507059e+37
  %v2393 = vand.u32 %v1406, 2147483648
  %v2394 = vor.u32 1.1754944e-38, %v2393
  %v2395 = vsel %vm2392, %v2394, %v2390
  %v2396 = vmul.f32 1.0, %v2395
  %v2397 = vrcp.pop %v1407
  %v2398 = vmul.f32 %v1407, %v2397
  %v2399 = vsub.f32 1.0, %v2398
  %v2400 = vmul.f32 %v2397, %v2399
  %v2401 = vadd.f32 %v2397, %v2400
  %vm2402 = vweird.f32 %v1407
  %vm2403 = vweird.f32 %v2397
  %vm2404 = vmor %vm2402, %vm2403
  %v2405 = vsel %vm2404, %v2397, %v2401
  %v2406 = vand.u32 2147483647, %v1407
  %vm2407 = vcmp.eq.f32.partialorder %v2406, 8.507059e+37
  %v2408 = vand.u32 %v1407, 2147483648
  %v2409 = vor.u32 1.1754944e-38, %v2408
  %v2410 = vsel %vm2407, %v2409, %v2405
  %v2411 = vmul.f32 1.0, %v2410
  %v2412 = vrcp.pop %v1408
  %v2413 = vmul.f32 %v1408, %v2412
  %v2414 = vsub.f32 1.0, %v2413
  %v2415 = vmul.f32 %v2412, %v2414
  %v2416 = vadd.f32 %v2412, %v2415
  %vm2417 = vweird.f32 %v1408
  %vm2418 = vweird.f32 %v2412
  %vm2419 = vmor %vm2417, %vm2418
  %v2420 = vsel %vm2419, %v2412, %v2416
  %v2421 = vand.u32 2147483647, %v1408
  %vm2422 = vcmp.eq.f32.partialorder %v2421, 8.507059e+37
  %v2423 = vand.u32 %v1408, 2147483648
  %v2424 = vor.u32 1.1754944e-38, %v2423
  %v2425 = vsel %vm2422, %v2424, %v2420
  %v2426 = vmul.f32 1.0, %v2425
  %v2427 = vrcp.pop %v1409
  %v2428 = vmul.f32 %v1409, %v2427
  %v2429 = vsub.f32 1.0, %v2428
  %v2430 = vmul.f32 %v2427, %v2429
  %v2431 = vadd.f32 %v2427, %v2430
  %vm2432 = vweird.f32 %v1409
  %vm2433 = vweird.f32 %v2427
  %vm2434 = vmor %vm2432, %vm2433
  %v2435 = vsel %vm2434, %v2427, %v2431
  %v2436 = vand.u32 2147483647, %v1409
  %vm2437 = vcmp.eq.f32.partialorder %v2436, 8.507059e+37
  %v2438 = vand.u32 %v1409, 2147483648
  %v2439 = vor.u32 1.1754944e-38, %v2438
  %v2440 = vsel %vm2437, %v2439, %v2435
  %v2441 = vmul.f32 1.0, %v2440
  %v2442 = vrcp.pop %v1410
  %v2443 = vmul.f32 %v1410, %v2442
  %v2444 = vsub.f32 1.0, %v2443
  %v2445 = vmul.f32 %v2442, %v2444
  %v2446 = vadd.f32 %v2442, %v2445
  %vm2447 = vweird.f32 %v1410
  %vm2448 = vweird.f32 %v2442
  %vm2449 = vmor %vm2447, %vm2448
  %v2450 = vsel %vm2449, %v2442, %v2446
  %v2451 = vand.u32 2147483647, %v1410
  %vm2452 = vcmp.eq.f32.partialorder %v2451, 8.507059e+37
  %v2453 = vand.u32 %v1410, 2147483648
  %v2454 = vor.u32 1.1754944e-38, %v2453
  %v2455 = vsel %vm2452, %v2454, %v2450
  %v2456 = vmul.f32 1.0, %v2455
  %v2457 = vrcp.pop %v1411
  %v2458 = vmul.f32 %v1411, %v2457
  %v2459 = vsub.f32 1.0, %v2458
  %v2460 = vmul.f32 %v2457, %v2459
  %v2461 = vadd.f32 %v2457, %v2460
  %vm2462 = vweird.f32 %v1411
  %vm2463 = vweird.f32 %v2457
  %vm2464 = vmor %vm2462, %vm2463
  %v2465 = vsel %vm2464, %v2457, %v2461
  %v2466 = vand.u32 2147483647, %v1411
  %vm2467 = vcmp.eq.f32.partialorder %v2466, 8.507059e+37
  %v2468 = vand.u32 %v1411, 2147483648
  %v2469 = vor.u32 1.1754944e-38, %v2468
  %v2470 = vsel %vm2467, %v2469, %v2465
  %v2471 = vmul.f32 1.0, %v2470
  %v2472 = vrcp.pop %v1412
  %v2473 = vmul.f32 %v1412, %v2472
  %v2474 = vsub.f32 1.0, %v2473
  %v2475 = vmul.f32 %v2472, %v2474
  %v2476 = vadd.f32 %v2472, %v2475
  %vm2477 = vweird.f32 %v1412
  %vm2478 = vweird.f32 %v2472
  %vm2479 = vmor %vm2477, %vm2478
  %v2480 = vsel %vm2479, %v2472, %v2476
  %v2481 = vand.u32 2147483647, %v1412
  %vm2482 = vcmp.eq.f32.partialorder %v2481, 8.507059e+37
  %v2483 = vand.u32 %v1412, 2147483648
  %v2484 = vor.u32 1.1754944e-38, %v2483
  %v2485 = vsel %vm2482, %v2484, %v2480
  %v2486 = vmul.f32 1.0, %v2485
  %v2487 = vrcp.pop %v1413
  %v2488 = vmul.f32 %v1413, %v2487
  %v2489 = vsub.f32 1.0, %v2488
  %v2490 = vmul.f32 %v2487, %v2489
  %v2491 = vadd.f32 %v2487, %v2490
  %vm2492 = vweird.f32 %v1413
  %vm2493 = vweird.f32 %v2487
  %vm2494 = vmor %vm2492, %vm2493
  %v2495 = vsel %vm2494, %v2487, %v2491
  %v2496 = vand.u32 2147483647, %v1413
  %vm2497 = vcmp.eq.f32.partialorder %v2496, 8.507059e+37
  %v2498 = vand.u32 %v1413, 2147483648
  %v2499 = vor.u32 1.1754944e-38, %v2498
  %v2500 = vsel %vm2497, %v2499, %v2495
  %v2501 = vmul.f32 1.0, %v2500
  %v2502 = vrcp.pop %v1414
  %v2503 = vmul.f32 %v1414, %v2502
  %v2504 = vsub.f32 1.0, %v2503
  %v2505 = vmul.f32 %v2502, %v2504
  %v2506 = vadd.f32 %v2502, %v2505
  %vm2507 = vweird.f32 %v1414
  %vm2508 = vweird.f32 %v2502
  %vm2509 = vmor %vm2507, %vm2508
  %v2510 = vsel %vm2509, %v2502, %v2506
  %v2511 = vand.u32 2147483647, %v1414
  %vm2512 = vcmp.eq.f32.partialorder %v2511, 8.507059e+37
  %v2513 = vand.u32 %v1414, 2147483648
  %v2514 = vor.u32 1.1754944e-38, %v2513
  %v2515 = vsel %vm2512, %v2514, %v2510
  %v2516 = vmul.f32 1.0, %v2515
  %v2517 = vrcp.pop %v1415
  %v2518 = vmul.f32 %v1415, %v2517
  %v2519 = vsub.f32 1.0, %v2518
  %v2520 = vmul.f32 %v2517, %v2519
  %v2521 = vadd.f32 %v2517, %v2520
  %vm2522 = vweird.f32 %v1415
  %vm2523 = vweird.f32 %v2517
  %vm2524 = vmor %vm2522, %vm2523
  %v2525 = vsel %vm2524, %v2517, %v2521
  %v2526 = vand.u32 2147483647, %v1415
  %vm2527 = vcmp.eq.f32.partialorder %v2526, 8.507059e+37
  %v2528 = vand.u32 %v1415, 2147483648
  %v2529 = vor.u32 1.1754944e-38, %v2528
  %v2530 = vsel %vm2527, %v2529, %v2525
  %v2531 = vmul.f32 1.0, %v2530
  %v2532 = vrcp.pop %v1416
  %v2533 = vmul.f32 %v1416, %v2532
  %v2534 = vsub.f32 1.0, %v2533
  %v2535 = vmul.f32 %v2532, %v2534
  %v2536 = vadd.f32 %v2532, %v2535
  %vm2537 = vweird.f32 %v1416
  %vm2538 = vweird.f32 %v2532
  %vm2539 = vmor %vm2537, %vm2538
  %v2540 = vsel %vm2539, %v2532, %v2536
  %v2541 = vand.u32 2147483647, %v1416
  %vm2542 = vcmp.eq.f32.partialorder %v2541, 8.507059e+37
  %v2543 = vand.u32 %v1416, 2147483648
  %v2544 = vor.u32 1.1754944e-38, %v2543
  %v2545 = vsel %vm2542, %v2544, %v2540
  %v2546 = vmul.f32 1.0, %v2545
  %v2547 = vrcp.pop %v1417
  %v2548 = vmul.f32 %v1417, %v2547
  %v2549 = vsub.f32 1.0, %v2548
  %v2550 = vmul.f32 %v2547, %v2549
  %v2551 = vadd.f32 %v2547, %v2550
  %vm2552 = vweird.f32 %v1417
  %vm2553 = vweird.f32 %v2547
  %vm2554 = vmor %vm2552, %vm2553
  %v2555 = vsel %vm2554, %v2547, %v2551
  %v2556 = vand.u32 2147483647, %v1417
  %vm2557 = vcmp.eq.f32.partialorder %v2556, 8.507059e+37
  %v2558 = vand.u32 %v1417, 2147483648
  %v2559 = vor.u32 1.1754944e-38, %v2558
  %v2560 = vsel %vm2557, %v2559, %v2555
  %v2561 = vmul.f32 1.0, %v2560
  %v2562 = vrcp.pop %v1418
  %v2563 = vmul.f32 %v1418, %v2562
  %v2564 = vsub.f32 1.0, %v2563
  %v2565 = vmul.f32 %v2562, %v2564
  %v2566 = vadd.f32 %v2562, %v2565
  %vm2567 = vweird.f32 %v1418
  %vm2568 = vweird.f32 %v2562
  %vm2569 = vmor %vm2567, %vm2568
  %v2570 = vsel %vm2569, %v2562, %v2566
  %v2571 = vand.u32 2147483647, %v1418
  %vm2572 = vcmp.eq.f32.partialorder %v2571, 8.507059e+37
  %v2573 = vand.u32 %v1418, 2147483648
  %v2574 = vor.u32 1.1754944e-38, %v2573
  %v2575 = vsel %vm2572, %v2574, %v2570
  %v2576 = vmul.f32 1.0, %v2575
  %v2577 = vrcp.pop %v1419
  %v2578 = vmul.f32 %v1419, %v2577
  %v2579 = vsub.f32 1.0, %v2578
  %v2580 = vmul.f32 %v2577, %v2579
  %v2581 = vadd.f32 %v2577, %v2580
  %vm2582 = vweird.f32 %v1419
  %vm2583 = vweird.f32 %v2577
  %vm2584 = vmor %vm2582, %vm2583
  %v2585 = vsel %vm2584, %v2577, %v2581
  %v2586 = vand.u32 2147483647, %v1419
  %vm2587 = vcmp.eq.f32.partialorder %v2586, 8.507059e+37
  %v2588 = vand.u32 %v1419, 2147483648
  %v2589 = vor.u32 1.1754944e-38, %v2588
  %v2590 = vsel %vm2587, %v2589, %v2585
  %v2591 = vmul.f32 1.0, %v2590
  %v2592 = vrcp.pop %v1420
  %v2593 = vmul.f32 %v1420, %v2592
  %v2594 = vsub.f32 1.0, %v2593
  %v2595 = vmul.f32 %v2592, %v2594
  %v2596 = vadd.f32 %v2592, %v2595
  %vm2597 = vweird.f32 %v1420
  %vm2598 = vweird.f32 %v2592
  %vm2599 = vmor %vm2597, %vm2598
  %v2600 = vsel %vm2599, %v2592, %v2596
  %v2601 = vand.u32 2147483647, %v1420
  %vm2602 = vcmp.eq.f32.partialorder %v2601, 8.507059e+37
  %v2603 = vand.u32 %v1420, 2147483648
  %v2604 = vor.u32 1.1754944e-38, %v2603
  %v2605 = vsel %vm2602, %v2604, %v2600
  %v2606 = vmul.f32 1.0, %v2605
  %v2607 = vrcp.pop %v1421
  %v2608 = vmul.f32 %v1421, %v2607
  %v2609 = vsub.f32 1.0, %v2608
  %v2610 = vmul.f32 %v2607, %v2609
  %v2611 = vadd.f32 %v2607, %v2610
  %vm2612 = vweird.f32 %v1421
  %vm2613 = vweird.f32 %v2607
  %vm2614 = vmor %vm2612, %vm2613
  %v2615 = vsel %vm2614, %v2607, %v2611
  %v2616 = vand.u32 2147483647, %v1421
  %vm2617 = vcmp.eq.f32.partialorder %v2616, 8.507059e+37
  %v2618 = vand.u32 %v1421, 2147483648
  %v2619 = vor.u32 1.1754944e-38, %v2618
  %v2620 = vsel %vm2617, %v2619, %v2615
  %v2621 = vmul.f32 1.0, %v2620
  %v2622 = vmul.f32 %v1022, %v1436
  %v2623 = vmul.f32 %v1023, %v1451
  %v2624 = vmul.f32 %v1024, %v1466
  %v2625 = vmul.f32 %v1025, %v1481
  %v2626 = vmul.f32 %v1026, %v1496
  %v2627 = vmul.f32 %v1027, %v1511
  %v2628 = vmul.f32 %v1028, %v1526
  %v2629 = vmul.f32 %v1029, %v1541
  %v2630 = vmul.f32 %v1030, %v1556
  %v2631 = vmul.f32 %v1031, %v1571
  %v2632 = vmul.f32 %v1032, %v1586
  %v2633 = vmul.f32 %v1033, %v1601
  %v2634 = vmul.f32 %v1034, %v1616
  %v2635 = vmul.f32 %v1035, %v1631
  %v2636 = vmul.f32 %v1036, %v1646
  %v2637 = vmul.f32 %v1037, %v1661
  %v2638 = vmul.f32 %v1038, %v1676
  %v2639 = vmul.f32 %v1039, %v1691
  %v2640 = vmul.f32 %v1040, %v1706
  %v2641 = vmul.f32 %v1041, %v1721
  %v2642 = vmul.f32 %v1042, %v1736
  %v2643 = vmul.f32 %v1043, %v1751
  %v2644 = vmul.f32 %v1044, %v1766
  %v2645 = vmul.f32 %v1045, %v1781
  %v2646 = vmul.f32 %v1046, %v1796
  %v2647 = vmul.f32 %v1047, %v1811
  %v2648 = vmul.f32 %v1048, %v1826
  %v2649 = vmul.f32 %v1049, %v1841
  %v2650 = vmul.f32 %v1050, %v1856
  %v2651 = vmul.f32 %v1051, %v1871
  %v2652 = vmul.f32 %v1052, %v1886
  %v2653 = vmul.f32 %v1053, %v1901
  %v2654 = vmul.f32 %v1054, %v1916
  %v2655 = vmul.f32 %v1055, %v1931
  %v2656 = vmul.f32 %v1056, %v1946
  %v2657 = vmul.f32 %v1057, %v1961
  %v2658 = vmul.f32 %v1058, %v1976
  %v2659 = vmul.f32 %v1059, %v1991
  %v2660 = vmul.f32 %v1060, %v2006
  %v2661 = vmul.f32 %v1061, %v2021
  %v2662 = vmul.f32 %v1062, %v2036
  %v2663 = vmul.f32 %v1063, %v2051
  %v2664 = vmul.f32 %v1064, %v2066
  %v2665 = vmul.f32 %v1065, %v2081
  %v2666 = vmul.f32 %v1066, %v2096
  %v2667 = vmul.f32 %v1067, %v2111
  %v2668 = vmul.f32 %v1068, %v2126
  %v2669 = vmul.f32 %v1069, %v2141
  %v2670 = vmul.f32 %v1070, %v2156
  %v2671 = vmul.f32 %v1071, %v2171
  %v2672 = vmul.f32 %v1072, %v2186
  %v2673 = vmul.f32 %v1073, %v2201
  %v2674 = vmul.f32 %v1074, %v2216
  %v2675 = vmul.f32 %v1075, %v2231
  %v2676 = vmul.f32 %v1076, %v2246
  %v2677 = vmul.f32 %v1077, %v2261
  %v2678 = vmul.f32 %v1078, %v2276
  %v2679 = vmul.f32 %v1079, %v2291
  %v2680 = vmul.f32 %v1080, %v2306
  %v2681 = vmul.f32 %v1081, %v2321
  %v2682 = vmul.f32 %v1082, %v2336
  %v2683 = vmul.f32 %v1083, %v2351
  %v2684 = vmul.f32 %v1084, %v2366
  %v2685 = vmul.f32 %v1085, %v2381
  %v2686 = vmul.f32 %v1086, %v2396
  %v2687 = vmul.f32 %v1087, %v2411
  %v2688 = vmul.f32 %v1088, %v2426
  %v2689 = vmul.f32 %v1089, %v2441
  %v2690 = vmul.f32 %v1090, %v2456
  %v2691 = vmul.f32 %v1091, %v2471
  %v2692 = vmul.f32 %v1092, %v2486
  %v2693 = vmul.f32 %v1093, %v2501
  %v2694 = vmul.f32 %v1094, %v2516
  %v2695 = vmul.f32 %v1095, %v2531
  %v2696 = vmul.f32 %v1096, %v2546
  %v2697 = vmul.f32 %v1097, %v2561
  %v2698 = vmul.f32 %v1098, %v2576
  %v2699 = vmul.f32 %v1099, %v2591
  %v2700 = vmul.f32 %v1100, %v2606
  %v2701 = vmul.f32 %v1101, %v2621
  %v2702 = vpack.c.bf16 %v2623, %v2622
  %v2703 = vpack.c.bf16 %v2625, %v2624
  %v2704 = vpack.c.bf16 %v2627, %v2626
  %v2705 = vpack.c.bf16 %v2629, %v2628
  %v2706 = vpack.c.bf16 %v2631, %v2630
  %v2707 = vpack.c.bf16 %v2633, %v2632
  %v2708 = vpack.c.bf16 %v2635, %v2634
  %v2709 = vpack.c.bf16 %v2637, %v2636
  %v2710 = vpack.c.bf16 %v2639, %v2638
  %v2711 = vpack.c.bf16 %v2641, %v2640
  %v2712 = vpack.c.bf16 %v2643, %v2642
  %v2713 = vpack.c.bf16 %v2645, %v2644
  %v2714 = vpack.c.bf16 %v2647, %v2646
  %v2715 = vpack.c.bf16 %v2649, %v2648
  %v2716 = vpack.c.bf16 %v2651, %v2650
  %v2717 = vpack.c.bf16 %v2653, %v2652
  %v2718 = vpack.c.bf16 %v2655, %v2654
  %v2719 = vpack.c.bf16 %v2657, %v2656
  %v2720 = vpack.c.bf16 %v2659, %v2658
  %v2721 = vpack.c.bf16 %v2661, %v2660
  %v2722 = vpack.c.bf16 %v2663, %v2662
  %v2723 = vpack.c.bf16 %v2665, %v2664
  %v2724 = vpack.c.bf16 %v2667, %v2666
  %v2725 = vpack.c.bf16 %v2669, %v2668
  %v2726 = vpack.c.bf16 %v2671, %v2670
  %v2727 = vpack.c.bf16 %v2673, %v2672
  %v2728 = vpack.c.bf16 %v2675, %v2674
  %v2729 = vpack.c.bf16 %v2677, %v2676
  %v2730 = vpack.c.bf16 %v2679, %v2678
  %v2731 = vpack.c.bf16 %v2681, %v2680
  %v2732 = vpack.c.bf16 %v2683, %v2682
  %v2733 = vpack.c.bf16 %v2685, %v2684
  %v2734 = vpack.c.bf16 %v2687, %v2686
  %v2735 = vpack.c.bf16 %v2689, %v2688
  %v2736 = vpack.c.bf16 %v2691, %v2690
  %v2737 = vpack.c.bf16 %v2693, %v2692
  %v2738 = vpack.c.bf16 %v2695, %v2694
  %v2739 = vpack.c.bf16 %v2697, %v2696
  %v2740 = vpack.c.bf16 %v2699, %v2698
  %v2741 = vpack.c.bf16 %v2701, %v2700
  %v2742 = vld [vmem:[%s5] sm:$0xf]
  %v2743 = vld [vmem:[%s5 + $0x4] sm:$0xf]
  %v2744 = vld [vmem:[%s5 + $0x8] sm:$0xf]
  %v2745 = vld [vmem:[%s5 + $0xc] sm:$0xf]
  %v2746 = vld [vmem:[%s5 + $0x10] sm:$0xf]
  %v2747 = vld [vmem:[%s5 + $0x14] sm:$0xf]
  %v2748 = vld [vmem:[%s5 + $0x18] sm:$0xf]
  %v2749 = vld [vmem:[%s5 + $0x1c] sm:$0xf]
  %v2750 = vld [vmem:[%s5 + $0x20] sm:$0xf]
  %v2751 = vld [vmem:[%s5 + $0x24] sm:$0xf]
  %v2752 = vld [vmem:[%s5 + $0x28] sm:$0xf]
  %v2753 = vld [vmem:[%s5 + $0x2c] sm:$0xf]
  %v2754 = vld [vmem:[%s5 + $0x30] sm:$0xf]
  %v2755 = vld [vmem:[%s5 + $0x34] sm:$0xf]
  %v2756 = vld [vmem:[%s5 + $0x38] sm:$0xf]
  %v2757 = vld [vmem:[%s5 + $0x3c] sm:$0xf]
  %v2758 = vld [vmem:[%s6] sm:$0x1]
  %v2760 = vperm.slane %v2758, 0
  %v2778 = vunpack.c.l.b16 %v2742
  %v2779 = vunpack.c.l.b16 %v2743
  %v2780 = vunpack.c.l.b16 %v2744
  %v2781 = vunpack.c.l.b16 %v2745
  %v2782 = vunpack.c.l.b16 %v2746
  %v2783 = vunpack.c.l.b16 %v2747
  %v2784 = vunpack.c.l.b16 %v2748
  %v2785 = vunpack.c.l.b16 %v2749
  %v2786 = vunpack.c.l.b16 %v2750
  %v2787 = vunpack.c.l.b16 %v2751
  %v2788 = vunpack.c.l.b16 %v2752
  %v2789 = vunpack.c.l.b16 %v2753
  %v2790 = vunpack.c.l.b16 %v2754
  %v2791 = vunpack.c.l.b16 %v2755
  %v2792 = vunpack.c.l.b16 %v2756
  %v2793 = vunpack.c.l.b16 %v2757
  %v2794 = vpack.c.b16 %v2779, %v2778
  %v2795 = vpack.c.b16 %v2781, %v2780
  %v2796 = vpack.c.b16 %v2783, %v2782
  %v2797 = vpack.c.b16 %v2785, %v2784
  %v2798 = vpack.c.b16 %v2787, %v2786
  %v2799 = vpack.c.b16 %v2789, %v2788
  %v2800 = vpack.c.b16 %v2791, %v2790
  %v2801 = vpack.c.b16 %v2793, %v2792
  %2810 = vmatpush.bf16.msra.mxu0 %v2801
  %2811 = vmatpush.bf16.msra.mxu0 %v2800
  %2812 = vmatpush.bf16.msra.mxu0 %v2799
  %2813 = vmatpush.bf16.msra.mxu0 %v2798
  %2814 = vmatpush.bf16.msra.mxu0 %v2797
  %2815 = vmatpush.bf16.msra.mxu0 %v2796
  %2816 = vmatpush.bf16.msra.mxu0 %v2795
  %2817 = vmatpush.bf16.msra.mxu0 %v2794
  %2818 = vmatmul.bf16.gmra.mxu0 %v2702
  %v2819 = vpop.f32.mrf.mxu0
  %v2820 = vadd.f32 %v2760, %v2819
  %v2821 = vpop.f32.mrf.mxu0
  %v2822 = vadd.f32 %v2760, %v2821
  %2823 = vmatmul.bf16.gmra.mxu0 %v2703
  %v2824 = vpop.f32.mrf.mxu0
  %v2825 = vadd.f32 %v2760, %v2824
  %v2826 = vpop.f32.mrf.mxu0
  %v2827 = vadd.f32 %v2760, %v2826
  %2828 = vmatmul.bf16.gmra.mxu0 %v2704
  %v2829 = vpop.f32.mrf.mxu0
  %v2830 = vadd.f32 %v2760, %v2829
  %v2831 = vpop.f32.mrf.mxu0
  %v2832 = vadd.f32 %v2760, %v2831
  %2833 = vmatmul.bf16.gmra.mxu0 %v2705
  %v2834 = vpop.f32.mrf.mxu0
  %v2835 = vadd.f32 %v2760, %v2834
  %v2836 = vpop.f32.mrf.mxu0
  %v2837 = vadd.f32 %v2760, %v2836
  %2838 = vmatmul.bf16.gmra.mxu0 %v2706
  %v2839 = vpop.f32.mrf.mxu0
  %v2840 = vadd.f32 %v2760, %v2839
  %v2841 = vpop.f32.mrf.mxu0
  %v2842 = vadd.f32 %v2760, %v2841
  %2843 = vmatmul.bf16.gmra.mxu0 %v2707
  %v2844 = vpop.f32.mrf.mxu0
  %v2845 = vadd.f32 %v2760, %v2844
  %v2846 = vpop.f32.mrf.mxu0
  %v2847 = vadd.f32 %v2760, %v2846
  %2848 = vmatmul.bf16.gmra.mxu0 %v2708
  %v2849 = vpop.f32.mrf.mxu0
  %v2850 = vadd.f32 %v2760, %v2849
  %v2851 = vpop.f32.mrf.mxu0
  %v2852 = vadd.f32 %v2760, %v2851
  %2853 = vmatmul.bf16.gmra.mxu0 %v2709
  %v2854 = vpop.f32.mrf.mxu0
  %v2855 = vadd.f32 %v2760, %v2854
  %v2856 = vpop.f32.mrf.mxu0
  %v2857 = vadd.f32 %v2760, %v2856
  %2858 = vmatmul.bf16.gmra.mxu0 %v2710
  %v2859 = vpop.f32.mrf.mxu0
  %v2860 = vadd.f32 %v2760, %v2859
  %v2861 = vpop.f32.mrf.mxu0
  %v2862 = vadd.f32 %v2760, %v2861
  %2863 = vmatmul.bf16.gmra.mxu0 %v2711
  %v2864 = vpop.f32.mrf.mxu0
  %v2865 = vadd.f32 %v2760, %v2864
  %v2866 = vpop.f32.mrf.mxu0
  %v2867 = vadd.f32 %v2760, %v2866
  %2868 = vmatmul.bf16.gmra.mxu0 %v2712
  %v2869 = vpop.f32.mrf.mxu0
  %v2870 = vadd.f32 %v2760, %v2869
  %v2871 = vpop.f32.mrf.mxu0
  %v2872 = vadd.f32 %v2760, %v2871
  %2873 = vmatmul.bf16.gmra.mxu0 %v2713
  %v2874 = vpop.f32.mrf.mxu0
  %v2875 = vadd.f32 %v2760, %v2874
  %v2876 = vpop.f32.mrf.mxu0
  %v2877 = vadd.f32 %v2760, %v2876
  %2878 = vmatmul.bf16.gmra.mxu0 %v2714
  %v2879 = vpop.f32.mrf.mxu0
  %v2880 = vadd.f32 %v2760, %v2879
  %v2881 = vpop.f32.mrf.mxu0
  %v2882 = vadd.f32 %v2760, %v2881
  %2883 = vmatmul.bf16.gmra.mxu0 %v2715
  %v2884 = vpop.f32.mrf.mxu0
  %v2885 = vadd.f32 %v2760, %v2884
  %v2886 = vpop.f32.mrf.mxu0
  %v2887 = vadd.f32 %v2760, %v2886
  %2888 = vmatmul.bf16.gmra.mxu0 %v2716
  %v2889 = vpop.f32.mrf.mxu0
  %v2890 = vadd.f32 %v2760, %v2889
  %v2891 = vpop.f32.mrf.mxu0
  %v2892 = vadd.f32 %v2760, %v2891
  %2893 = vmatmul.bf16.gmra.mxu0 %v2717
  %v2894 = vpop.f32.mrf.mxu0
  %v2895 = vadd.f32 %v2760, %v2894
  %v2896 = vpop.f32.mrf.mxu0
  %v2897 = vadd.f32 %v2760, %v2896
  %2898 = vmatmul.bf16.gmra.mxu0 %v2718
  %v2899 = vpop.f32.mrf.mxu0
  %v2900 = vadd.f32 %v2760, %v2899
  %v2901 = vpop.f32.mrf.mxu0
  %v2902 = vadd.f32 %v2760, %v2901
  %2903 = vmatmul.bf16.gmra.mxu0 %v2719
  %v2904 = vpop.f32.mrf.mxu0
  %v2905 = vadd.f32 %v2760, %v2904
  %v2906 = vpop.f32.mrf.mxu0
  %v2907 = vadd.f32 %v2760, %v2906
  %2908 = vmatmul.bf16.gmra.mxu0 %v2720
  %v2909 = vpop.f32.mrf.mxu0
  %v2910 = vadd.f32 %v2760, %v2909
  %v2911 = vpop.f32.mrf.mxu0
  %v2912 = vadd.f32 %v2760, %v2911
  %2913 = vmatmul.bf16.gmra.mxu0 %v2721
  %v2914 = vpop.f32.mrf.mxu0
  %v2915 = vadd.f32 %v2760, %v2914
  %v2916 = vpop.f32.mrf.mxu0
  %v2917 = vadd.f32 %v2760, %v2916
  %2918 = vmatmul.bf16.gmra.mxu0 %v2722
  %v2919 = vpop.f32.mrf.mxu0
  %v2920 = vadd.f32 %v2760, %v2919
  %v2921 = vpop.f32.mrf.mxu0
  %v2922 = vadd.f32 %v2760, %v2921
  %2923 = vmatmul.bf16.gmra.mxu0 %v2723
  %v2924 = vpop.f32.mrf.mxu0
  %v2925 = vadd.f32 %v2760, %v2924
  %v2926 = vpop.f32.mrf.mxu0
  %v2927 = vadd.f32 %v2760, %v2926
  %2928 = vmatmul.bf16.gmra.mxu0 %v2724
  %v2929 = vpop.f32.mrf.mxu0
  %v2930 = vadd.f32 %v2760, %v2929
  %v2931 = vpop.f32.mrf.mxu0
  %v2932 = vadd.f32 %v2760, %v2931
  %2933 = vmatmul.bf16.gmra.mxu0 %v2725
  %v2934 = vpop.f32.mrf.mxu0
  %v2935 = vadd.f32 %v2760, %v2934
  %v2936 = vpop.f32.mrf.mxu0
  %v2937 = vadd.f32 %v2760, %v2936
  %2938 = vmatmul.bf16.gmra.mxu0 %v2726
  %v2939 = vpop.f32.mrf.mxu0
  %v2940 = vadd.f32 %v2760, %v2939
  %v2941 = vpop.f32.mrf.mxu0
  %v2942 = vadd.f32 %v2760, %v2941
  %2943 = vmatmul.bf16.gmra.mxu0 %v2727
  %v2944 = vpop.f32.mrf.mxu0
  %v2945 = vadd.f32 %v2760, %v2944
  %v2946 = vpop.f32.mrf.mxu0
  %v2947 = vadd.f32 %v2760, %v2946
  %2948 = vmatmul.bf16.gmra.mxu0 %v2728
  %v2949 = vpop.f32.mrf.mxu0
  %v2950 = vadd.f32 %v2760, %v2949
  %v2951 = vpop.f32.mrf.mxu0
  %v2952 = vadd.f32 %v2760, %v2951
  %2953 = vmatmul.bf16.gmra.mxu0 %v2729
  %v2954 = vpop.f32.mrf.mxu0
  %v2955 = vadd.f32 %v2760, %v2954
  %v2956 = vpop.f32.mrf.mxu0
  %v2957 = vadd.f32 %v2760, %v2956
  %2958 = vmatmul.bf16.gmra.mxu0 %v2730
  %v2959 = vpop.f32.mrf.mxu0
  %v2960 = vadd.f32 %v2760, %v2959
  %v2961 = vpop.f32.mrf.mxu0
  %v2962 = vadd.f32 %v2760, %v2961
  %2963 = vmatmul.bf16.gmra.mxu0 %v2731
  %v2964 = vpop.f32.mrf.mxu0
  %v2965 = vadd.f32 %v2760, %v2964
  %v2966 = vpop.f32.mrf.mxu0
  %v2967 = vadd.f32 %v2760, %v2966
  %2968 = vmatmul.bf16.gmra.mxu0 %v2732
  %v2969 = vpop.f32.mrf.mxu0
  %v2970 = vadd.f32 %v2760, %v2969
  %v2971 = vpop.f32.mrf.mxu0
  %v2972 = vadd.f32 %v2760, %v2971
  %2973 = vmatmul.bf16.gmra.mxu0 %v2733
  %v2974 = vpop.f32.mrf.mxu0
  %v2975 = vadd.f32 %v2760, %v2974
  %v2976 = vpop.f32.mrf.mxu0
  %v2977 = vadd.f32 %v2760, %v2976
  %2978 = vmatmul.bf16.gmra.mxu0 %v2734
  %v2979 = vpop.f32.mrf.mxu0
  %v2980 = vadd.f32 %v2760, %v2979
  %v2981 = vpop.f32.mrf.mxu0
  %v2982 = vadd.f32 %v2760, %v2981
  %2983 = vmatmul.bf16.gmra.mxu0 %v2735
  %v2984 = vpop.f32.mrf.mxu0
  %v2985 = vadd.f32 %v2760, %v2984
  %v2986 = vpop.f32.mrf.mxu0
  %v2987 = vadd.f32 %v2760, %v2986
  %2988 = vmatmul.bf16.gmra.mxu0 %v2736
  %v2989 = vpop.f32.mrf.mxu0
  %v2990 = vadd.f32 %v2760, %v2989
  %v2991 = vpop.f32.mrf.mxu0
  %v2992 = vadd.f32 %v2760, %v2991
  %2993 = vmatmul.bf16.gmra.mxu0 %v2737
  %v2994 = vpop.f32.mrf.mxu0
  %v2995 = vadd.f32 %v2760, %v2994
  %v2996 = vpop.f32.mrf.mxu0
  %v2997 = vadd.f32 %v2760, %v2996
  %2998 = vmatmul.bf16.gmra.mxu0 %v2738
  %v2999 = vpop.f32.mrf.mxu0
  %v3000 = vadd.f32 %v2760, %v2999
  %v3001 = vpop.f32.mrf.mxu0
  %v3002 = vadd.f32 %v2760, %v3001
  %3003 = vmatmul.bf16.gmra.mxu0 %v2739
  %v3004 = vpop.f32.mrf.mxu0
  %v3005 = vadd.f32 %v2760, %v3004
  %v3006 = vpop.f32.mrf.mxu0
  %v3007 = vadd.f32 %v2760, %v3006
  %3008 = vmatmul.bf16.gmra.mxu0 %v2740
  %v3009 = vpop.f32.mrf.mxu0
  %v3010 = vadd.f32 %v2760, %v3009
  %v3011 = vpop.f32.mrf.mxu0
  %v3012 = vadd.f32 %v2760, %v3011
  %3013 = vmatmul.bf16.gmra.mxu0 %v2741
  %v3014 = vpop.f32.mrf.mxu0
  %v3015 = vadd.f32 %v2760, %v3014
  %v3016 = vpop.f32.mrf.mxu0
  %v3017 = vadd.f32 %v2760, %v3016
  %3018 = vdwg.mxu0
  %3019 = vadd.xlane.f32.xlu0 %v2820
  %v3020 = vpop.xlane.xlu0 %3019
  %3021 = vadd.xlane.f32.xlu0 %v2822
  %v3022 = vpop.xlane.xlu0 %3021
  %3023 = vadd.xlane.f32.xlu0 %v2825
  %v3024 = vpop.xlane.xlu0 %3023
  %3025 = vadd.xlane.f32.xlu0 %v2827
  %v3026 = vpop.xlane.xlu0 %3025
  %3027 = vadd.xlane.f32.xlu0 %v2830
  %v3028 = vpop.xlane.xlu0 %3027
  %3029 = vadd.xlane.f32.xlu0 %v2832
  %v3030 = vpop.xlane.xlu0 %3029
  %3031 = vadd.xlane.f32.xlu0 %v2835
  %v3032 = vpop.xlane.xlu0 %3031
  %3033 = vadd.xlane.f32.xlu0 %v2837
  %v3034 = vpop.xlane.xlu0 %3033
  %3035 = vadd.xlane.f32.xlu0 %v2840
  %v3036 = vpop.xlane.xlu0 %3035
  %3037 = vadd.xlane.f32.xlu0 %v2842
  %v3038 = vpop.xlane.xlu0 %3037
  %3039 = vadd.xlane.f32.xlu0 %v2845
  %v3040 = vpop.xlane.xlu0 %3039
  %3041 = vadd.xlane.f32.xlu0 %v2847
  %v3042 = vpop.xlane.xlu0 %3041
  %3043 = vadd.xlane.f32.xlu0 %v2850
  %v3044 = vpop.xlane.xlu0 %3043
  %3045 = vadd.xlane.f32.xlu0 %v2852
  %v3046 = vpop.xlane.xlu0 %3045
  %3047 = vadd.xlane.f32.xlu0 %v2855
  %v3048 = vpop.xlane.xlu0 %3047
  %3049 = vadd.xlane.f32.xlu0 %v2857
  %v3050 = vpop.xlane.xlu0 %3049
  %3051 = vadd.xlane.f32.xlu0 %v2860
  %v3052 = vpop.xlane.xlu0 %3051
  %3053 = vadd.xlane.f32.xlu0 %v2862
  %v3054 = vpop.xlane.xlu0 %3053
  %3055 = vadd.xlane.f32.xlu0 %v2865
  %v3056 = vpop.xlane.xlu0 %3055
  %3057 = vadd.xlane.f32.xlu0 %v2867
  %v3058 = vpop.xlane.xlu0 %3057
  %3059 = vadd.xlane.f32.xlu0 %v2870
  %v3060 = vpop.xlane.xlu0 %3059
  %3061 = vadd.xlane.f32.xlu0 %v2872
  %v3062 = vpop.xlane.xlu0 %3061
  %3063 = vadd.xlane.f32.xlu0 %v2875
  %v3064 = vpop.xlane.xlu0 %3063
  %3065 = vadd.xlane.f32.xlu0 %v2877
  %v3066 = vpop.xlane.xlu0 %3065
  %3067 = vadd.xlane.f32.xlu0 %v2880
  %v3068 = vpop.xlane.xlu0 %3067
  %3069 = vadd.xlane.f32.xlu0 %v2882
  %v3070 = vpop.xlane.xlu0 %3069
  %3071 = vadd.xlane.f32.xlu0 %v2885
  %v3072 = vpop.xlane.xlu0 %3071
  %3073 = vadd.xlane.f32.xlu0 %v2887
  %v3074 = vpop.xlane.xlu0 %3073
  %3075 = vadd.xlane.f32.xlu0 %v2890
  %v3076 = vpop.xlane.xlu0 %3075
  %3077 = vadd.xlane.f32.xlu0 %v2892
  %v3078 = vpop.xlane.xlu0 %3077
  %3079 = vadd.xlane.f32.xlu0 %v2895
  %v3080 = vpop.xlane.xlu0 %3079
  %3081 = vadd.xlane.f32.xlu0 %v2897
  %v3082 = vpop.xlane.xlu0 %3081
  %3083 = vadd.xlane.f32.xlu0 %v2900
  %v3084 = vpop.xlane.xlu0 %3083
  %3085 = vadd.xlane.f32.xlu0 %v2902
  %v3086 = vpop.xlane.xlu0 %3085
  %3087 = vadd.xlane.f32.xlu0 %v2905
  %v3088 = vpop.xlane.xlu0 %3087
  %3089 = vadd.xlane.f32.xlu0 %v2907
  %v3090 = vpop.xlane.xlu0 %3089
  %3091 = vadd.xlane.f32.xlu0 %v2910
  %v3092 = vpop.xlane.xlu0 %3091
  %3093 = vadd.xlane.f32.xlu0 %v2912
  %v3094 = vpop.xlane.xlu0 %3093
  %3095 = vadd.xlane.f32.xlu0 %v2915
  %v3096 = vpop.xlane.xlu0 %3095
  %3097 = vadd.xlane.f32.xlu0 %v2917
  %v3098 = vpop.xlane.xlu0 %3097
  %3099 = vadd.xlane.f32.xlu0 %v2920
  %v3100 = vpop.xlane.xlu0 %3099
  %3101 = vadd.xlane.f32.xlu0 %v2922
  %v3102 = vpop.xlane.xlu0 %3101
  %3103 = vadd.xlane.f32.xlu0 %v2925
  %v3104 = vpop.xlane.xlu0 %3103
  %3105 = vadd.xlane.f32.xlu0 %v2927
  %v3106 = vpop.xlane.xlu0 %3105
  %3107 = vadd.xlane.f32.xlu0 %v2930
  %v3108 = vpop.xlane.xlu0 %3107
  %3109 = vadd.xlane.f32.xlu0 %v2932
  %v3110 = vpop.xlane.xlu0 %3109
  %3111 = vadd.xlane.f32.xlu0 %v2935
  %v3112 = vpop.xlane.xlu0 %3111
  %3113 = vadd.xlane.f32.xlu0 %v2937
  %v3114 = vpop.xlane.xlu0 %3113
  %3115 = vadd.xlane.f32.xlu0 %v2940
  %v3116 = vpop.xlane.xlu0 %3115
  %3117 = vadd.xlane.f32.xlu0 %v2942
  %v3118 = vpop.xlane.xlu0 %3117
  %3119 = vadd.xlane.f32.xlu0 %v2945
  %v3120 = vpop.xlane.xlu0 %3119
  %3121 = vadd.xlane.f32.xlu0 %v2947
  %v3122 = vpop.xlane.xlu0 %3121
  %3123 = vadd.xlane.f32.xlu0 %v2950
  %v3124 = vpop.xlane.xlu0 %3123
  %3125 = vadd.xlane.f32.xlu0 %v2952
  %v3126 = vpop.xlane.xlu0 %3125
  %3127 = vadd.xlane.f32.xlu0 %v2955
  %v3128 = vpop.xlane.xlu0 %3127
  %3129 = vadd.xlane.f32.xlu0 %v2957
  %v3130 = vpop.xlane.xlu0 %3129
  %3131 = vadd.xlane.f32.xlu0 %v2960
  %v3132 = vpop.xlane.xlu0 %3131
  %3133 = vadd.xlane.f32.xlu0 %v2962
  %v3134 = vpop.xlane.xlu0 %3133
  %3135 = vadd.xlane.f32.xlu0 %v2965
  %v3136 = vpop.xlane.xlu0 %3135
  %3137 = vadd.xlane.f32.xlu0 %v2967
  %v3138 = vpop.xlane.xlu0 %3137
  %3139 = vadd.xlane.f32.xlu0 %v2970
  %v3140 = vpop.xlane.xlu0 %3139
  %3141 = vadd.xlane.f32.xlu0 %v2972
  %v3142 = vpop.xlane.xlu0 %3141
  %3143 = vadd.xlane.f32.xlu0 %v2975
  %v3144 = vpop.xlane.xlu0 %3143
  %3145 = vadd.xlane.f32.xlu0 %v2977
  %v3146 = vpop.xlane.xlu0 %3145
  %3147 = vadd.xlane.f32.xlu0 %v2980
  %v3148 = vpop.xlane.xlu0 %3147
  %3149 = vadd.xlane.f32.xlu0 %v2982
  %v3150 = vpop.xlane.xlu0 %3149
  %3151 = vadd.xlane.f32.xlu0 %v2985
  %v3152 = vpop.xlane.xlu0 %3151
  %3153 = vadd.xlane.f32.xlu0 %v2987
  %v3154 = vpop.xlane.xlu0 %3153
  %3155 = vadd.xlane.f32.xlu0 %v2990
  %v3156 = vpop.xlane.xlu0 %3155
  %3157 = vadd.xlane.f32.xlu0 %v2992
  %v3158 = vpop.xlane.xlu0 %3157
  %3159 = vadd.xlane.f32.xlu0 %v2995
  %v3160 = vpop.xlane.xlu0 %3159
  %3161 = vadd.xlane.f32.xlu0 %v2997
  %v3162 = vpop.xlane.xlu0 %3161
  %3163 = vadd.xlane.f32.xlu0 %v3000
  %v3164 = vpop.xlane.xlu0 %3163
  %3165 = vadd.xlane.f32.xlu0 %v3002
  %v3166 = vpop.xlane.xlu0 %3165
  %3167 = vadd.xlane.f32.xlu0 %v3005
  %v3168 = vpop.xlane.xlu0 %3167
  %3169 = vadd.xlane.f32.xlu0 %v3007
  %v3170 = vpop.xlane.xlu0 %3169
  %3171 = vadd.xlane.f32.xlu0 %v3010
  %v3172 = vpop.xlane.xlu0 %3171
  %3173 = vadd.xlane.f32.xlu0 %v3012
  %v3174 = vpop.xlane.xlu0 %3173
  %3175 = vadd.xlane.f32.xlu0 %v3015
  %v3176 = vpop.xlane.xlu0 %3175
  %3177 = vadd.xlane.f32.xlu0 %v3017
  %v3178 = vpop.xlane.xlu0 %3177
  %v3179 = vmul.f32 %v3020, 0.0078125
  %v3180 = vmul.f32 %v3022, 0.0078125
  %v3181 = vmul.f32 %v3024, 0.0078125
  %v3182 = vmul.f32 %v3026, 0.0078125
  %v3183 = vmul.f32 %v3028, 0.0078125
  %v3184 = vmul.f32 %v3030, 0.0078125
  %v3185 = vmul.f32 %v3032, 0.0078125
  %v3186 = vmul.f32 %v3034, 0.0078125
  %v3187 = vmul.f32 %v3036, 0.0078125
  %v3188 = vmul.f32 %v3038, 0.0078125
  %v3189 = vmul.f32 %v3040, 0.0078125
  %v3190 = vmul.f32 %v3042, 0.0078125
  %v3191 = vmul.f32 %v3044, 0.0078125
  %v3192 = vmul.f32 %v3046, 0.0078125
  %v3193 = vmul.f32 %v3048, 0.0078125
  %v3194 = vmul.f32 %v3050, 0.0078125
  %v3195 = vmul.f32 %v3052, 0.0078125
  %v3196 = vmul.f32 %v3054, 0.0078125
  %v3197 = vmul.f32 %v3056, 0.0078125
  %v3198 = vmul.f32 %v3058, 0.0078125
  %v3199 = vmul.f32 %v3060, 0.0078125
  %v3200 = vmul.f32 %v3062, 0.0078125
  %v3201 = vmul.f32 %v3064, 0.0078125
  %v3202 = vmul.f32 %v3066, 0.0078125
  %v3203 = vmul.f32 %v3068, 0.0078125
  %v3204 = vmul.f32 %v3070, 0.0078125
  %v3205 = vmul.f32 %v3072, 0.0078125
  %v3206 = vmul.f32 %v3074, 0.0078125
  %v3207 = vmul.f32 %v3076, 0.0078125
  %v3208 = vmul.f32 %v3078, 0.0078125
  %v3209 = vmul.f32 %v3080, 0.0078125
  %v3210 = vmul.f32 %v3082, 0.0078125
  %v3211 = vmul.f32 %v3084, 0.0078125
  %v3212 = vmul.f32 %v3086, 0.0078125
  %v3213 = vmul.f32 %v3088, 0.0078125
  %v3214 = vmul.f32 %v3090, 0.0078125
  %v3215 = vmul.f32 %v3092, 0.0078125
  %v3216 = vmul.f32 %v3094, 0.0078125
  %v3217 = vmul.f32 %v3096, 0.0078125
  %v3218 = vmul.f32 %v3098, 0.0078125
  %v3219 = vmul.f32 %v3100, 0.0078125
  %v3220 = vmul.f32 %v3102, 0.0078125
  %v3221 = vmul.f32 %v3104, 0.0078125
  %v3222 = vmul.f32 %v3106, 0.0078125
  %v3223 = vmul.f32 %v3108, 0.0078125
  %v3224 = vmul.f32 %v3110, 0.0078125
  %v3225 = vmul.f32 %v3112, 0.0078125
  %v3226 = vmul.f32 %v3114, 0.0078125
  %v3227 = vmul.f32 %v3116, 0.0078125
  %v3228 = vmul.f32 %v3118, 0.0078125
  %v3229 = vmul.f32 %v3120, 0.0078125
  %v3230 = vmul.f32 %v3122, 0.0078125
  %v3231 = vmul.f32 %v3124, 0.0078125
  %v3232 = vmul.f32 %v3126, 0.0078125
  %v3233 = vmul.f32 %v3128, 0.0078125
  %v3234 = vmul.f32 %v3130, 0.0078125
  %v3235 = vmul.f32 %v3132, 0.0078125
  %v3236 = vmul.f32 %v3134, 0.0078125
  %v3237 = vmul.f32 %v3136, 0.0078125
  %v3238 = vmul.f32 %v3138, 0.0078125
  %v3239 = vmul.f32 %v3140, 0.0078125
  %v3240 = vmul.f32 %v3142, 0.0078125
  %v3241 = vmul.f32 %v3144, 0.0078125
  %v3242 = vmul.f32 %v3146, 0.0078125
  %v3243 = vmul.f32 %v3148, 0.0078125
  %v3244 = vmul.f32 %v3150, 0.0078125
  %v3245 = vmul.f32 %v3152, 0.0078125
  %v3246 = vmul.f32 %v3154, 0.0078125
  %v3247 = vmul.f32 %v3156, 0.0078125
  %v3248 = vmul.f32 %v3158, 0.0078125
  %v3249 = vmul.f32 %v3160, 0.0078125
  %v3250 = vmul.f32 %v3162, 0.0078125
  %v3251 = vmul.f32 %v3164, 0.0078125
  %v3252 = vmul.f32 %v3166, 0.0078125
  %v3253 = vmul.f32 %v3168, 0.0078125
  %v3254 = vmul.f32 %v3170, 0.0078125
  %v3255 = vmul.f32 %v3172, 0.0078125
  %v3256 = vmul.f32 %v3174, 0.0078125
  %v3257 = vmul.f32 %v3176, 0.0078125
  %v3258 = vmul.f32 %v3178, 0.0078125
  %v3259 = vmul.f32 %v2820, %v2820
  %v3260 = vmul.f32 %v2822, %v2822
  %v3261 = vmul.f32 %v2825, %v2825
  %v3262 = vmul.f32 %v2827, %v2827
  %v3263 = vmul.f32 %v2830, %v2830
  %v3264 = vmul.f32 %v2832, %v2832
  %v3265 = vmul.f32 %v2835, %v2835
  %v3266 = vmul.f32 %v2837, %v2837
  %v3267 = vmul.f32 %v2840, %v2840
  %v3268 = vmul.f32 %v2842, %v2842
  %v3269 = vmul.f32 %v2845, %v2845
  %v3270 = vmul.f32 %v2847, %v2847
  %v3271 = vmul.f32 %v2850, %v2850
  %v3272 = vmul.f32 %v2852, %v2852
  %v3273 = vmul.f32 %v2855, %v2855
  %v3274 = vmul.f32 %v2857, %v2857
  %v3275 = vmul.f32 %v2860, %v2860
  %v3276 = vmul.f32 %v2862, %v2862
  %v3277 = vmul.f32 %v2865, %v2865
  %v3278 = vmul.f32 %v2867, %v2867
  %v3279 = vmul.f32 %v2870, %v2870
  %v3280 = vmul.f32 %v2872, %v2872
  %v3281 = vmul.f32 %v2875, %v2875
  %v3282 = vmul.f32 %v2877, %v2877
  %v3283 = vmul.f32 %v2880, %v2880
  %v3284 = vmul.f32 %v2882, %v2882
  %v3285 = vmul.f32 %v2885, %v2885
  %v3286 = vmul.f32 %v2887, %v2887
  %v3287 = vmul.f32 %v2890, %v2890
  %v3288 = vmul.f32 %v2892, %v2892
  %v3289 = vmul.f32 %v2895, %v2895
  %v3290 = vmul.f32 %v2897, %v2897
  %v3291 = vmul.f32 %v2900, %v2900
  %v3292 = vmul.f32 %v2902, %v2902
  %v3293 = vmul.f32 %v2905, %v2905
  %v3294 = vmul.f32 %v2907, %v2907
  %v3295 = vmul.f32 %v2910, %v2910
  %v3296 = vmul.f32 %v2912, %v2912
  %v3297 = vmul.f32 %v2915, %v2915
  %v3298 = vmul.f32 %v2917, %v2917
  %v3299 = vmul.f32 %v2920, %v2920
  %v3300 = vmul.f32 %v2922, %v2922
  %v3301 = vmul.f32 %v2925, %v2925
  %v3302 = vmul.f32 %v2927, %v2927
  %v3303 = vmul.f32 %v2930, %v2930
  %v3304 = vmul.f32 %v2932, %v2932
  %v3305 = vmul.f32 %v2935, %v2935
  %v3306 = vmul.f32 %v2937, %v2937
  %v3307 = vmul.f32 %v2940, %v2940
  %v3308 = vmul.f32 %v2942, %v2942
  %v3309 = vmul.f32 %v2945, %v2945
  %v3310 = vmul.f32 %v2947, %v2947
  %v3311 = vmul.f32 %v2950, %v2950
  %v3312 = vmul.f32 %v2952, %v2952
  %v3313 = vmul.f32 %v2955, %v2955
  %v3314 = vmul.f32 %v2957, %v2957
  %v3315 = vmul.f32 %v2960, %v2960
  %v3316 = vmul.f32 %v2962, %v2962
  %v3317 = vmul.f32 %v2965, %v2965
  %v3318 = vmul.f32 %v2967, %v2967
  %v3319 = vmul.f32 %v2970, %v2970
  %v3320 = vmul.f32 %v2972, %v2972
  %v3321 = vmul.f32 %v2975, %v2975
  %v3322 = vmul.f32 %v2977, %v2977
  %v3323 = vmul.f32 %v2980, %v2980
  %v3324 = vmul.f32 %v2982, %v2982
  %v3325 = vmul.f32 %v2985, %v2985
  %v3326 = vmul.f32 %v2987, %v2987
  %v3327 = vmul.f32 %v2990, %v2990
  %v3328 = vmul.f32 %v2992, %v2992
  %v3329 = vmul.f32 %v2995, %v2995
  %v3330 = vmul.f32 %v2997, %v2997
  %v3331 = vmul.f32 %v3000, %v3000
  %v3332 = vmul.f32 %v3002, %v3002
  %v3333 = vmul.f32 %v3005, %v3005
  %v3334 = vmul.f32 %v3007, %v3007
  %v3335 = vmul.f32 %v3010, %v3010
  %v3336 = vmul.f32 %v3012, %v3012
  %v3337 = vmul.f32 %v3015, %v3015
  %v3338 = vmul.f32 %v3017, %v3017
  %3339 = vadd.xlane.f32.xlu0 %v3259
  %v3340 = vpop.xlane.xlu0 %3339
  %3341 = vadd.xlane.f32.xlu0 %v3260
  %v3342 = vpop.xlane.xlu0 %3341
  %3343 = vadd.xlane.f32.xlu0 %v3261
  %v3344 = vpop.xlane.xlu0 %3343
  %3345 = vadd.xlane.f32.xlu0 %v3262
  %v3346 = vpop.xlane.xlu0 %3345
  %3347 = vadd.xlane.f32.xlu0 %v3263
  %v3348 = vpop.xlane.xlu0 %3347
  %3349 = vadd.xlane.f32.xlu0 %v3264
  %v3350 = vpop.xlane.xlu0 %3349
  %3351 = vadd.xlane.f32.xlu0 %v3265
  %v3352 = vpop.xlane.xlu0 %3351
  %3353 = vadd.xlane.f32.xlu0 %v3266
  %v3354 = vpop.xlane.xlu0 %3353
  %3355 = vadd.xlane.f32.xlu0 %v3267
  %v3356 = vpop.xlane.xlu0 %3355
  %3357 = vadd.xlane.f32.xlu0 %v3268
  %v3358 = vpop.xlane.xlu0 %3357
  %3359 = vadd.xlane.f32.xlu0 %v3269
  %v3360 = vpop.xlane.xlu0 %3359
  %3361 = vadd.xlane.f32.xlu0 %v3270
  %v3362 = vpop.xlane.xlu0 %3361
  %3363 = vadd.xlane.f32.xlu0 %v3271
  %v3364 = vpop.xlane.xlu0 %3363
  %3365 = vadd.xlane.f32.xlu0 %v3272
  %v3366 = vpop.xlane.xlu0 %3365
  %3367 = vadd.xlane.f32.xlu0 %v3273
  %v3368 = vpop.xlane.xlu0 %3367
  %3369 = vadd.xlane.f32.xlu0 %v3274
  %v3370 = vpop.xlane.xlu0 %3369
  %3371 = vadd.xlane.f32.xlu0 %v3275
  %v3372 = vpop.xlane.xlu0 %3371
  %3373 = vadd.xlane.f32.xlu0 %v3276
  %v3374 = vpop.xlane.xlu0 %3373
  %3375 = vadd.xlane.f32.xlu0 %v3277
  %v3376 = vpop.xlane.xlu0 %3375
  %3377 = vadd.xlane.f32.xlu0 %v3278
  %v3378 = vpop.xlane.xlu0 %3377
  %3379 = vadd.xlane.f32.xlu0 %v3279
  %v3380 = vpop.xlane.xlu0 %3379
  %3381 = vadd.xlane.f32.xlu0 %v3280
  %v3382 = vpop.xlane.xlu0 %3381
  %3383 = vadd.xlane.f32.xlu0 %v3281
  %v3384 = vpop.xlane.xlu0 %3383
  %3385 = vadd.xlane.f32.xlu0 %v3282
  %v3386 = vpop.xlane.xlu0 %3385
  %3387 = vadd.xlane.f32.xlu0 %v3283
  %v3388 = vpop.xlane.xlu0 %3387
  %3389 = vadd.xlane.f32.xlu0 %v3284
  %v3390 = vpop.xlane.xlu0 %3389
  %3391 = vadd.xlane.f32.xlu0 %v3285
  %v3392 = vpop.xlane.xlu0 %3391
  %3393 = vadd.xlane.f32.xlu0 %v3286
  %v3394 = vpop.xlane.xlu0 %3393
  %3395 = vadd.xlane.f32.xlu0 %v3287
  %v3396 = vpop.xlane.xlu0 %3395
  %3397 = vadd.xlane.f32.xlu0 %v3288
  %v3398 = vpop.xlane.xlu0 %3397
  %3399 = vadd.xlane.f32.xlu0 %v3289
  %v3400 = vpop.xlane.xlu0 %3399
  %3401 = vadd.xlane.f32.xlu0 %v3290
  %v3402 = vpop.xlane.xlu0 %3401
  %3403 = vadd.xlane.f32.xlu0 %v3291
  %v3404 = vpop.xlane.xlu0 %3403
  %3405 = vadd.xlane.f32.xlu0 %v3292
  %v3406 = vpop.xlane.xlu0 %3405
  %3407 = vadd.xlane.f32.xlu0 %v3293
  %v3408 = vpop.xlane.xlu0 %3407
  %3409 = vadd.xlane.f32.xlu0 %v3294
  %v3410 = vpop.xlane.xlu0 %3409
  %3411 = vadd.xlane.f32.xlu0 %v3295
  %v3412 = vpop.xlane.xlu0 %3411
  %3413 = vadd.xlane.f32.xlu0 %v3296
  %v3414 = vpop.xlane.xlu0 %3413
  %3415 = vadd.xlane.f32.xlu0 %v3297
  %v3416 = vpop.xlane.xlu0 %3415
  %3417 = vadd.xlane.f32.xlu0 %v3298
  %v3418 = vpop.xlane.xlu0 %3417
  %3419 = vadd.xlane.f32.xlu0 %v3299
  %v3420 = vpop.xlane.xlu0 %3419
  %3421 = vadd.xlane.f32.xlu0 %v3300
  %v3422 = vpop.xlane.xlu0 %3421
  %3423 = vadd.xlane.f32.xlu0 %v3301
  %v3424 = vpop.xlane.xlu0 %3423
  %3425 = vadd.xlane.f32.xlu0 %v3302
  %v3426 = vpop.xlane.xlu0 %3425
  %3427 = vadd.xlane.f32.xlu0 %v3303
  %v3428 = vpop.xlane.xlu0 %3427
  %3429 = vadd.xlane.f32.xlu0 %v3304
  %v3430 = vpop.xlane.xlu0 %3429
  %3431 = vadd.xlane.f32.xlu0 %v3305
  %v3432 = vpop.xlane.xlu0 %3431
  %3433 = vadd.xlane.f32.xlu0 %v3306
  %v3434 = vpop.xlane.xlu0 %3433
  %3435 = vadd.xlane.f32.xlu0 %v3307
  %v3436 = vpop.xlane.xlu0 %3435
  %3437 = vadd.xlane.f32.xlu0 %v3308
  %v3438 = vpop.xlane.xlu0 %3437
  %3439 = vadd.xlane.f32.xlu0 %v3309
  %v3440 = vpop.xlane.xlu0 %3439
  %3441 = vadd.xlane.f32.xlu0 %v3310
  %v3442 = vpop.xlane.xlu0 %3441
  %3443 = vadd.xlane.f32.xlu0 %v3311
  %v3444 = vpop.xlane.xlu0 %3443
  %3445 = vadd.xlane.f32.xlu0 %v3312
  %v3446 = vpop.xlane.xlu0 %3445
  %3447 = vadd.xlane.f32.xlu0 %v3313
  %v3448 = vpop.xlane.xlu0 %3447
  %3449 = vadd.xlane.f32.xlu0 %v3314
  %v3450 = vpop.xlane.xlu0 %3449
  %3451 = vadd.xlane.f32.xlu0 %v3315
  %v3452 = vpop.xlane.xlu0 %3451
  %3453 = vadd.xlane.f32.xlu0 %v3316
  %v3454 = vpop.xlane.xlu0 %3453
  %3455 = vadd.xlane.f32.xlu0 %v3317
  %v3456 = vpop.xlane.xlu0 %3455
  %3457 = vadd.xlane.f32.xlu0 %v3318
  %v3458 = vpop.xlane.xlu0 %3457
  %3459 = vadd.xlane.f32.xlu0 %v3319
  %v3460 = vpop.xlane.xlu0 %3459
  %3461 = vadd.xlane.f32.xlu0 %v3320
  %v3462 = vpop.xlane.xlu0 %3461
  %3463 = vadd.xlane.f32.xlu0 %v3321
  %v3464 = vpop.xlane.xlu0 %3463
  %3465 = vadd.xlane.f32.xlu0 %v3322
  %v3466 = vpop.xlane.xlu0 %3465
  %3467 = vadd.xlane.f32.xlu0 %v3323
  %v3468 = vpop.xlane.xlu0 %3467
  %3469 = vadd.xlane.f32.xlu0 %v3324
  %v3470 = vpop.xlane.xlu0 %3469
  %3471 = vadd.xlane.f32.xlu0 %v3325
  %v3472 = vpop.xlane.xlu0 %3471
  %3473 = vadd.xlane.f32.xlu0 %v3326
  %v3474 = vpop.xlane.xlu0 %3473
  %3475 = vadd.xlane.f32.xlu0 %v3327
  %v3476 = vpop.xlane.xlu0 %3475
  %3477 = vadd.xlane.f32.xlu0 %v3328
  %v3478 = vpop.xlane.xlu0 %3477
  %3479 = vadd.xlane.f32.xlu0 %v3329
  %v3480 = vpop.xlane.xlu0 %3479
  %3481 = vadd.xlane.f32.xlu0 %v3330
  %v3482 = vpop.xlane.xlu0 %3481
  %3483 = vadd.xlane.f32.xlu0 %v3331
  %v3484 = vpop.xlane.xlu0 %3483
  %3485 = vadd.xlane.f32.xlu0 %v3332
  %v3486 = vpop.xlane.xlu0 %3485
  %3487 = vadd.xlane.f32.xlu0 %v3333
  %v3488 = vpop.xlane.xlu0 %3487
  %3489 = vadd.xlane.f32.xlu0 %v3334
  %v3490 = vpop.xlane.xlu0 %3489
  %3491 = vadd.xlane.f32.xlu0 %v3335
  %v3492 = vpop.xlane.xlu0 %3491
  %3493 = vadd.xlane.f32.xlu0 %v3336
  %v3494 = vpop.xlane.xlu0 %3493
  %3495 = vadd.xlane.f32.xlu0 %v3337
  %v3496 = vpop.xlane.xlu0 %3495
  %3497 = vadd.xlane.f32.xlu0 %v3338
  %v3498 = vpop.xlane.xlu0 %3497
  %v3499 = vmul.f32 %v3340, 0.0078125
  %v3500 = vmul.f32 %v3342, 0.0078125
  %v3501 = vmul.f32 %v3344, 0.0078125
  %v3502 = vmul.f32 %v3346, 0.0078125
  %v3503 = vmul.f32 %v3348, 0.0078125
  %v3504 = vmul.f32 %v3350, 0.0078125
  %v3505 = vmul.f32 %v3352, 0.0078125
  %v3506 = vmul.f32 %v3354, 0.0078125
  %v3507 = vmul.f32 %v3356, 0.0078125
  %v3508 = vmul.f32 %v3358, 0.0078125
  %v3509 = vmul.f32 %v3360, 0.0078125
  %v3510 = vmul.f32 %v3362, 0.0078125
  %v3511 = vmul.f32 %v3364, 0.0078125
  %v3512 = vmul.f32 %v3366, 0.0078125
  %v3513 = vmul.f32 %v3368, 0.0078125
  %v3514 = vmul.f32 %v3370, 0.0078125
  %v3515 = vmul.f32 %v3372, 0.0078125
  %v3516 = vmul.f32 %v3374, 0.0078125
  %v3517 = vmul.f32 %v3376, 0.0078125
  %v3518 = vmul.f32 %v3378, 0.0078125
  %v3519 = vmul.f32 %v3380, 0.0078125
  %v3520 = vmul.f32 %v3382, 0.0078125
  %v3521 = vmul.f32 %v3384, 0.0078125
  %v3522 = vmul.f32 %v3386, 0.0078125
  %v3523 = vmul.f32 %v3388, 0.0078125
  %v3524 = vmul.f32 %v3390, 0.0078125
  %v3525 = vmul.f32 %v3392, 0.0078125
  %v3526 = vmul.f32 %v3394, 0.0078125
  %v3527 = vmul.f32 %v3396, 0.0078125
  %v3528 = vmul.f32 %v3398, 0.0078125
  %v3529 = vmul.f32 %v3400, 0.0078125
  %v3530 = vmul.f32 %v3402, 0.0078125
  %v3531 = vmul.f32 %v3404, 0.0078125
  %v3532 = vmul.f32 %v3406, 0.0078125
  %v3533 = vmul.f32 %v3408, 0.0078125
  %v3534 = vmul.f32 %v3410, 0.0078125
  %v3535 = vmul.f32 %v3412, 0.0078125
  %v3536 = vmul.f32 %v3414, 0.0078125
  %v3537 = vmul.f32 %v3416, 0.0078125
  %v3538 = vmul.f32 %v3418, 0.0078125
  %v3539 = vmul.f32 %v3420, 0.0078125
  %v3540 = vmul.f32 %v3422, 0.0078125
  %v3541 = vmul.f32 %v3424, 0.0078125
  %v3542 = vmul.f32 %v3426, 0.0078125
  %v3543 = vmul.f32 %v3428, 0.0078125
  %v3544 = vmul.f32 %v3430, 0.0078125
  %v3545 = vmul.f32 %v3432, 0.0078125
  %v3546 = vmul.f32 %v3434, 0.0078125
  %v3547 = vmul.f32 %v3436, 0.0078125
  %v3548 = vmul.f32 %v3438, 0.0078125
  %v3549 = vmul.f32 %v3440, 0.0078125
  %v3550 = vmul.f32 %v3442, 0.0078125
  %v3551 = vmul.f32 %v3444, 0.0078125
  %v3552 = vmul.f32 %v3446, 0.0078125
  %v3553 = vmul.f32 %v3448, 0.0078125
  %v3554 = vmul.f32 %v3450, 0.0078125
  %v3555 = vmul.f32 %v3452, 0.0078125
  %v3556 = vmul.f32 %v3454, 0.0078125
  %v3557 = vmul.f32 %v3456, 0.0078125
  %v3558 = vmul.f32 %v3458, 0.0078125
  %v3559 = vmul.f32 %v3460, 0.0078125
  %v3560 = vmul.f32 %v3462, 0.0078125
  %v3561 = vmul.f32 %v3464, 0.0078125
  %v3562 = vmul.f32 %v3466, 0.0078125
  %v3563 = vmul.f32 %v3468, 0.0078125
  %v3564 = vmul.f32 %v3470, 0.0078125
  %v3565 = vmul.f32 %v3472, 0.0078125
  %v3566 = vmul.f32 %v3474, 0.0078125
  %v3567 = vmul.f32 %v3476, 0.0078125
  %v3568 = vmul.f32 %v3478, 0.0078125
  %v3569 = vmul.f32 %v3480, 0.0078125
  %v3570 = vmul.f32 %v3482, 0.0078125
  %v3571 = vmul.f32 %v3484, 0.0078125
  %v3572 = vmul.f32 %v3486, 0.0078125
  %v3573 = vmul.f32 %v3488, 0.0078125
  %v3574 = vmul.f32 %v3490, 0.0078125
  %v3575 = vmul.f32 %v3492, 0.0078125
  %v3576 = vmul.f32 %v3494, 0.0078125
  %v3577 = vmul.f32 %v3496, 0.0078125
  %v3578 = vmul.f32 %v3498, 0.0078125
  %v3579 = vmul.f32 %v3179, %v3179
  %v3580 = vmul.f32 %v3180, %v3180
  %v3581 = vmul.f32 %v3181, %v3181
  %v3582 = vmul.f32 %v3182, %v3182
  %v3583 = vmul.f32 %v3183, %v3183
  %v3584 = vmul.f32 %v3184, %v3184
  %v3585 = vmul.f32 %v3185, %v3185
  %v3586 = vmul.f32 %v3186, %v3186
  %v3587 = vmul.f32 %v3187, %v3187
  %v3588 = vmul.f32 %v3188, %v3188
  %v3589 = vmul.f32 %v3189, %v3189
  %v3590 = vmul.f32 %v3190, %v3190
  %v3591 = vmul.f32 %v3191, %v3191
  %v3592 = vmul.f32 %v3192, %v3192
  %v3593 = vmul.f32 %v3193, %v3193
  %v3594 = vmul.f32 %v3194, %v3194
  %v3595 = vmul.f32 %v3195, %v3195
  %v3596 = vmul.f32 %v3196, %v3196
  %v3597 = vmul.f32 %v3197, %v3197
  %v3598 = vmul.f32 %v3198, %v3198
  %v3599 = vmul.f32 %v3199, %v3199
  %v3600 = vmul.f32 %v3200, %v3200
  %v3601 = vmul.f32 %v3201, %v3201
  %v3602 = vmul.f32 %v3202, %v3202
  %v3603 = vmul.f32 %v3203, %v3203
  %v3604 = vmul.f32 %v3204, %v3204
  %v3605 = vmul.f32 %v3205, %v3205
  %v3606 = vmul.f32 %v3206, %v3206
  %v3607 = vmul.f32 %v3207, %v3207
  %v3608 = vmul.f32 %v3208, %v3208
  %v3609 = vmul.f32 %v3209, %v3209
  %v3610 = vmul.f32 %v3210, %v3210
  %v3611 = vmul.f32 %v3211, %v3211
  %v3612 = vmul.f32 %v3212, %v3212
  %v3613 = vmul.f32 %v3213, %v3213
  %v3614 = vmul.f32 %v3214, %v3214
  %v3615 = vmul.f32 %v3215, %v3215
  %v3616 = vmul.f32 %v3216, %v3216
  %v3617 = vmul.f32 %v3217, %v3217
  %v3618 = vmul.f32 %v3218, %v3218
  %v3619 = vmul.f32 %v3219, %v3219
  %v3620 = vmul.f32 %v3220, %v3220
  %v3621 = vmul.f32 %v3221, %v3221
  %v3622 = vmul.f32 %v3222, %v3222
  %v3623 = vmul.f32 %v3223, %v3223
  %v3624 = vmul.f32 %v3224, %v3224
  %v3625 = vmul.f32 %v3225, %v3225
  %v3626 = vmul.f32 %v3226, %v3226
  %v3627 = vmul.f32 %v3227, %v3227
  %v3628 = vmul.f32 %v3228, %v3228
  %v3629 = vmul.f32 %v3229, %v3229
  %v3630 = vmul.f32 %v3230, %v3230
  %v3631 = vmul.f32 %v3231, %v3231
  %v3632 = vmul.f32 %v3232, %v3232
  %v3633 = vmul.f32 %v3233, %v3233
  %v3634 = vmul.f32 %v3234, %v3234
  %v3635 = vmul.f32 %v3235, %v3235
  %v3636 = vmul.f32 %v3236, %v3236
  %v3637 = vmul.f32 %v3237, %v3237
  %v3638 = vmul.f32 %v3238, %v3238
  %v3639 = vmul.f32 %v3239, %v3239
  %v3640 = vmul.f32 %v3240, %v3240
  %v3641 = vmul.f32 %v3241, %v3241
  %v3642 = vmul.f32 %v3242, %v3242
  %v3643 = vmul.f32 %v3243, %v3243
  %v3644 = vmul.f32 %v3244, %v3244
  %v3645 = vmul.f32 %v3245, %v3245
  %v3646 = vmul.f32 %v3246, %v3246
  %v3647 = vmul.f32 %v3247, %v3247
  %v3648 = vmul.f32 %v3248, %v3248
  %v3649 = vmul.f32 %v3249, %v3249
  %v3650 = vmul.f32 %v3250, %v3250
  %v3651 = vmul.f32 %v3251, %v3251
  %v3652 = vmul.f32 %v3252, %v3252
  %v3653 = vmul.f32 %v3253, %v3253
  %v3654 = vmul.f32 %v3254, %v3254
  %v3655 = vmul.f32 %v3255, %v3255
  %v3656 = vmul.f32 %v3256, %v3256
  %v3657 = vmul.f32 %v3257, %v3257
  %v3658 = vmul.f32 %v3258, %v3258
  %v3659 = vsub.f32 %v3499, %v3579
  %v3660 = vsub.f32 %v3500, %v3580
  %v3661 = vsub.f32 %v3501, %v3581
  %v3662 = vsub.f32 %v3502, %v3582
  %v3663 = vsub.f32 %v3503, %v3583
  %v3664 = vsub.f32 %v3504, %v3584
  %v3665 = vsub.f32 %v3505, %v3585
  %v3666 = vsub.f32 %v3506, %v3586
  %v3667 = vsub.f32 %v3507, %v3587
  %v3668 = vsub.f32 %v3508, %v3588
  %v3669 = vsub.f32 %v3509, %v3589
  %v3670 = vsub.f32 %v3510, %v3590
  %v3671 = vsub.f32 %v3511, %v3591
  %v3672 = vsub.f32 %v3512, %v3592
  %v3673 = vsub.f32 %v3513, %v3593
  %v3674 = vsub.f32 %v3514, %v3594
  %v3675 = vsub.f32 %v3515, %v3595
  %v3676 = vsub.f32 %v3516, %v3596
  %v3677 = vsub.f32 %v3517, %v3597
  %v3678 = vsub.f32 %v3518, %v3598
  %v3679 = vsub.f32 %v3519, %v3599
  %v3680 = vsub.f32 %v3520, %v3600
  %v3681 = vsub.f32 %v3521, %v3601
  %v3682 = vsub.f32 %v3522, %v3602
  %v3683 = vsub.f32 %v3523, %v3603
  %v3684 = vsub.f32 %v3524, %v3604
  %v3685 = vsub.f32 %v3525, %v3605
  %v3686 = vsub.f32 %v3526, %v3606
  %v3687 = vsub.f32 %v3527, %v3607
  %v3688 = vsub.f32 %v3528, %v3608
  %v3689 = vsub.f32 %v3529, %v3609
  %v3690 = vsub.f32 %v3530, %v3610
  %v3691 = vsub.f32 %v3531, %v3611
  %v3692 = vsub.f32 %v3532, %v3612
  %v3693 = vsub.f32 %v3533, %v3613
  %v3694 = vsub.f32 %v3534, %v3614
  %v3695 = vsub.f32 %v3535, %v3615
  %v3696 = vsub.f32 %v3536, %v3616
  %v3697 = vsub.f32 %v3537, %v3617
  %v3698 = vsub.f32 %v3538, %v3618
  %v3699 = vsub.f32 %v3539, %v3619
  %v3700 = vsub.f32 %v3540, %v3620
  %v3701 = vsub.f32 %v3541, %v3621
  %v3702 = vsub.f32 %v3542, %v3622
  %v3703 = vsub.f32 %v3543, %v3623
  %v3704 = vsub.f32 %v3544, %v3624
  %v3705 = vsub.f32 %v3545, %v3625
  %v3706 = vsub.f32 %v3546, %v3626
  %v3707 = vsub.f32 %v3547, %v3627
  %v3708 = vsub.f32 %v3548, %v3628
  %v3709 = vsub.f32 %v3549, %v3629
  %v3710 = vsub.f32 %v3550, %v3630
  %v3711 = vsub.f32 %v3551, %v3631
  %v3712 = vsub.f32 %v3552, %v3632
  %v3713 = vsub.f32 %v3553, %v3633
  %v3714 = vsub.f32 %v3554, %v3634
  %v3715 = vsub.f32 %v3555, %v3635
  %v3716 = vsub.f32 %v3556, %v3636
  %v3717 = vsub.f32 %v3557, %v3637
  %v3718 = vsub.f32 %v3558, %v3638
  %v3719 = vsub.f32 %v3559, %v3639
  %v3720 = vsub.f32 %v3560, %v3640
  %v3721 = vsub.f32 %v3561, %v3641
  %v3722 = vsub.f32 %v3562, %v3642
  %v3723 = vsub.f32 %v3563, %v3643
  %v3724 = vsub.f32 %v3564, %v3644
  %v3725 = vsub.f32 %v3565, %v3645
  %v3726 = vsub.f32 %v3566, %v3646
  %v3727 = vsub.f32 %v3567, %v3647
  %v3728 = vsub.f32 %v3568, %v3648
  %v3729 = vsub.f32 %v3569, %v3649
  %v3730 = vsub.f32 %v3570, %v3650
  %v3731 = vsub.f32 %v3571, %v3651
  %v3732 = vsub.f32 %v3572, %v3652
  %v3733 = vsub.f32 %v3573, %v3653
  %v3734 = vsub.f32 %v3574, %v3654
  %v3735 = vsub.f32 %v3575, %v3655
  %v3736 = vsub.f32 %v3576, %v3656
  %v3737 = vsub.f32 %v3577, %v3657
  %v3738 = vsub.f32 %v3578, %v3658
  %v3739 = vmax.f32 %v3659, 0.0
  %v3740 = vmax.f32 %v3660, 0.0
  %v3741 = vmax.f32 %v3661, 0.0
  %v3742 = vmax.f32 %v3662, 0.0
  %v3743 = vmax.f32 %v3663, 0.0
  %v3744 = vmax.f32 %v3664, 0.0
  %v3745 = vmax.f32 %v3665, 0.0
  %v3746 = vmax.f32 %v3666, 0.0
  %v3747 = vmax.f32 %v3667, 0.0
  %v3748 = vmax.f32 %v3668, 0.0
  %v3749 = vmax.f32 %v3669, 0.0
  %v3750 = vmax.f32 %v3670, 0.0
  %v3751 = vmax.f32 %v3671, 0.0
  %v3752 = vmax.f32 %v3672, 0.0
  %v3753 = vmax.f32 %v3673, 0.0
  %v3754 = vmax.f32 %v3674, 0.0
  %v3755 = vmax.f32 %v3675, 0.0
  %v3756 = vmax.f32 %v3676, 0.0
  %v3757 = vmax.f32 %v3677, 0.0
  %v3758 = vmax.f32 %v3678, 0.0
  %v3759 = vmax.f32 %v3679, 0.0
  %v3760 = vmax.f32 %v3680, 0.0
  %v3761 = vmax.f32 %v3681, 0.0
  %v3762 = vmax.f32 %v3682, 0.0
  %v3763 = vmax.f32 %v3683, 0.0
  %v3764 = vmax.f32 %v3684, 0.0
  %v3765 = vmax.f32 %v3685, 0.0
  %v3766 = vmax.f32 %v3686, 0.0
  %v3767 = vmax.f32 %v3687, 0.0
  %v3768 = vmax.f32 %v3688, 0.0
  %v3769 = vmax.f32 %v3689, 0.0
  %v3770 = vmax.f32 %v3690, 0.0
  %v3771 = vmax.f32 %v3691, 0.0
  %v3772 = vmax.f32 %v3692, 0.0
  %v3773 = vmax.f32 %v3693, 0.0
  %v3774 = vmax.f32 %v3694, 0.0
  %v3775 = vmax.f32 %v3695, 0.0
  %v3776 = vmax.f32 %v3696, 0.0
  %v3777 = vmax.f32 %v3697, 0.0
  %v3778 = vmax.f32 %v3698, 0.0
  %v3779 = vmax.f32 %v3699, 0.0
  %v3780 = vmax.f32 %v3700, 0.0
  %v3781 = vmax.f32 %v3701, 0.0
  %v3782 = vmax.f32 %v3702, 0.0
  %v3783 = vmax.f32 %v3703, 0.0
  %v3784 = vmax.f32 %v3704, 0.0
  %v3785 = vmax.f32 %v3705, 0.0
  %v3786 = vmax.f32 %v3706, 0.0
  %v3787 = vmax.f32 %v3707, 0.0
  %v3788 = vmax.f32 %v3708, 0.0
  %v3789 = vmax.f32 %v3709, 0.0
  %v3790 = vmax.f32 %v3710, 0.0
  %v3791 = vmax.f32 %v3711, 0.0
  %v3792 = vmax.f32 %v3712, 0.0
  %v3793 = vmax.f32 %v3713, 0.0
  %v3794 = vmax.f32 %v3714, 0.0
  %v3795 = vmax.f32 %v3715, 0.0
  %v3796 = vmax.f32 %v3716, 0.0
  %v3797 = vmax.f32 %v3717, 0.0
  %v3798 = vmax.f32 %v3718, 0.0
  %v3799 = vmax.f32 %v3719, 0.0
  %v3800 = vmax.f32 %v3720, 0.0
  %v3801 = vmax.f32 %v3721, 0.0
  %v3802 = vmax.f32 %v3722, 0.0
  %v3803 = vmax.f32 %v3723, 0.0
  %v3804 = vmax.f32 %v3724, 0.0
  %v3805 = vmax.f32 %v3725, 0.0
  %v3806 = vmax.f32 %v3726, 0.0
  %v3807 = vmax.f32 %v3727, 0.0
  %v3808 = vmax.f32 %v3728, 0.0
  %v3809 = vmax.f32 %v3729, 0.0
  %v3810 = vmax.f32 %v3730, 0.0
  %v3811 = vmax.f32 %v3731, 0.0
  %v3812 = vmax.f32 %v3732, 0.0
  %v3813 = vmax.f32 %v3733, 0.0
  %v3814 = vmax.f32 %v3734, 0.0
  %v3815 = vmax.f32 %v3735, 0.0
  %v3816 = vmax.f32 %v3736, 0.0
  %v3817 = vmax.f32 %v3737, 0.0
  %v3818 = vmax.f32 %v3738, 0.0
  %v3819 = vsub.f32 %v2820, %v3179
  %v3820 = vsub.f32 %v2822, %v3180
  %v3821 = vsub.f32 %v2825, %v3181
  %v3822 = vsub.f32 %v2827, %v3182
  %v3823 = vsub.f32 %v2830, %v3183
  %v3824 = vsub.f32 %v2832, %v3184
  %v3825 = vsub.f32 %v2835, %v3185
  %v3826 = vsub.f32 %v2837, %v3186
  %v3827 = vsub.f32 %v2840, %v3187
  %v3828 = vsub.f32 %v2842, %v3188
  %v3829 = vsub.f32 %v2845, %v3189
  %v3830 = vsub.f32 %v2847, %v3190
  %v3831 = vsub.f32 %v2850, %v3191
  %v3832 = vsub.f32 %v2852, %v3192
  %v3833 = vsub.f32 %v2855, %v3193
  %v3834 = vsub.f32 %v2857, %v3194
  %v3835 = vsub.f32 %v2860, %v3195
  %v3836 = vsub.f32 %v2862, %v3196
  %v3837 = vsub.f32 %v2865, %v3197
  %v3838 = vsub.f32 %v2867, %v3198
  %v3839 = vsub.f32 %v2870, %v3199
  %v3840 = vsub.f32 %v2872, %v3200
  %v3841 = vsub.f32 %v2875, %v3201
  %v3842 = vsub.f32 %v2877, %v3202
  %v3843 = vsub.f32 %v2880, %v3203
  %v3844 = vsub.f32 %v2882, %v3204
  %v3845 = vsub.f32 %v2885, %v3205
  %v3846 = vsub.f32 %v2887, %v3206
  %v3847 = vsub.f32 %v2890, %v3207
  %v3848 = vsub.f32 %v2892, %v3208
  %v3849 = vsub.f32 %v2895, %v3209
  %v3850 = vsub.f32 %v2897, %v3210
  %v3851 = vsub.f32 %v2900, %v3211
  %v3852 = vsub.f32 %v2902, %v3212
  %v3853 = vsub.f32 %v2905, %v3213
  %v3854 = vsub.f32 %v2907, %v3214
  %v3855 = vsub.f32 %v2910, %v3215
  %v3856 = vsub.f32 %v2912, %v3216
  %v3857 = vsub.f32 %v2915, %v3217
  %v3858 = vsub.f32 %v2917, %v3218
  %v3859 = vsub.f32 %v2920, %v3219
  %v3860 = vsub.f32 %v2922, %v3220
  %v3861 = vsub.f32 %v2925, %v3221
  %v3862 = vsub.f32 %v2927, %v3222
  %v3863 = vsub.f32 %v2930, %v3223
  %v3864 = vsub.f32 %v2932, %v3224
  %v3865 = vsub.f32 %v2935, %v3225
  %v3866 = vsub.f32 %v2937, %v3226
  %v3867 = vsub.f32 %v2940, %v3227
  %v3868 = vsub.f32 %v2942, %v3228
  %v3869 = vsub.f32 %v2945, %v3229
  %v3870 = vsub.f32 %v2947, %v3230
  %v3871 = vsub.f32 %v2950, %v3231
  %v3872 = vsub.f32 %v2952, %v3232
  %v3873 = vsub.f32 %v2955, %v3233
  %v3874 = vsub.f32 %v2957, %v3234
  %v3875 = vsub.f32 %v2960, %v3235
  %v3876 = vsub.f32 %v2962, %v3236
  %v3877 = vsub.f32 %v2965, %v3237
  %v3878 = vsub.f32 %v2967, %v3238
  %v3879 = vsub.f32 %v2970, %v3239
  %v3880 = vsub.f32 %v2972, %v3240
  %v3881 = vsub.f32 %v2975, %v3241
  %v3882 = vsub.f32 %v2977, %v3242
  %v3883 = vsub.f32 %v2980, %v3243
  %v3884 = vsub.f32 %v2982, %v3244
  %v3885 = vsub.f32 %v2985, %v3245
  %v3886 = vsub.f32 %v2987, %v3246
  %v3887 = vsub.f32 %v2990, %v3247
  %v3888 = vsub.f32 %v2992, %v3248
  %v3889 = vsub.f32 %v2995, %v3249
  %v3890 = vsub.f32 %v2997, %v3250
  %v3891 = vsub.f32 %v3000, %v3251
  %v3892 = vsub.f32 %v3002, %v3252
  %v3893 = vsub.f32 %v3005, %v3253
  %v3894 = vsub.f32 %v3007, %v3254
  %v3895 = vsub.f32 %v3010, %v3255
  %v3896 = vsub.f32 %v3012, %v3256
  %v3897 = vsub.f32 %v3015, %v3257
  %v3898 = vsub.f32 %v3017, %v3258
  %v3899 = vadd.f32 %v3739, 1e-05
  %v3900 = vadd.f32 %v3740, 1e-05
  %v3901 = vadd.f32 %v3741, 1e-05
  %v3902 = vadd.f32 %v3742, 1e-05
  %v3903 = vadd.f32 %v3743, 1e-05
  %v3904 = vadd.f32 %v3744, 1e-05
  %v3905 = vadd.f32 %v3745, 1e-05
  %v3906 = vadd.f32 %v3746, 1e-05
  %v3907 = vadd.f32 %v3747, 1e-05
  %v3908 = vadd.f32 %v3748, 1e-05
  %v3909 = vadd.f32 %v3749, 1e-05
  %v3910 = vadd.f32 %v3750, 1e-05
  %v3911 = vadd.f32 %v3751, 1e-05
  %v3912 = vadd.f32 %v3752, 1e-05
  %v3913 = vadd.f32 %v3753, 1e-05
  %v3914 = vadd.f32 %v3754, 1e-05
  %v3915 = vadd.f32 %v3755, 1e-05
  %v3916 = vadd.f32 %v3756, 1e-05
  %v3917 = vadd.f32 %v3757, 1e-05
  %v3918 = vadd.f32 %v3758, 1e-05
  %v3919 = vadd.f32 %v3759, 1e-05
  %v3920 = vadd.f32 %v3760, 1e-05
  %v3921 = vadd.f32 %v3761, 1e-05
  %v3922 = vadd.f32 %v3762, 1e-05
  %v3923 = vadd.f32 %v3763, 1e-05
  %v3924 = vadd.f32 %v3764, 1e-05
  %v3925 = vadd.f32 %v3765, 1e-05
  %v3926 = vadd.f32 %v3766, 1e-05
  %v3927 = vadd.f32 %v3767, 1e-05
  %v3928 = vadd.f32 %v3768, 1e-05
  %v3929 = vadd.f32 %v3769, 1e-05
  %v3930 = vadd.f32 %v3770, 1e-05
  %v3931 = vadd.f32 %v3771, 1e-05
  %v3932 = vadd.f32 %v3772, 1e-05
  %v3933 = vadd.f32 %v3773, 1e-05
  %v3934 = vadd.f32 %v3774, 1e-05
  %v3935 = vadd.f32 %v3775, 1e-05
  %v3936 = vadd.f32 %v3776, 1e-05
  %v3937 = vadd.f32 %v3777, 1e-05
  %v3938 = vadd.f32 %v3778, 1e-05
  %v3939 = vadd.f32 %v3779, 1e-05
  %v3940 = vadd.f32 %v3780, 1e-05
  %v3941 = vadd.f32 %v3781, 1e-05
  %v3942 = vadd.f32 %v3782, 1e-05
  %v3943 = vadd.f32 %v3783, 1e-05
  %v3944 = vadd.f32 %v3784, 1e-05
  %v3945 = vadd.f32 %v3785, 1e-05
  %v3946 = vadd.f32 %v3786, 1e-05
  %v3947 = vadd.f32 %v3787, 1e-05
  %v3948 = vadd.f32 %v3788, 1e-05
  %v3949 = vadd.f32 %v3789, 1e-05
  %v3950 = vadd.f32 %v3790, 1e-05
  %v3951 = vadd.f32 %v3791, 1e-05
  %v3952 = vadd.f32 %v3792, 1e-05
  %v3953 = vadd.f32 %v3793, 1e-05
  %v3954 = vadd.f32 %v3794, 1e-05
  %v3955 = vadd.f32 %v3795, 1e-05
  %v3956 = vadd.f32 %v3796, 1e-05
  %v3957 = vadd.f32 %v3797, 1e-05
  %v3958 = vadd.f32 %v3798, 1e-05
  %v3959 = vadd.f32 %v3799, 1e-05
  %v3960 = vadd.f32 %v3800, 1e-05
  %v3961 = vadd.f32 %v3801, 1e-05
  %v3962 = vadd.f32 %v3802, 1e-05
  %v3963 = vadd.f32 %v3803, 1e-05
  %v3964 = vadd.f32 %v3804, 1e-05
  %v3965 = vadd.f32 %v3805, 1e-05
  %v3966 = vadd.f32 %v3806, 1e-05
  %v3967 = vadd.f32 %v3807, 1e-05
  %v3968 = vadd.f32 %v3808, 1e-05
  %v3969 = vadd.f32 %v3809, 1e-05
  %v3970 = vadd.f32 %v3810, 1e-05
  %v3971 = vadd.f32 %v3811, 1e-05
  %v3972 = vadd.f32 %v3812, 1e-05
  %v3973 = vadd.f32 %v3813, 1e-05
  %v3974 = vadd.f32 %v3814, 1e-05
  %v3975 = vadd.f32 %v3815, 1e-05
  %v3976 = vadd.f32 %v3816, 1e-05
  %v3977 = vadd.f32 %v3817, 1e-05
  %v3978 = vadd.f32 %v3818, 1e-05
  %v3979 = vrsqrt.pop %v3899
  %v3980 = vmul.f32 %v3979, %v3899
  %v3981 = vmul.f32 %v3980, %v3979
  %v3982 = vmul.f32 0.5, %v3981
  %v3983 = vsub.f32 1.5, %v3982
  %v3984 = vmul.f32 %v3979, %v3983
  %vm3985 = vweird.f32 %v3899
  %vm3986 = vweird.f32 %v3979
  %vm3987 = vmor %vm3985, %vm3986
  %v3988 = vsel %vm3987, %v3979, %v3984
  %v3989 = vrsqrt.pop %v3900
  %v3990 = vmul.f32 %v3989, %v3900
  %v3991 = vmul.f32 %v3990, %v3989
  %v3992 = vmul.f32 0.5, %v3991
  %v3993 = vsub.f32 1.5, %v3992
  %v3994 = vmul.f32 %v3989, %v3993
  %vm3995 = vweird.f32 %v3900
  %vm3996 = vweird.f32 %v3989
  %vm3997 = vmor %vm3995, %vm3996
  %v3998 = vsel %vm3997, %v3989, %v3994
  %v3999 = vrsqrt.pop %v3901
  %v4000 = vmul.f32 %v3999, %v3901
  %v4001 = vmul.f32 %v4000, %v3999
  %v4002 = vmul.f32 0.5, %v4001
  %v4003 = vsub.f32 1.5, %v4002
  %v4004 = vmul.f32 %v3999, %v4003
  %vm4005 = vweird.f32 %v3901
  %vm4006 = vweird.f32 %v3999
  %vm4007 = vmor %vm4005, %vm4006
  %v4008 = vsel %vm4007, %v3999, %v4004
  %v4009 = vrsqrt.pop %v3902
  %v4010 = vmul.f32 %v4009, %v3902
  %v4011 = vmul.f32 %v4010, %v4009
  %v4012 = vmul.f32 0.5, %v4011
  %v4013 = vsub.f32 1.5, %v4012
  %v4014 = vmul.f32 %v4009, %v4013
  %vm4015 = vweird.f32 %v3902
  %vm4016 = vweird.f32 %v4009
  %vm4017 = vmor %vm4015, %vm4016
  %v4018 = vsel %vm4017, %v4009, %v4014
  %v4019 = vrsqrt.pop %v3903
  %v4020 = vmul.f32 %v4019, %v3903
  %v4021 = vmul.f32 %v4020, %v4019
  %v4022 = vmul.f32 0.5, %v4021
  %v4023 = vsub.f32 1.5, %v4022
  %v4024 = vmul.f32 %v4019, %v4023
  %vm4025 = vweird.f32 %v3903
  %vm4026 = vweird.f32 %v4019
  %vm4027 = vmor %vm4025, %vm4026
  %v4028 = vsel %vm4027, %v4019, %v4024
  %v4029 = vrsqrt.pop %v3904
  %v4030 = vmul.f32 %v4029, %v3904
  %v4031 = vmul.f32 %v4030, %v4029
  %v4032 = vmul.f32 0.5, %v4031
  %v4033 = vsub.f32 1.5, %v4032
  %v4034 = vmul.f32 %v4029, %v4033
  %vm4035 = vweird.f32 %v3904
  %vm4036 = vweird.f32 %v4029
  %vm4037 = vmor %vm4035, %vm4036
  %v4038 = vsel %vm4037, %v4029, %v4034
  %v4039 = vrsqrt.pop %v3905
  %v4040 = vmul.f32 %v4039, %v3905
  %v4041 = vmul.f32 %v4040, %v4039
  %v4042 = vmul.f32 0.5, %v4041
  %v4043 = vsub.f32 1.5, %v4042
  %v4044 = vmul.f32 %v4039, %v4043
  %vm4045 = vweird.f32 %v3905
  %vm4046 = vweird.f32 %v4039
  %vm4047 = vmor %vm4045, %vm4046
  %v4048 = vsel %vm4047, %v4039, %v4044
  %v4049 = vrsqrt.pop %v3906
  %v4050 = vmul.f32 %v4049, %v3906
  %v4051 = vmul.f32 %v4050, %v4049
  %v4052 = vmul.f32 0.5, %v4051
  %v4053 = vsub.f32 1.5, %v4052
  %v4054 = vmul.f32 %v4049, %v4053
  %vm4055 = vweird.f32 %v3906
  %vm4056 = vweird.f32 %v4049
  %vm4057 = vmor %vm4055, %vm4056
  %v4058 = vsel %vm4057, %v4049, %v4054
  %v4059 = vrsqrt.pop %v3907
  %v4060 = vmul.f32 %v4059, %v3907
  %v4061 = vmul.f32 %v4060, %v4059
  %v4062 = vmul.f32 0.5, %v4061
  %v4063 = vsub.f32 1.5, %v4062
  %v4064 = vmul.f32 %v4059, %v4063
  %vm4065 = vweird.f32 %v3907
  %vm4066 = vweird.f32 %v4059
  %vm4067 = vmor %vm4065, %vm4066
  %v4068 = vsel %vm4067, %v4059, %v4064
  %v4069 = vrsqrt.pop %v3908
  %v4070 = vmul.f32 %v4069, %v3908
  %v4071 = vmul.f32 %v4070, %v4069
  %v4072 = vmul.f32 0.5, %v4071
  %v4073 = vsub.f32 1.5, %v4072
  %v4074 = vmul.f32 %v4069, %v4073
  %vm4075 = vweird.f32 %v3908
  %vm4076 = vweird.f32 %v4069
  %vm4077 = vmor %vm4075, %vm4076
  %v4078 = vsel %vm4077, %v4069, %v4074
  %v4079 = vrsqrt.pop %v3909
  %v4080 = vmul.f32 %v4079, %v3909
  %v4081 = vmul.f32 %v4080, %v4079
  %v4082 = vmul.f32 0.5, %v4081
  %v4083 = vsub.f32 1.5, %v4082
  %v4084 = vmul.f32 %v4079, %v4083
  %vm4085 = vweird.f32 %v3909
  %vm4086 = vweird.f32 %v4079
  %vm4087 = vmor %vm4085, %vm4086
  %v4088 = vsel %vm4087, %v4079, %v4084
  %v4089 = vrsqrt.pop %v3910
  %v4090 = vmul.f32 %v4089, %v3910
  %v4091 = vmul.f32 %v4090, %v4089
  %v4092 = vmul.f32 0.5, %v4091
  %v4093 = vsub.f32 1.5, %v4092
  %v4094 = vmul.f32 %v4089, %v4093
  %vm4095 = vweird.f32 %v3910
  %vm4096 = vweird.f32 %v4089
  %vm4097 = vmor %vm4095, %vm4096
  %v4098 = vsel %vm4097, %v4089, %v4094
  %v4099 = vrsqrt.pop %v3911
  %v4100 = vmul.f32 %v4099, %v3911
  %v4101 = vmul.f32 %v4100, %v4099
  %v4102 = vmul.f32 0.5, %v4101
  %v4103 = vsub.f32 1.5, %v4102
  %v4104 = vmul.f32 %v4099, %v4103
  %vm4105 = vweird.f32 %v3911
  %vm4106 = vweird.f32 %v4099
  %vm4107 = vmor %vm4105, %vm4106
  %v4108 = vsel %vm4107, %v4099, %v4104
  %v4109 = vrsqrt.pop %v3912
  %v4110 = vmul.f32 %v4109, %v3912
  %v4111 = vmul.f32 %v4110, %v4109
  %v4112 = vmul.f32 0.5, %v4111
  %v4113 = vsub.f32 1.5, %v4112
  %v4114 = vmul.f32 %v4109, %v4113
  %vm4115 = vweird.f32 %v3912
  %vm4116 = vweird.f32 %v4109
  %vm4117 = vmor %vm4115, %vm4116
  %v4118 = vsel %vm4117, %v4109, %v4114
  %v4119 = vrsqrt.pop %v3913
  %v4120 = vmul.f32 %v4119, %v3913
  %v4121 = vmul.f32 %v4120, %v4119
  %v4122 = vmul.f32 0.5, %v4121
  %v4123 = vsub.f32 1.5, %v4122
  %v4124 = vmul.f32 %v4119, %v4123
  %vm4125 = vweird.f32 %v3913
  %vm4126 = vweird.f32 %v4119
  %vm4127 = vmor %vm4125, %vm4126
  %v4128 = vsel %vm4127, %v4119, %v4124
  %v4129 = vrsqrt.pop %v3914
  %v4130 = vmul.f32 %v4129, %v3914
  %v4131 = vmul.f32 %v4130, %v4129
  %v4132 = vmul.f32 0.5, %v4131
  %v4133 = vsub.f32 1.5, %v4132
  %v4134 = vmul.f32 %v4129, %v4133
  %vm4135 = vweird.f32 %v3914
  %vm4136 = vweird.f32 %v4129
  %vm4137 = vmor %vm4135, %vm4136
  %v4138 = vsel %vm4137, %v4129, %v4134
  %v4139 = vrsqrt.pop %v3915
  %v4140 = vmul.f32 %v4139, %v3915
  %v4141 = vmul.f32 %v4140, %v4139
  %v4142 = vmul.f32 0.5, %v4141
  %v4143 = vsub.f32 1.5, %v4142
  %v4144 = vmul.f32 %v4139, %v4143
  %vm4145 = vweird.f32 %v3915
  %vm4146 = vweird.f32 %v4139
  %vm4147 = vmor %vm4145, %vm4146
  %v4148 = vsel %vm4147, %v4139, %v4144
  %v4149 = vrsqrt.pop %v3916
  %v4150 = vmul.f32 %v4149, %v3916
  %v4151 = vmul.f32 %v4150, %v4149
  %v4152 = vmul.f32 0.5, %v4151
  %v4153 = vsub.f32 1.5, %v4152
  %v4154 = vmul.f32 %v4149, %v4153
  %vm4155 = vweird.f32 %v3916
  %vm4156 = vweird.f32 %v4149
  %vm4157 = vmor %vm4155, %vm4156
  %v4158 = vsel %vm4157, %v4149, %v4154
  %v4159 = vrsqrt.pop %v3917
  %v4160 = vmul.f32 %v4159, %v3917
  %v4161 = vmul.f32 %v4160, %v4159
  %v4162 = vmul.f32 0.5, %v4161
  %v4163 = vsub.f32 1.5, %v4162
  %v4164 = vmul.f32 %v4159, %v4163
  %vm4165 = vweird.f32 %v3917
  %vm4166 = vweird.f32 %v4159
  %vm4167 = vmor %vm4165, %vm4166
  %v4168 = vsel %vm4167, %v4159, %v4164
  %v4169 = vrsqrt.pop %v3918
  %v4170 = vmul.f32 %v4169, %v3918
  %v4171 = vmul.f32 %v4170, %v4169
  %v4172 = vmul.f32 0.5, %v4171
  %v4173 = vsub.f32 1.5, %v4172
  %v4174 = vmul.f32 %v4169, %v4173
  %vm4175 = vweird.f32 %v3918
  %vm4176 = vweird.f32 %v4169
  %vm4177 = vmor %vm4175, %vm4176
  %v4178 = vsel %vm4177, %v4169, %v4174
  %v4179 = vrsqrt.pop %v3919
  %v4180 = vmul.f32 %v4179, %v3919
  %v4181 = vmul.f32 %v4180, %v4179
  %v4182 = vmul.f32 0.5, %v4181
  %v4183 = vsub.f32 1.5, %v4182
  %v4184 = vmul.f32 %v4179, %v4183
  %vm4185 = vweird.f32 %v3919
  %vm4186 = vweird.f32 %v4179
  %vm4187 = vmor %vm4185, %vm4186
  %v4188 = vsel %vm4187, %v4179, %v4184
  %v4189 = vrsqrt.pop %v3920
  %v4190 = vmul.f32 %v4189, %v3920
  %v4191 = vmul.f32 %v4190, %v4189
  %v4192 = vmul.f32 0.5, %v4191
  %v4193 = vsub.f32 1.5, %v4192
  %v4194 = vmul.f32 %v4189, %v4193
  %vm4195 = vweird.f32 %v3920
  %vm4196 = vweird.f32 %v4189
  %vm4197 = vmor %vm4195, %vm4196
  %v4198 = vsel %vm4197, %v4189, %v4194
  %v4199 = vrsqrt.pop %v3921
  %v4200 = vmul.f32 %v4199, %v3921
  %v4201 = vmul.f32 %v4200, %v4199
  %v4202 = vmul.f32 0.5, %v4201
  %v4203 = vsub.f32 1.5, %v4202
  %v4204 = vmul.f32 %v4199, %v4203
  %vm4205 = vweird.f32 %v3921
  %vm4206 = vweird.f32 %v4199
  %vm4207 = vmor %vm4205, %vm4206
  %v4208 = vsel %vm4207, %v4199, %v4204
  %v4209 = vrsqrt.pop %v3922
  %v4210 = vmul.f32 %v4209, %v3922
  %v4211 = vmul.f32 %v4210, %v4209
  %v4212 = vmul.f32 0.5, %v4211
  %v4213 = vsub.f32 1.5, %v4212
  %v4214 = vmul.f32 %v4209, %v4213
  %vm4215 = vweird.f32 %v3922
  %vm4216 = vweird.f32 %v4209
  %vm4217 = vmor %vm4215, %vm4216
  %v4218 = vsel %vm4217, %v4209, %v4214
  %v4219 = vrsqrt.pop %v3923
  %v4220 = vmul.f32 %v4219, %v3923
  %v4221 = vmul.f32 %v4220, %v4219
  %v4222 = vmul.f32 0.5, %v4221
  %v4223 = vsub.f32 1.5, %v4222
  %v4224 = vmul.f32 %v4219, %v4223
  %vm4225 = vweird.f32 %v3923
  %vm4226 = vweird.f32 %v4219
  %vm4227 = vmor %vm4225, %vm4226
  %v4228 = vsel %vm4227, %v4219, %v4224
  %v4229 = vrsqrt.pop %v3924
  %v4230 = vmul.f32 %v4229, %v3924
  %v4231 = vmul.f32 %v4230, %v4229
  %v4232 = vmul.f32 0.5, %v4231
  %v4233 = vsub.f32 1.5, %v4232
  %v4234 = vmul.f32 %v4229, %v4233
  %vm4235 = vweird.f32 %v3924
  %vm4236 = vweird.f32 %v4229
  %vm4237 = vmor %vm4235, %vm4236
  %v4238 = vsel %vm4237, %v4229, %v4234
  %v4239 = vrsqrt.pop %v3925
  %v4240 = vmul.f32 %v4239, %v3925
  %v4241 = vmul.f32 %v4240, %v4239
  %v4242 = vmul.f32 0.5, %v4241
  %v4243 = vsub.f32 1.5, %v4242
  %v4244 = vmul.f32 %v4239, %v4243
  %vm4245 = vweird.f32 %v3925
  %vm4246 = vweird.f32 %v4239
  %vm4247 = vmor %vm4245, %vm4246
  %v4248 = vsel %vm4247, %v4239, %v4244
  %v4249 = vrsqrt.pop %v3926
  %v4250 = vmul.f32 %v4249, %v3926
  %v4251 = vmul.f32 %v4250, %v4249
  %v4252 = vmul.f32 0.5, %v4251
  %v4253 = vsub.f32 1.5, %v4252
  %v4254 = vmul.f32 %v4249, %v4253
  %vm4255 = vweird.f32 %v3926
  %vm4256 = vweird.f32 %v4249
  %vm4257 = vmor %vm4255, %vm4256
  %v4258 = vsel %vm4257, %v4249, %v4254
  %v4259 = vrsqrt.pop %v3927
  %v4260 = vmul.f32 %v4259, %v3927
  %v4261 = vmul.f32 %v4260, %v4259
  %v4262 = vmul.f32 0.5, %v4261
  %v4263 = vsub.f32 1.5, %v4262
  %v4264 = vmul.f32 %v4259, %v4263
  %vm4265 = vweird.f32 %v3927
  %vm4266 = vweird.f32 %v4259
  %vm4267 = vmor %vm4265, %vm4266
  %v4268 = vsel %vm4267, %v4259, %v4264
  %v4269 = vrsqrt.pop %v3928
  %v4270 = vmul.f32 %v4269, %v3928
  %v4271 = vmul.f32 %v4270, %v4269
  %v4272 = vmul.f32 0.5, %v4271
  %v4273 = vsub.f32 1.5, %v4272
  %v4274 = vmul.f32 %v4269, %v4273
  %vm4275 = vweird.f32 %v3928
  %vm4276 = vweird.f32 %v4269
  %vm4277 = vmor %vm4275, %vm4276
  %v4278 = vsel %vm4277, %v4269, %v4274
  %v4279 = vrsqrt.pop %v3929
  %v4280 = vmul.f32 %v4279, %v3929
  %v4281 = vmul.f32 %v4280, %v4279
  %v4282 = vmul.f32 0.5, %v4281
  %v4283 = vsub.f32 1.5, %v4282
  %v4284 = vmul.f32 %v4279, %v4283
  %vm4285 = vweird.f32 %v3929
  %vm4286 = vweird.f32 %v4279
  %vm4287 = vmor %vm4285, %vm4286
  %v4288 = vsel %vm4287, %v4279, %v4284
  %v4289 = vrsqrt.pop %v3930
  %v4290 = vmul.f32 %v4289, %v3930
  %v4291 = vmul.f32 %v4290, %v4289
  %v4292 = vmul.f32 0.5, %v4291
  %v4293 = vsub.f32 1.5, %v4292
  %v4294 = vmul.f32 %v4289, %v4293
  %vm4295 = vweird.f32 %v3930
  %vm4296 = vweird.f32 %v4289
  %vm4297 = vmor %vm4295, %vm4296
  %v4298 = vsel %vm4297, %v4289, %v4294
  %v4299 = vrsqrt.pop %v3931
  %v4300 = vmul.f32 %v4299, %v3931
  %v4301 = vmul.f32 %v4300, %v4299
  %v4302 = vmul.f32 0.5, %v4301
  %v4303 = vsub.f32 1.5, %v4302
  %v4304 = vmul.f32 %v4299, %v4303
  %vm4305 = vweird.f32 %v3931
  %vm4306 = vweird.f32 %v4299
  %vm4307 = vmor %vm4305, %vm4306
  %v4308 = vsel %vm4307, %v4299, %v4304
  %v4309 = vrsqrt.pop %v3932
  %v4310 = vmul.f32 %v4309, %v3932
  %v4311 = vmul.f32 %v4310, %v4309
  %v4312 = vmul.f32 0.5, %v4311
  %v4313 = vsub.f32 1.5, %v4312
  %v4314 = vmul.f32 %v4309, %v4313
  %vm4315 = vweird.f32 %v3932
  %vm4316 = vweird.f32 %v4309
  %vm4317 = vmor %vm4315, %vm4316
  %v4318 = vsel %vm4317, %v4309, %v4314
  %v4319 = vrsqrt.pop %v3933
  %v4320 = vmul.f32 %v4319, %v3933
  %v4321 = vmul.f32 %v4320, %v4319
  %v4322 = vmul.f32 0.5, %v4321
  %v4323 = vsub.f32 1.5, %v4322
  %v4324 = vmul.f32 %v4319, %v4323
  %vm4325 = vweird.f32 %v3933
  %vm4326 = vweird.f32 %v4319
  %vm4327 = vmor %vm4325, %vm4326
  %v4328 = vsel %vm4327, %v4319, %v4324
  %v4329 = vrsqrt.pop %v3934
  %v4330 = vmul.f32 %v4329, %v3934
  %v4331 = vmul.f32 %v4330, %v4329
  %v4332 = vmul.f32 0.5, %v4331
  %v4333 = vsub.f32 1.5, %v4332
  %v4334 = vmul.f32 %v4329, %v4333
  %vm4335 = vweird.f32 %v3934
  %vm4336 = vweird.f32 %v4329
  %vm4337 = vmor %vm4335, %vm4336
  %v4338 = vsel %vm4337, %v4329, %v4334
  %v4339 = vrsqrt.pop %v3935
  %v4340 = vmul.f32 %v4339, %v3935
  %v4341 = vmul.f32 %v4340, %v4339
  %v4342 = vmul.f32 0.5, %v4341
  %v4343 = vsub.f32 1.5, %v4342
  %v4344 = vmul.f32 %v4339, %v4343
  %vm4345 = vweird.f32 %v3935
  %vm4346 = vweird.f32 %v4339
  %vm4347 = vmor %vm4345, %vm4346
  %v4348 = vsel %vm4347, %v4339, %v4344
  %v4349 = vrsqrt.pop %v3936
  %v4350 = vmul.f32 %v4349, %v3936
  %v4351 = vmul.f32 %v4350, %v4349
  %v4352 = vmul.f32 0.5, %v4351
  %v4353 = vsub.f32 1.5, %v4352
  %v4354 = vmul.f32 %v4349, %v4353
  %vm4355 = vweird.f32 %v3936
  %vm4356 = vweird.f32 %v4349
  %vm4357 = vmor %vm4355, %vm4356
  %v4358 = vsel %vm4357, %v4349, %v4354
  %v4359 = vrsqrt.pop %v3937
  %v4360 = vmul.f32 %v4359, %v3937
  %v4361 = vmul.f32 %v4360, %v4359
  %v4362 = vmul.f32 0.5, %v4361
  %v4363 = vsub.f32 1.5, %v4362
  %v4364 = vmul.f32 %v4359, %v4363
  %vm4365 = vweird.f32 %v3937
  %vm4366 = vweird.f32 %v4359
  %vm4367 = vmor %vm4365, %vm4366
  %v4368 = vsel %vm4367, %v4359, %v4364
  %v4369 = vrsqrt.pop %v3938
  %v4370 = vmul.f32 %v4369, %v3938
  %v4371 = vmul.f32 %v4370, %v4369
  %v4372 = vmul.f32 0.5, %v4371
  %v4373 = vsub.f32 1.5, %v4372
  %v4374 = vmul.f32 %v4369, %v4373
  %vm4375 = vweird.f32 %v3938
  %vm4376 = vweird.f32 %v4369
  %vm4377 = vmor %vm4375, %vm4376
  %v4378 = vsel %vm4377, %v4369, %v4374
  %v4379 = vrsqrt.pop %v3939
  %v4380 = vmul.f32 %v4379, %v3939
  %v4381 = vmul.f32 %v4380, %v4379
  %v4382 = vmul.f32 0.5, %v4381
  %v4383 = vsub.f32 1.5, %v4382
  %v4384 = vmul.f32 %v4379, %v4383
  %vm4385 = vweird.f32 %v3939
  %vm4386 = vweird.f32 %v4379
  %vm4387 = vmor %vm4385, %vm4386
  %v4388 = vsel %vm4387, %v4379, %v4384
  %v4389 = vrsqrt.pop %v3940
  %v4390 = vmul.f32 %v4389, %v3940
  %v4391 = vmul.f32 %v4390, %v4389
  %v4392 = vmul.f32 0.5, %v4391
  %v4393 = vsub.f32 1.5, %v4392
  %v4394 = vmul.f32 %v4389, %v4393
  %vm4395 = vweird.f32 %v3940
  %vm4396 = vweird.f32 %v4389
  %vm4397 = vmor %vm4395, %vm4396
  %v4398 = vsel %vm4397, %v4389, %v4394
  %v4399 = vrsqrt.pop %v3941
  %v4400 = vmul.f32 %v4399, %v3941
  %v4401 = vmul.f32 %v4400, %v4399
  %v4402 = vmul.f32 0.5, %v4401
  %v4403 = vsub.f32 1.5, %v4402
  %v4404 = vmul.f32 %v4399, %v4403
  %vm4405 = vweird.f32 %v3941
  %vm4406 = vweird.f32 %v4399
  %vm4407 = vmor %vm4405, %vm4406
  %v4408 = vsel %vm4407, %v4399, %v4404
  %v4409 = vrsqrt.pop %v3942
  %v4410 = vmul.f32 %v4409, %v3942
  %v4411 = vmul.f32 %v4410, %v4409
  %v4412 = vmul.f32 0.5, %v4411
  %v4413 = vsub.f32 1.5, %v4412
  %v4414 = vmul.f32 %v4409, %v4413
  %vm4415 = vweird.f32 %v3942
  %vm4416 = vweird.f32 %v4409
  %vm4417 = vmor %vm4415, %vm4416
  %v4418 = vsel %vm4417, %v4409, %v4414
  %v4419 = vrsqrt.pop %v3943
  %v4420 = vmul.f32 %v4419, %v3943
  %v4421 = vmul.f32 %v4420, %v4419
  %v4422 = vmul.f32 0.5, %v4421
  %v4423 = vsub.f32 1.5, %v4422
  %v4424 = vmul.f32 %v4419, %v4423
  %vm4425 = vweird.f32 %v3943
  %vm4426 = vweird.f32 %v4419
  %vm4427 = vmor %vm4425, %vm4426
  %v4428 = vsel %vm4427, %v4419, %v4424
  %v4429 = vrsqrt.pop %v3944
  %v4430 = vmul.f32 %v4429, %v3944
  %v4431 = vmul.f32 %v4430, %v4429
  %v4432 = vmul.f32 0.5, %v4431
  %v4433 = vsub.f32 1.5, %v4432
  %v4434 = vmul.f32 %v4429, %v4433
  %vm4435 = vweird.f32 %v3944
  %vm4436 = vweird.f32 %v4429
  %vm4437 = vmor %vm4435, %vm4436
  %v4438 = vsel %vm4437, %v4429, %v4434
  %v4439 = vrsqrt.pop %v3945
  %v4440 = vmul.f32 %v4439, %v3945
  %v4441 = vmul.f32 %v4440, %v4439
  %v4442 = vmul.f32 0.5, %v4441
  %v4443 = vsub.f32 1.5, %v4442
  %v4444 = vmul.f32 %v4439, %v4443
  %vm4445 = vweird.f32 %v3945
  %vm4446 = vweird.f32 %v4439
  %vm4447 = vmor %vm4445, %vm4446
  %v4448 = vsel %vm4447, %v4439, %v4444
  %v4449 = vrsqrt.pop %v3946
  %v4450 = vmul.f32 %v4449, %v3946
  %v4451 = vmul.f32 %v4450, %v4449
  %v4452 = vmul.f32 0.5, %v4451
  %v4453 = vsub.f32 1.5, %v4452
  %v4454 = vmul.f32 %v4449, %v4453
  %vm4455 = vweird.f32 %v3946
  %vm4456 = vweird.f32 %v4449
  %vm4457 = vmor %vm4455, %vm4456
  %v4458 = vsel %vm4457, %v4449, %v4454
  %v4459 = vrsqrt.pop %v3947
  %v4460 = vmul.f32 %v4459, %v3947
  %v4461 = vmul.f32 %v4460, %v4459
  %v4462 = vmul.f32 0.5, %v4461
  %v4463 = vsub.f32 1.5, %v4462
  %v4464 = vmul.f32 %v4459, %v4463
  %vm4465 = vweird.f32 %v3947
  %vm4466 = vweird.f32 %v4459
  %vm4467 = vmor %vm4465, %vm4466
  %v4468 = vsel %vm4467, %v4459, %v4464
  %v4469 = vrsqrt.pop %v3948
  %v4470 = vmul.f32 %v4469, %v3948
  %v4471 = vmul.f32 %v4470, %v4469
  %v4472 = vmul.f32 0.5, %v4471
  %v4473 = vsub.f32 1.5, %v4472
  %v4474 = vmul.f32 %v4469, %v4473
  %vm4475 = vweird.f32 %v3948
  %vm4476 = vweird.f32 %v4469
  %vm4477 = vmor %vm4475, %vm4476
  %v4478 = vsel %vm4477, %v4469, %v4474
  %v4479 = vrsqrt.pop %v3949
  %v4480 = vmul.f32 %v4479, %v3949
  %v4481 = vmul.f32 %v4480, %v4479
  %v4482 = vmul.f32 0.5, %v4481
  %v4483 = vsub.f32 1.5, %v4482
  %v4484 = vmul.f32 %v4479, %v4483
  %vm4485 = vweird.f32 %v3949
  %vm4486 = vweird.f32 %v4479
  %vm4487 = vmor %vm4485, %vm4486
  %v4488 = vsel %vm4487, %v4479, %v4484
  %v4489 = vrsqrt.pop %v3950
  %v4490 = vmul.f32 %v4489, %v3950
  %v4491 = vmul.f32 %v4490, %v4489
  %v4492 = vmul.f32 0.5, %v4491
  %v4493 = vsub.f32 1.5, %v4492
  %v4494 = vmul.f32 %v4489, %v4493
  %vm4495 = vweird.f32 %v3950
  %vm4496 = vweird.f32 %v4489
  %vm4497 = vmor %vm4495, %vm4496
  %v4498 = vsel %vm4497, %v4489, %v4494
  %v4499 = vrsqrt.pop %v3951
  %v4500 = vmul.f32 %v4499, %v3951
  %v4501 = vmul.f32 %v4500, %v4499
  %v4502 = vmul.f32 0.5, %v4501
  %v4503 = vsub.f32 1.5, %v4502
  %v4504 = vmul.f32 %v4499, %v4503
  %vm4505 = vweird.f32 %v3951
  %vm4506 = vweird.f32 %v4499
  %vm4507 = vmor %vm4505, %vm4506
  %v4508 = vsel %vm4507, %v4499, %v4504
  %v4509 = vrsqrt.pop %v3952
  %v4510 = vmul.f32 %v4509, %v3952
  %v4511 = vmul.f32 %v4510, %v4509
  %v4512 = vmul.f32 0.5, %v4511
  %v4513 = vsub.f32 1.5, %v4512
  %v4514 = vmul.f32 %v4509, %v4513
  %vm4515 = vweird.f32 %v3952
  %vm4516 = vweird.f32 %v4509
  %vm4517 = vmor %vm4515, %vm4516
  %v4518 = vsel %vm4517, %v4509, %v4514
  %v4519 = vrsqrt.pop %v3953
  %v4520 = vmul.f32 %v4519, %v3953
  %v4521 = vmul.f32 %v4520, %v4519
  %v4522 = vmul.f32 0.5, %v4521
  %v4523 = vsub.f32 1.5, %v4522
  %v4524 = vmul.f32 %v4519, %v4523
  %vm4525 = vweird.f32 %v3953
  %vm4526 = vweird.f32 %v4519
  %vm4527 = vmor %vm4525, %vm4526
  %v4528 = vsel %vm4527, %v4519, %v4524
  %v4529 = vrsqrt.pop %v3954
  %v4530 = vmul.f32 %v4529, %v3954
  %v4531 = vmul.f32 %v4530, %v4529
  %v4532 = vmul.f32 0.5, %v4531
  %v4533 = vsub.f32 1.5, %v4532
  %v4534 = vmul.f32 %v4529, %v4533
  %vm4535 = vweird.f32 %v3954
  %vm4536 = vweird.f32 %v4529
  %vm4537 = vmor %vm4535, %vm4536
  %v4538 = vsel %vm4537, %v4529, %v4534
  %v4539 = vrsqrt.pop %v3955
  %v4540 = vmul.f32 %v4539, %v3955
  %v4541 = vmul.f32 %v4540, %v4539
  %v4542 = vmul.f32 0.5, %v4541
  %v4543 = vsub.f32 1.5, %v4542
  %v4544 = vmul.f32 %v4539, %v4543
  %vm4545 = vweird.f32 %v3955
  %vm4546 = vweird.f32 %v4539
  %vm4547 = vmor %vm4545, %vm4546
  %v4548 = vsel %vm4547, %v4539, %v4544
  %v4549 = vrsqrt.pop %v3956
  %v4550 = vmul.f32 %v4549, %v3956
  %v4551 = vmul.f32 %v4550, %v4549
  %v4552 = vmul.f32 0.5, %v4551
  %v4553 = vsub.f32 1.5, %v4552
  %v4554 = vmul.f32 %v4549, %v4553
  %vm4555 = vweird.f32 %v3956
  %vm4556 = vweird.f32 %v4549
  %vm4557 = vmor %vm4555, %vm4556
  %v4558 = vsel %vm4557, %v4549, %v4554
  %v4559 = vrsqrt.pop %v3957
  %v4560 = vmul.f32 %v4559, %v3957
  %v4561 = vmul.f32 %v4560, %v4559
  %v4562 = vmul.f32 0.5, %v4561
  %v4563 = vsub.f32 1.5, %v4562
  %v4564 = vmul.f32 %v4559, %v4563
  %vm4565 = vweird.f32 %v3957
  %vm4566 = vweird.f32 %v4559
  %vm4567 = vmor %vm4565, %vm4566
  %v4568 = vsel %vm4567, %v4559, %v4564
  %v4569 = vrsqrt.pop %v3958
  %v4570 = vmul.f32 %v4569, %v3958
  %v4571 = vmul.f32 %v4570, %v4569
  %v4572 = vmul.f32 0.5, %v4571
  %v4573 = vsub.f32 1.5, %v4572
  %v4574 = vmul.f32 %v4569, %v4573
  %vm4575 = vweird.f32 %v3958
  %vm4576 = vweird.f32 %v4569
  %vm4577 = vmor %vm4575, %vm4576
  %v4578 = vsel %vm4577, %v4569, %v4574
  %v4579 = vrsqrt.pop %v3959
  %v4580 = vmul.f32 %v4579, %v3959
  %v4581 = vmul.f32 %v4580, %v4579
  %v4582 = vmul.f32 0.5, %v4581
  %v4583 = vsub.f32 1.5, %v4582
  %v4584 = vmul.f32 %v4579, %v4583
  %vm4585 = vweird.f32 %v3959
  %vm4586 = vweird.f32 %v4579
  %vm4587 = vmor %vm4585, %vm4586
  %v4588 = vsel %vm4587, %v4579, %v4584
  %v4589 = vrsqrt.pop %v3960
  %v4590 = vmul.f32 %v4589, %v3960
  %v4591 = vmul.f32 %v4590, %v4589
  %v4592 = vmul.f32 0.5, %v4591
  %v4593 = vsub.f32 1.5, %v4592
  %v4594 = vmul.f32 %v4589, %v4593
  %vm4595 = vweird.f32 %v3960
  %vm4596 = vweird.f32 %v4589
  %vm4597 = vmor %vm4595, %vm4596
  %v4598 = vsel %vm4597, %v4589, %v4594
  %v4599 = vrsqrt.pop %v3961
  %v4600 = vmul.f32 %v4599, %v3961
  %v4601 = vmul.f32 %v4600, %v4599
  %v4602 = vmul.f32 0.5, %v4601
  %v4603 = vsub.f32 1.5, %v4602
  %v4604 = vmul.f32 %v4599, %v4603
  %vm4605 = vweird.f32 %v3961
  %vm4606 = vweird.f32 %v4599
  %vm4607 = vmor %vm4605, %vm4606
  %v4608 = vsel %vm4607, %v4599, %v4604
  %v4609 = vrsqrt.pop %v3962
  %v4610 = vmul.f32 %v4609, %v3962
  %v4611 = vmul.f32 %v4610, %v4609
  %v4612 = vmul.f32 0.5, %v4611
  %v4613 = vsub.f32 1.5, %v4612
  %v4614 = vmul.f32 %v4609, %v4613
  %vm4615 = vweird.f32 %v3962
  %vm4616 = vweird.f32 %v4609
  %vm4617 = vmor %vm4615, %vm4616
  %v4618 = vsel %vm4617, %v4609, %v4614
  %v4619 = vrsqrt.pop %v3963
  %v4620 = vmul.f32 %v4619, %v3963
  %v4621 = vmul.f32 %v4620, %v4619
  %v4622 = vmul.f32 0.5, %v4621
  %v4623 = vsub.f32 1.5, %v4622
  %v4624 = vmul.f32 %v4619, %v4623
  %vm4625 = vweird.f32 %v3963
  %vm4626 = vweird.f32 %v4619
  %vm4627 = vmor %vm4625, %vm4626
  %v4628 = vsel %vm4627, %v4619, %v4624
  %v4629 = vrsqrt.pop %v3964
  %v4630 = vmul.f32 %v4629, %v3964
  %v4631 = vmul.f32 %v4630, %v4629
  %v4632 = vmul.f32 0.5, %v4631
  %v4633 = vsub.f32 1.5, %v4632
  %v4634 = vmul.f32 %v4629, %v4633
  %vm4635 = vweird.f32 %v3964
  %vm4636 = vweird.f32 %v4629
  %vm4637 = vmor %vm4635, %vm4636
  %v4638 = vsel %vm4637, %v4629, %v4634
  %v4639 = vrsqrt.pop %v3965
  %v4640 = vmul.f32 %v4639, %v3965
  %v4641 = vmul.f32 %v4640, %v4639
  %v4642 = vmul.f32 0.5, %v4641
  %v4643 = vsub.f32 1.5, %v4642
  %v4644 = vmul.f32 %v4639, %v4643
  %vm4645 = vweird.f32 %v3965
  %vm4646 = vweird.f32 %v4639
  %vm4647 = vmor %vm4645, %vm4646
  %v4648 = vsel %vm4647, %v4639, %v4644
  %v4649 = vrsqrt.pop %v3966
  %v4650 = vmul.f32 %v4649, %v3966
  %v4651 = vmul.f32 %v4650, %v4649
  %v4652 = vmul.f32 0.5, %v4651
  %v4653 = vsub.f32 1.5, %v4652
  %v4654 = vmul.f32 %v4649, %v4653
  %vm4655 = vweird.f32 %v3966
  %vm4656 = vweird.f32 %v4649
  %vm4657 = vmor %vm4655, %vm4656
  %v4658 = vsel %vm4657, %v4649, %v4654
  %v4659 = vrsqrt.pop %v3967
  %v4660 = vmul.f32 %v4659, %v3967
  %v4661 = vmul.f32 %v4660, %v4659
  %v4662 = vmul.f32 0.5, %v4661
  %v4663 = vsub.f32 1.5, %v4662
  %v4664 = vmul.f32 %v4659, %v4663
  %vm4665 = vweird.f32 %v3967
  %vm4666 = vweird.f32 %v4659
  %vm4667 = vmor %vm4665, %vm4666
  %v4668 = vsel %vm4667, %v4659, %v4664
  %v4669 = vrsqrt.pop %v3968
  %v4670 = vmul.f32 %v4669, %v3968
  %v4671 = vmul.f32 %v4670, %v4669
  %v4672 = vmul.f32 0.5, %v4671
  %v4673 = vsub.f32 1.5, %v4672
  %v4674 = vmul.f32 %v4669, %v4673
  %vm4675 = vweird.f32 %v3968
  %vm4676 = vweird.f32 %v4669
  %vm4677 = vmor %vm4675, %vm4676
  %v4678 = vsel %vm4677, %v4669, %v4674
  %v4679 = vrsqrt.pop %v3969
  %v4680 = vmul.f32 %v4679, %v3969
  %v4681 = vmul.f32 %v4680, %v4679
  %v4682 = vmul.f32 0.5, %v4681
  %v4683 = vsub.f32 1.5, %v4682
  %v4684 = vmul.f32 %v4679, %v4683
  %vm4685 = vweird.f32 %v3969
  %vm4686 = vweird.f32 %v4679
  %vm4687 = vmor %vm4685, %vm4686
  %v4688 = vsel %vm4687, %v4679, %v4684
  %v4689 = vrsqrt.pop %v3970
  %v4690 = vmul.f32 %v4689, %v3970
  %v4691 = vmul.f32 %v4690, %v4689
  %v4692 = vmul.f32 0.5, %v4691
  %v4693 = vsub.f32 1.5, %v4692
  %v4694 = vmul.f32 %v4689, %v4693
  %vm4695 = vweird.f32 %v3970
  %vm4696 = vweird.f32 %v4689
  %vm4697 = vmor %vm4695, %vm4696
  %v4698 = vsel %vm4697, %v4689, %v4694
  %v4699 = vrsqrt.pop %v3971
  %v4700 = vmul.f32 %v4699, %v3971
  %v4701 = vmul.f32 %v4700, %v4699
  %v4702 = vmul.f32 0.5, %v4701
  %v4703 = vsub.f32 1.5, %v4702
  %v4704 = vmul.f32 %v4699, %v4703
  %vm4705 = vweird.f32 %v3971
  %vm4706 = vweird.f32 %v4699
  %vm4707 = vmor %vm4705, %vm4706
  %v4708 = vsel %vm4707, %v4699, %v4704
  %v4709 = vrsqrt.pop %v3972
  %v4710 = vmul.f32 %v4709, %v3972
  %v4711 = vmul.f32 %v4710, %v4709
  %v4712 = vmul.f32 0.5, %v4711
  %v4713 = vsub.f32 1.5, %v4712
  %v4714 = vmul.f32 %v4709, %v4713
  %vm4715 = vweird.f32 %v3972
  %vm4716 = vweird.f32 %v4709
  %vm4717 = vmor %vm4715, %vm4716
  %v4718 = vsel %vm4717, %v4709, %v4714
  %v4719 = vrsqrt.pop %v3973
  %v4720 = vmul.f32 %v4719, %v3973
  %v4721 = vmul.f32 %v4720, %v4719
  %v4722 = vmul.f32 0.5, %v4721
  %v4723 = vsub.f32 1.5, %v4722
  %v4724 = vmul.f32 %v4719, %v4723
  %vm4725 = vweird.f32 %v3973
  %vm4726 = vweird.f32 %v4719
  %vm4727 = vmor %vm4725, %vm4726
  %v4728 = vsel %vm4727, %v4719, %v4724
  %v4729 = vrsqrt.pop %v3974
  %v4730 = vmul.f32 %v4729, %v3974
  %v4731 = vmul.f32 %v4730, %v4729
  %v4732 = vmul.f32 0.5, %v4731
  %v4733 = vsub.f32 1.5, %v4732
  %v4734 = vmul.f32 %v4729, %v4733
  %vm4735 = vweird.f32 %v3974
  %vm4736 = vweird.f32 %v4729
  %vm4737 = vmor %vm4735, %vm4736
  %v4738 = vsel %vm4737, %v4729, %v4734
  %v4739 = vrsqrt.pop %v3975
  %v4740 = vmul.f32 %v4739, %v3975
  %v4741 = vmul.f32 %v4740, %v4739
  %v4742 = vmul.f32 0.5, %v4741
  %v4743 = vsub.f32 1.5, %v4742
  %v4744 = vmul.f32 %v4739, %v4743
  %vm4745 = vweird.f32 %v3975
  %vm4746 = vweird.f32 %v4739
  %vm4747 = vmor %vm4745, %vm4746
  %v4748 = vsel %vm4747, %v4739, %v4744
  %v4749 = vrsqrt.pop %v3976
  %v4750 = vmul.f32 %v4749, %v3976
  %v4751 = vmul.f32 %v4750, %v4749
  %v4752 = vmul.f32 0.5, %v4751
  %v4753 = vsub.f32 1.5, %v4752
  %v4754 = vmul.f32 %v4749, %v4753
  %vm4755 = vweird.f32 %v3976
  %vm4756 = vweird.f32 %v4749
  %vm4757 = vmor %vm4755, %vm4756
  %v4758 = vsel %vm4757, %v4749, %v4754
  %v4759 = vrsqrt.pop %v3977
  %v4760 = vmul.f32 %v4759, %v3977
  %v4761 = vmul.f32 %v4760, %v4759
  %v4762 = vmul.f32 0.5, %v4761
  %v4763 = vsub.f32 1.5, %v4762
  %v4764 = vmul.f32 %v4759, %v4763
  %vm4765 = vweird.f32 %v3977
  %vm4766 = vweird.f32 %v4759
  %vm4767 = vmor %vm4765, %vm4766
  %v4768 = vsel %vm4767, %v4759, %v4764
  %v4769 = vrsqrt.pop %v3978
  %v4770 = vmul.f32 %v4769, %v3978
  %v4771 = vmul.f32 %v4770, %v4769
  %v4772 = vmul.f32 0.5, %v4771
  %v4773 = vsub.f32 1.5, %v4772
  %v4774 = vmul.f32 %v4769, %v4773
  %vm4775 = vweird.f32 %v3978
  %vm4776 = vweird.f32 %v4769
  %vm4777 = vmor %vm4775, %vm4776
  %v4778 = vsel %vm4777, %v4769, %v4774
  %v4779 = vmul.f32 %v3819, %v3988
  %v4780 = vmul.f32 %v3820, %v3998
  %v4781 = vmul.f32 %v3821, %v4008
  %v4782 = vmul.f32 %v3822, %v4018
  %v4783 = vmul.f32 %v3823, %v4028
  %v4784 = vmul.f32 %v3824, %v4038
  %v4785 = vmul.f32 %v3825, %v4048
  %v4786 = vmul.f32 %v3826, %v4058
  %v4787 = vmul.f32 %v3827, %v4068
  %v4788 = vmul.f32 %v3828, %v4078
  %v4789 = vmul.f32 %v3829, %v4088
  %v4790 = vmul.f32 %v3830, %v4098
  %v4791 = vmul.f32 %v3831, %v4108
  %v4792 = vmul.f32 %v3832, %v4118
  %v4793 = vmul.f32 %v3833, %v4128
  %v4794 = vmul.f32 %v3834, %v4138
  %v4795 = vmul.f32 %v3835, %v4148
  %v4796 = vmul.f32 %v3836, %v4158
  %v4797 = vmul.f32 %v3837, %v4168
  %v4798 = vmul.f32 %v3838, %v4178
  %v4799 = vmul.f32 %v3839, %v4188
  %v4800 = vmul.f32 %v3840, %v4198
  %v4801 = vmul.f32 %v3841, %v4208
  %v4802 = vmul.f32 %v3842, %v4218
  %v4803 = vmul.f32 %v3843, %v4228
  %v4804 = vmul.f32 %v3844, %v4238
  %v4805 = vmul.f32 %v3845, %v4248
  %v4806 = vmul.f32 %v3846, %v4258
  %v4807 = vmul.f32 %v3847, %v4268
  %v4808 = vmul.f32 %v3848, %v4278
  %v4809 = vmul.f32 %v3849, %v4288
  %v4810 = vmul.f32 %v3850, %v4298
  %v4811 = vmul.f32 %v3851, %v4308
  %v4812 = vmul.f32 %v3852, %v4318
  %v4813 = vmul.f32 %v3853, %v4328
  %v4814 = vmul.f32 %v3854, %v4338
  %v4815 = vmul.f32 %v3855, %v4348
  %v4816 = vmul.f32 %v3856, %v4358
  %v4817 = vmul.f32 %v3857, %v4368
  %v4818 = vmul.f32 %v3858, %v4378
  %v4819 = vmul.f32 %v3859, %v4388
  %v4820 = vmul.f32 %v3860, %v4398
  %v4821 = vmul.f32 %v3861, %v4408
  %v4822 = vmul.f32 %v3862, %v4418
  %v4823 = vmul.f32 %v3863, %v4428
  %v4824 = vmul.f32 %v3864, %v4438
  %v4825 = vmul.f32 %v3865, %v4448
  %v4826 = vmul.f32 %v3866, %v4458
  %v4827 = vmul.f32 %v3867, %v4468
  %v4828 = vmul.f32 %v3868, %v4478
  %v4829 = vmul.f32 %v3869, %v4488
  %v4830 = vmul.f32 %v3870, %v4498
  %v4831 = vmul.f32 %v3871, %v4508
  %v4832 = vmul.f32 %v3872, %v4518
  %v4833 = vmul.f32 %v3873, %v4528
  %v4834 = vmul.f32 %v3874, %v4538
  %v4835 = vmul.f32 %v3875, %v4548
  %v4836 = vmul.f32 %v3876, %v4558
  %v4837 = vmul.f32 %v3877, %v4568
  %v4838 = vmul.f32 %v3878, %v4578
  %v4839 = vmul.f32 %v3879, %v4588
  %v4840 = vmul.f32 %v3880, %v4598
  %v4841 = vmul.f32 %v3881, %v4608
  %v4842 = vmul.f32 %v3882, %v4618
  %v4843 = vmul.f32 %v3883, %v4628
  %v4844 = vmul.f32 %v3884, %v4638
  %v4845 = vmul.f32 %v3885, %v4648
  %v4846 = vmul.f32 %v3886, %v4658
  %v4847 = vmul.f32 %v3887, %v4668
  %v4848 = vmul.f32 %v3888, %v4678
  %v4849 = vmul.f32 %v3889, %v4688
  %v4850 = vmul.f32 %v3890, %v4698
  %v4851 = vmul.f32 %v3891, %v4708
  %v4852 = vmul.f32 %v3892, %v4718
  %v4853 = vmul.f32 %v3893, %v4728
  %v4854 = vmul.f32 %v3894, %v4738
  %v4855 = vmul.f32 %v3895, %v4748
  %v4856 = vmul.f32 %v3896, %v4758
  %v4857 = vmul.f32 %v3897, %v4768
  %v4858 = vmul.f32 %v3898, %v4778
  %v4859 = vld [vmem:[%s7] sm:$0x1]
  %v4861 = vperm.slane %v4859, 0
  %v4863 = vmul.f32 %v4779, %v4861
  %v4864 = vmul.f32 %v4780, %v4861
  %v4865 = vmul.f32 %v4781, %v4861
  %v4866 = vmul.f32 %v4782, %v4861
  %v4867 = vmul.f32 %v4783, %v4861
  %v4868 = vmul.f32 %v4784, %v4861
  %v4869 = vmul.f32 %v4785, %v4861
  %v4870 = vmul.f32 %v4786, %v4861
  %v4871 = vmul.f32 %v4787, %v4861
  %v4872 = vmul.f32 %v4788, %v4861
  %v4873 = vmul.f32 %v4789, %v4861
  %v4874 = vmul.f32 %v4790, %v4861
  %v4875 = vmul.f32 %v4791, %v4861
  %v4876 = vmul.f32 %v4792, %v4861
  %v4877 = vmul.f32 %v4793, %v4861
  %v4878 = vmul.f32 %v4794, %v4861
  %v4879 = vmul.f32 %v4795, %v4861
  %v4880 = vmul.f32 %v4796, %v4861
  %v4881 = vmul.f32 %v4797, %v4861
  %v4882 = vmul.f32 %v4798, %v4861
  %v4883 = vmul.f32 %v4799, %v4861
  %v4884 = vmul.f32 %v4800, %v4861
  %v4885 = vmul.f32 %v4801, %v4861
  %v4886 = vmul.f32 %v4802, %v4861
  %v4887 = vmul.f32 %v4803, %v4861
  %v4888 = vmul.f32 %v4804, %v4861
  %v4889 = vmul.f32 %v4805, %v4861
  %v4890 = vmul.f32 %v4806, %v4861
  %v4891 = vmul.f32 %v4807, %v4861
  %v4892 = vmul.f32 %v4808, %v4861
  %v4893 = vmul.f32 %v4809, %v4861
  %v4894 = vmul.f32 %v4810, %v4861
  %v4895 = vmul.f32 %v4811, %v4861
  %v4896 = vmul.f32 %v4812, %v4861
  %v4897 = vmul.f32 %v4813, %v4861
  %v4898 = vmul.f32 %v4814, %v4861
  %v4899 = vmul.f32 %v4815, %v4861
  %v4900 = vmul.f32 %v4816, %v4861
  %v4901 = vmul.f32 %v4817, %v4861
  %v4902 = vmul.f32 %v4818, %v4861
  %v4903 = vmul.f32 %v4819, %v4861
  %v4904 = vmul.f32 %v4820, %v4861
  %v4905 = vmul.f32 %v4821, %v4861
  %v4906 = vmul.f32 %v4822, %v4861
  %v4907 = vmul.f32 %v4823, %v4861
  %v4908 = vmul.f32 %v4824, %v4861
  %v4909 = vmul.f32 %v4825, %v4861
  %v4910 = vmul.f32 %v4826, %v4861
  %v4911 = vmul.f32 %v4827, %v4861
  %v4912 = vmul.f32 %v4828, %v4861
  %v4913 = vmul.f32 %v4829, %v4861
  %v4914 = vmul.f32 %v4830, %v4861
  %v4915 = vmul.f32 %v4831, %v4861
  %v4916 = vmul.f32 %v4832, %v4861
  %v4917 = vmul.f32 %v4833, %v4861
  %v4918 = vmul.f32 %v4834, %v4861
  %v4919 = vmul.f32 %v4835, %v4861
  %v4920 = vmul.f32 %v4836, %v4861
  %v4921 = vmul.f32 %v4837, %v4861
  %v4922 = vmul.f32 %v4838, %v4861
  %v4923 = vmul.f32 %v4839, %v4861
  %v4924 = vmul.f32 %v4840, %v4861
  %v4925 = vmul.f32 %v4841, %v4861
  %v4926 = vmul.f32 %v4842, %v4861
  %v4927 = vmul.f32 %v4843, %v4861
  %v4928 = vmul.f32 %v4844, %v4861
  %v4929 = vmul.f32 %v4845, %v4861
  %v4930 = vmul.f32 %v4846, %v4861
  %v4931 = vmul.f32 %v4847, %v4861
  %v4932 = vmul.f32 %v4848, %v4861
  %v4933 = vmul.f32 %v4849, %v4861
  %v4934 = vmul.f32 %v4850, %v4861
  %v4935 = vmul.f32 %v4851, %v4861
  %v4936 = vmul.f32 %v4852, %v4861
  %v4937 = vmul.f32 %v4853, %v4861
  %v4938 = vmul.f32 %v4854, %v4861
  %v4939 = vmul.f32 %v4855, %v4861
  %v4940 = vmul.f32 %v4856, %v4861
  %v4941 = vmul.f32 %v4857, %v4861
  %v4942 = vmul.f32 %v4858, %v4861
  %v4943 = vld [vmem:[%s8] sm:$0x1]
  %v4945 = vperm.slane %v4943, 0
  %v4947 = vadd.f32 %v4863, %v4945
  %v4948 = vadd.f32 %v4864, %v4945
  %v4949 = vadd.f32 %v4865, %v4945
  %v4950 = vadd.f32 %v4866, %v4945
  %v4951 = vadd.f32 %v4867, %v4945
  %v4952 = vadd.f32 %v4868, %v4945
  %v4953 = vadd.f32 %v4869, %v4945
  %v4954 = vadd.f32 %v4870, %v4945
  %v4955 = vadd.f32 %v4871, %v4945
  %v4956 = vadd.f32 %v4872, %v4945
  %v4957 = vadd.f32 %v4873, %v4945
  %v4958 = vadd.f32 %v4874, %v4945
  %v4959 = vadd.f32 %v4875, %v4945
  %v4960 = vadd.f32 %v4876, %v4945
  %v4961 = vadd.f32 %v4877, %v4945
  %v4962 = vadd.f32 %v4878, %v4945
  %v4963 = vadd.f32 %v4879, %v4945
  %v4964 = vadd.f32 %v4880, %v4945
  %v4965 = vadd.f32 %v4881, %v4945
  %v4966 = vadd.f32 %v4882, %v4945
  %v4967 = vadd.f32 %v4883, %v4945
  %v4968 = vadd.f32 %v4884, %v4945
  %v4969 = vadd.f32 %v4885, %v4945
  %v4970 = vadd.f32 %v4886, %v4945
  %v4971 = vadd.f32 %v4887, %v4945
  %v4972 = vadd.f32 %v4888, %v4945
  %v4973 = vadd.f32 %v4889, %v4945
  %v4974 = vadd.f32 %v4890, %v4945
  %v4975 = vadd.f32 %v4891, %v4945
  %v4976 = vadd.f32 %v4892, %v4945
  %v4977 = vadd.f32 %v4893, %v4945
  %v4978 = vadd.f32 %v4894, %v4945
  %v4979 = vadd.f32 %v4895, %v4945
  %v4980 = vadd.f32 %v4896, %v4945
  %v4981 = vadd.f32 %v4897, %v4945
  %v4982 = vadd.f32 %v4898, %v4945
  %v4983 = vadd.f32 %v4899, %v4945
  %v4984 = vadd.f32 %v4900, %v4945
  %v4985 = vadd.f32 %v4901, %v4945
  %v4986 = vadd.f32 %v4902, %v4945
  %v4987 = vadd.f32 %v4903, %v4945
  %v4988 = vadd.f32 %v4904, %v4945
  %v4989 = vadd.f32 %v4905, %v4945
  %v4990 = vadd.f32 %v4906, %v4945
  %v4991 = vadd.f32 %v4907, %v4945
  %v4992 = vadd.f32 %v4908, %v4945
  %v4993 = vadd.f32 %v4909, %v4945
  %v4994 = vadd.f32 %v4910, %v4945
  %v4995 = vadd.f32 %v4911, %v4945
  %v4996 = vadd.f32 %v4912, %v4945
  %v4997 = vadd.f32 %v4913, %v4945
  %v4998 = vadd.f32 %v4914, %v4945
  %v4999 = vadd.f32 %v4915, %v4945
  %v5000 = vadd.f32 %v4916, %v4945
  %v5001 = vadd.f32 %v4917, %v4945
  %v5002 = vadd.f32 %v4918, %v4945
  %v5003 = vadd.f32 %v4919, %v4945
  %v5004 = vadd.f32 %v4920, %v4945
  %v5005 = vadd.f32 %v4921, %v4945
  %v5006 = vadd.f32 %v4922, %v4945
  %v5007 = vadd.f32 %v4923, %v4945
  %v5008 = vadd.f32 %v4924, %v4945
  %v5009 = vadd.f32 %v4925, %v4945
  %v5010 = vadd.f32 %v4926, %v4945
  %v5011 = vadd.f32 %v4927, %v4945
  %v5012 = vadd.f32 %v4928, %v4945
  %v5013 = vadd.f32 %v4929, %v4945
  %v5014 = vadd.f32 %v4930, %v4945
  %v5015 = vadd.f32 %v4931, %v4945
  %v5016 = vadd.f32 %v4932, %v4945
  %v5017 = vadd.f32 %v4933, %v4945
  %v5018 = vadd.f32 %v4934, %v4945
  %v5019 = vadd.f32 %v4935, %v4945
  %v5020 = vadd.f32 %v4936, %v4945
  %v5021 = vadd.f32 %v4937, %v4945
  %v5022 = vadd.f32 %v4938, %v4945
  %v5023 = vadd.f32 %v4939, %v4945
  %v5024 = vadd.f32 %v4940, %v4945
  %v5025 = vadd.f32 %v4941, %v4945
  %v5026 = vadd.f32 %v4942, %v4945
  %v5027 = vadd.f32 %v4947, %v32
  %v5028 = vadd.f32 %v4948, %v33
  %v5029 = vadd.f32 %v4949, %v34
  %v5030 = vadd.f32 %v4950, %v35
  %v5031 = vadd.f32 %v4951, %v36
  %v5032 = vadd.f32 %v4952, %v37
  %v5033 = vadd.f32 %v4953, %v38
  %v5034 = vadd.f32 %v4954, %v39
  %v5035 = vadd.f32 %v4955, %v40
  %v5036 = vadd.f32 %v4956, %v41
  %v5037 = vadd.f32 %v4957, %v42
  %v5038 = vadd.f32 %v4958, %v43
  %v5039 = vadd.f32 %v4959, %v44
  %v5040 = vadd.f32 %v4960, %v45
  %v5041 = vadd.f32 %v4961, %v46
  %v5042 = vadd.f32 %v4962, %v47
  %v5043 = vadd.f32 %v4963, %v48
  %v5044 = vadd.f32 %v4964, %v49
  %v5045 = vadd.f32 %v4965, %v50
  %v5046 = vadd.f32 %v4966, %v51
  %v5047 = vadd.f32 %v4967, %v52
  %v5048 = vadd.f32 %v4968, %v53
  %v5049 = vadd.f32 %v4969, %v54
  %v5050 = vadd.f32 %v4970, %v55
  %v5051 = vadd.f32 %v4971, %v56
  %v5052 = vadd.f32 %v4972, %v57
  %v5053 = vadd.f32 %v4973, %v58
  %v5054 = vadd.f32 %v4974, %v59
  %v5055 = vadd.f32 %v4975, %v60
  %v5056 = vadd.f32 %v4976, %v61
  %v5057 = vadd.f32 %v4977, %v62
  %v5058 = vadd.f32 %v4978, %v63
  %v5059 = vadd.f32 %v4979, %v64
  %v5060 = vadd.f32 %v4980, %v65
  %v5061 = vadd.f32 %v4981, %v66
  %v5062 = vadd.f32 %v4982, %v67
  %v5063 = vadd.f32 %v4983, %v68
  %v5064 = vadd.f32 %v4984, %v69
  %v5065 = vadd.f32 %v4985, %v70
  %v5066 = vadd.f32 %v4986, %v71
  %v5067 = vadd.f32 %v4987, %v72
  %v5068 = vadd.f32 %v4988, %v73
  %v5069 = vadd.f32 %v4989, %v74
  %v5070 = vadd.f32 %v4990, %v75
  %v5071 = vadd.f32 %v4991, %v76
  %v5072 = vadd.f32 %v4992, %v77
  %v5073 = vadd.f32 %v4993, %v78
  %v5074 = vadd.f32 %v4994, %v79
  %v5075 = vadd.f32 %v4995, %v80
  %v5076 = vadd.f32 %v4996, %v81
  %v5077 = vadd.f32 %v4997, %v82
  %v5078 = vadd.f32 %v4998, %v83
  %v5079 = vadd.f32 %v4999, %v84
  %v5080 = vadd.f32 %v5000, %v85
  %v5081 = vadd.f32 %v5001, %v86
  %v5082 = vadd.f32 %v5002, %v87
  %v5083 = vadd.f32 %v5003, %v88
  %v5084 = vadd.f32 %v5004, %v89
  %v5085 = vadd.f32 %v5005, %v90
  %v5086 = vadd.f32 %v5006, %v91
  %v5087 = vadd.f32 %v5007, %v92
  %v5088 = vadd.f32 %v5008, %v93
  %v5089 = vadd.f32 %v5009, %v94
  %v5090 = vadd.f32 %v5010, %v95
  %v5091 = vadd.f32 %v5011, %v96
  %v5092 = vadd.f32 %v5012, %v97
  %v5093 = vadd.f32 %v5013, %v98
  %v5094 = vadd.f32 %v5014, %v99
  %v5095 = vadd.f32 %v5015, %v100
  %v5096 = vadd.f32 %v5016, %v101
  %v5097 = vadd.f32 %v5017, %v102
  %v5098 = vadd.f32 %v5018, %v103
  %v5099 = vadd.f32 %v5019, %v104
  %v5100 = vadd.f32 %v5020, %v105
  %v5101 = vadd.f32 %v5021, %v106
  %v5102 = vadd.f32 %v5022, %v107
  %v5103 = vadd.f32 %v5023, %v108
  %v5104 = vadd.f32 %v5024, %v109
  %v5105 = vadd.f32 %v5025, %v110
  %v5106 = vadd.f32 %v5026, %v111
  %5107 = vst [vmem:[%s9] sm:$0xff] %v5027
  %5108 = vst [vmem:[%s9 + $0x8] sm:$0xff] %v5028
  %5109 = vst [vmem:[%s9 + $0x10] sm:$0xff] %v5029
  %5110 = vst [vmem:[%s9 + $0x18] sm:$0xff] %v5030
  %5111 = vst [vmem:[%s9 + $0x20] sm:$0xff] %v5031
  %5112 = vst [vmem:[%s9 + $0x28] sm:$0xff] %v5032
  %5113 = vst [vmem:[%s9 + $0x30] sm:$0xff] %v5033
  %5114 = vst [vmem:[%s9 + $0x38] sm:$0xff] %v5034
  %5115 = vst [vmem:[%s9 + $0x40] sm:$0xff] %v5035
  %5116 = vst [vmem:[%s9 + $0x48] sm:$0xff] %v5036
  %5117 = vst [vmem:[%s9 + $0x50] sm:$0xff] %v5037
  %5118 = vst [vmem:[%s9 + $0x58] sm:$0xff] %v5038
  %5119 = vst [vmem:[%s9 + $0x60] sm:$0xff] %v5039
  %5120 = vst [vmem:[%s9 + $0x68] sm:$0xff] %v5040
  %5121 = vst [vmem:[%s9 + $0x70] sm:$0xff] %v5041
  %5122 = vst [vmem:[%s9 + $0x78] sm:$0xff] %v5042
  %5123 = vst [vmem:[%s9 + $0x80] sm:$0xff] %v5043
  %5124 = vst [vmem:[%s9 + $0x88] sm:$0xff] %v5044
  %5125 = vst [vmem:[%s9 + $0x90] sm:$0xff] %v5045
  %5126 = vst [vmem:[%s9 + $0x98] sm:$0xff] %v5046
  %5127 = vst [vmem:[%s9 + $0xa0] sm:$0xff] %v5047
  %5128 = vst [vmem:[%s9 + $0xa8] sm:$0xff] %v5048
  %5129 = vst [vmem:[%s9 + $0xb0] sm:$0xff] %v5049
  %5130 = vst [vmem:[%s9 + $0xb8] sm:$0xff] %v5050
  %5131 = vst [vmem:[%s9 + $0xc0] sm:$0xff] %v5051
  %5132 = vst [vmem:[%s9 + $0xc8] sm:$0xff] %v5052
  %5133 = vst [vmem:[%s9 + $0xd0] sm:$0xff] %v5053
  %5134 = vst [vmem:[%s9 + $0xd8] sm:$0xff] %v5054
  %5135 = vst [vmem:[%s9 + $0xe0] sm:$0xff] %v5055
  %5136 = vst [vmem:[%s9 + $0xe8] sm:$0xff] %v5056
  %5137 = vst [vmem:[%s9 + $0xf0] sm:$0xff] %v5057
  %5138 = vst [vmem:[%s9 + $0xf8] sm:$0xff] %v5058
  %5139 = vst [vmem:[%s9 + $0x100] sm:$0xff] %v5059
  %5140 = vst [vmem:[%s9 + $0x108] sm:$0xff] %v5060
  %5141 = vst [vmem:[%s9 + $0x110] sm:$0xff] %v5061
  %5142 = vst [vmem:[%s9 + $0x118] sm:$0xff] %v5062
  %5143 = vst [vmem:[%s9 + $0x120] sm:$0xff] %v5063
  %5144 = vst [vmem:[%s9 + $0x128] sm:$0xff] %v5064
  %5145 = vst [vmem:[%s9 + $0x130] sm:$0xff] %v5065
  %5146 = vst [vmem:[%s9 + $0x138] sm:$0xff] %v5066
  %5147 = vst [vmem:[%s9 + $0x140] sm:$0xff] %v5067
  %5148 = vst [vmem:[%s9 + $0x148] sm:$0xff] %v5068
  %5149 = vst [vmem:[%s9 + $0x150] sm:$0xff] %v5069
  %5150 = vst [vmem:[%s9 + $0x158] sm:$0xff] %v5070
  %5151 = vst [vmem:[%s9 + $0x160] sm:$0xff] %v5071
  %5152 = vst [vmem:[%s9 + $0x168] sm:$0xff] %v5072
  %5153 = vst [vmem:[%s9 + $0x170] sm:$0xff] %v5073
  %5154 = vst [vmem:[%s9 + $0x178] sm:$0xff] %v5074
  %5155 = vst [vmem:[%s9 + $0x180] sm:$0xff] %v5075
  %5156 = vst [vmem:[%s9 + $0x188] sm:$0xff] %v5076
  %5157 = vst [vmem:[%s9 + $0x190] sm:$0xff] %v5077
  %5158 = vst [vmem:[%s9 + $0x198] sm:$0xff] %v5078
  %5159 = vst [vmem:[%s9 + $0x1a0] sm:$0xff] %v5079
  %5160 = vst [vmem:[%s9 + $0x1a8] sm:$0xff] %v5080
  %5161 = vst [vmem:[%s9 + $0x1b0] sm:$0xff] %v5081
  %5162 = vst [vmem:[%s9 + $0x1b8] sm:$0xff] %v5082
  %5163 = vst [vmem:[%s9 + $0x1c0] sm:$0xff] %v5083
  %5164 = vst [vmem:[%s9 + $0x1c8] sm:$0xff] %v5084
  %5165 = vst [vmem:[%s9 + $0x1d0] sm:$0xff] %v5085
  %5166 = vst [vmem:[%s9 + $0x1d8] sm:$0xff] %v5086
  %5167 = vst [vmem:[%s9 + $0x1e0] sm:$0xff] %v5087
  %5168 = vst [vmem:[%s9 + $0x1e8] sm:$0xff] %v5088
  %5169 = vst [vmem:[%s9 + $0x1f0] sm:$0xff] %v5089
  %5170 = vst [vmem:[%s9 + $0x1f8] sm:$0xff] %v5090
  %5171 = vst [vmem:[%s9 + $0x200] sm:$0xff] %v5091
  %5172 = vst [vmem:[%s9 + $0x208] sm:$0xff] %v5092
  %5173 = vst [vmem:[%s9 + $0x210] sm:$0xff] %v5093
  %5174 = vst [vmem:[%s9 + $0x218] sm:$0xff] %v5094
  %5175 = vst [vmem:[%s9 + $0x220] sm:$0xff] %v5095
  %5176 = vst [vmem:[%s9 + $0x228] sm:$0xff] %v5096
  %5177 = vst [vmem:[%s9 + $0x230] sm:$0xff] %v5097
  %5178 = vst [vmem:[%s9 + $0x238] sm:$0xff] %v5098
  %5179 = vst [vmem:[%s9 + $0x240] sm:$0xff] %v5099
  %5180 = vst [vmem:[%s9 + $0x248] sm:$0xff] %v5100
  %5181 = vst [vmem:[%s9 + $0x250] sm:$0xff] %v5101
  %5182 = vst [vmem:[%s9 + $0x258] sm:$0xff] %v5102
  %5183 = vst [vmem:[%s9 + $0x260] sm:$0xff] %v5103
  %5184 = vst [vmem:[%s9 + $0x268] sm:$0xff] %v5104
  %5185 = vst [vmem:[%s9 + $0x270] sm:$0xff] %v5105
  %5186 = vst [vmem:[%s9 + $0x278] sm:$0xff] %v5106
  // Predicated region
  $region38: #{mesh_edge_block_forward.1} parent=0 // pred_check
    _
  $region39: #{mesh_edge_block_forward.1} parent=0 // pred_check_branch
    %5188 = sbr.rel (0) target = $region41
  $region40: #{mesh_edge_block_forward.1} parent=0 // pred_region
    _
  $region41: #{mesh_edge_block_forward.1} parent=0 // pred_fallthru
    _
  // Predicated region
  $region42: #{mesh_edge_block_forward.1} parent=0 // pred_check
    _
  $region43: #{mesh_edge_block_forward.1} parent=0 // pred_check_branch
    %5190 = sbr.rel (0) target = $region45
  $region44: #{mesh_edge_block_forward.1} parent=0 // pred_region
    _
  $region45: #{mesh_edge_block_forward.1} parent=0 // pred_fallthru
    _

</llo_original>
